<compile_context>
chip_gen: v5e
topology: v5e:2x2
jax: 0.10.0
libtpu: 0.0.40
codegen_flags: <defaults>
</compile_context>

<pallas_src>
import jax
import jax.numpy as jnp
from jax.experimental import pallas as pl
from jax.experimental.pallas import tpu as pltpu

LANE = 128      # lane width (last-dim padding target)
SUBLANE = 8     # sublane width
ROW_TILE = 512  # row tile for the edge-feature kernel


def _round_up(n, m):
    return ((n + m - 1) // m) * m


def _pad_to(a, shape):
    pads = [(0, t - s) for s, t in zip(a.shape, shape)]
    if all(p == (0, 0) for p in pads):
        return a
    return jnp.pad(a, pads)


def _pick_tile(n, candidates=(1024, 512, 256, 128)):
    """Largest tile from `candidates` that evenly divides n (n is a multiple
    of 128 by construction, so this always succeeds)."""
    for c in candidates:
        if n >= c and n % c == 0:
            return c
    return n


# ----------------------------------------------------------------------------
# RGCNConv layer: grid (dst-tiles, relations, src-tiles).
#   * o_acc scratch  : resident f32 output accumulator (root + bias + sums).
#   * agg scratch    : resident f32 neighbour-sum accumulator across k; the
#                      per-relation projection happens only at the last k.
#   * epilogue       : BN(folded)+LeakyReLU (conv1/2) or row-wise L2 norm
#                      (conv3), written as bf16 / f32 directly to the output.
# ----------------------------------------------------------------------------
def _rgcn_accumulate(x_dst_ref, x_src_ref, a_ref, deg_ref, w_ref, wroot_ref,
                     b_ref, o_acc, agg_ref):
    r = pl.program_id(1)
    k = pl.program_id(2)

    @pl.when((r == 0) & (k == 0))
    def _init():
        # root projection + bias into the resident f32 accumulator
        o_acc[...] = (jnp.dot(x_dst_ref[...], wroot_ref[...],
                              preferred_element_type=jnp.float32)
                      + b_ref[...])

    # raw neighbour sums for relation r: exact bf16 integer edge counts times
    # bf16 activations, accumulated in f32.
    prod = jnp.dot(a_ref[0], x_src_ref[...], preferred_element_type=jnp.float32)

    @pl.when(k == 0)
    def _set():
        agg_ref[...] = prod

    @pl.when(k > 0)
    def _add():
        agg_ref[...] += prod

    @pl.when(k == pl.num_programs(2) - 1)
    def _project():
        # exact f32 'mean' normalisation, then ONE bf16 projection per (i, r)
        agg = (agg_ref[...] * deg_ref[0]).astype(jnp.bfloat16)
        o_acc[...] += jnp.dot(agg, w_ref[0], preferred_element_type=jnp.float32)


def _is_last_step():
    return ((pl.program_id(1) == pl.num_programs(1) - 1)
            & (pl.program_id(2) == pl.num_programs(2) - 1))


def _rgcn_bn_lrelu_kernel(x_dst_ref, x_src_ref, a_ref, deg_ref, w_ref,
                          wroot_ref, b_ref, scale_ref, shift_ref,
                          o_ref, o_acc, agg_ref):
    _rgcn_accumulate(x_dst_ref, x_src_ref, a_ref, deg_ref, w_ref, wroot_ref,
                     b_ref, o_acc, agg_ref)

    @pl.when(_is_last_step())
    def _():
        # folded eval-mode BatchNorm (one FMA) + LeakyReLU(0.1); write bf16.
        y = o_acc[...] * scale_ref[...] + shift_ref[...]
        o_ref[...] = jnp.where(y >= 0.0, y, 0.1 * y).astype(o_ref.dtype)


def _rgcn_l2norm_kernel(x_dst_ref, x_src_ref, a_ref, deg_ref, w_ref,
                        wroot_ref, b_ref, o_ref, o_acc, agg_ref):
    _rgcn_accumulate(x_dst_ref, x_src_ref, a_ref, deg_ref, w_ref, wroot_ref,
                     b_ref, o_acc, agg_ref)

    @pl.when(_is_last_step())
    def _():
        y = o_acc[...]
        ssq = jnp.sum(y * y, axis=1, keepdims=True)
        # F.normalize(p=2, dim=1, eps=1e-12): x / max(||x||, eps)
        o_ref[...] = (y * jax.lax.rsqrt(jnp.maximum(ssq, 1e-24))).astype(o_ref.dtype)


def rgcn_conv(x_bf16, adj_counts, deg_inv, w, wroot, b, *, tm, tk,
              scale=None, shift=None, out_dtype=jnp.bfloat16):
    """One RGCNConv layer (mean aggregation + root + bias) with the following
    stage's elementwise epilogue fused in:
      * scale/shift given  -> BatchNorm(folded) + LeakyReLU(0.1)
      * scale/shift absent -> row-wise L2 normalization
    """
    Np, Din = x_bf16.shape
    R = adj_counts.shape[0]
    Dout = w.shape[2]
    grid = (Np // tm, R, Np // tk)

    in_specs = [
        pl.BlockSpec((tm, Din), lambda i, r, k: (i, 0)),          # x, dst rows
        pl.BlockSpec((tk, Din), lambda i, r, k: (k, 0)),          # x, src rows
        pl.BlockSpec((1, tm, tk), lambda i, r, k: (r, i, k)),     # A_r counts (bf16)
        pl.BlockSpec((1, tm, 1), lambda i, r, k: (r, i, 0)),      # 1/deg (f32)
        pl.BlockSpec((1, Din, Dout), lambda i, r, k: (r, 0, 0)),  # W_r (bf16)
        pl.BlockSpec((Din, Dout), lambda i, r, k: (0, 0)),        # W_root (bf16)
        pl.BlockSpec((1, Dout), lambda i, r, k: (0, 0)),          # bias (f32)
    ]
    operands = [x_bf16, x_bf16, adj_counts, deg_inv, w, wroot, b]

    if scale is not None:
        kernel = _rgcn_bn_lrelu_kernel
        in_specs += [pl.BlockSpec((1, Dout), lambda i, r, k: (0, 0)),
                     pl.BlockSpec((1, Dout), lambda i, r, k: (0, 0))]
        operands += [scale, shift]
    else:
        kernel = _rgcn_l2norm_kernel

    return pl.pallas_call(
        kernel,
        out_shape=jax.ShapeDtypeStruct((Np, Dout), out_dtype),
        grid_spec=pltpu.PrefetchScalarGridSpec(
            num_scalar_prefetch=0,
            grid=grid,
            in_specs=in_specs,
            # same block index across (r, k): output tile stays resident; it
            # is written once, in the fused epilogue at the last (r, k) step.
            out_specs=pl.BlockSpec((tm, Dout), lambda i, r, k: (i, 0)),
            scratch_shapes=[
                pltpu.VMEM((tm, Dout), jnp.float32),   # f32 output accumulator
                pltpu.VMEM((tm, Din), jnp.float32),    # f32 neighbour-sum scratch
            ],
        ),
        compiler_params=pltpu.CompilerParams(
            # dst-row tiles shard across TensorCores (v7x megacore); the
            # relation / src-node axes are sequential reductions.
            dimension_semantics=("parallel", "arbitrary", "arbitrary"),
            vmem_limit_bytes=64 * 1024 * 1024,
        ),
    )(*operands)


# ----------------------------------------------------------------------------
# Edge-feature branch: rel_emb = (emb[edge_type] + MLP(edge_attr)) * edge_weight
# (computed by the torch forward() but not consumed by the node path).
# ----------------------------------------------------------------------------
def _edge_mlp_kernel(rel_ref, ea_ref, w1_ref, b1_ref, w2_ref, b2_ref, ew_ref,
                     o_ref):
    h = jnp.dot(ea_ref[...], w1_ref[...],
                preferred_element_type=jnp.float32) + b1_ref[...]
    h = jnp.maximum(h, 0.0).astype(jnp.bfloat16)
    emb = jnp.dot(h, w2_ref[...],
                  preferred_element_type=jnp.float32) + b2_ref[...]
    o_ref[...] = (rel_ref[...] + emb) * ew_ref[...]


def _edge_scale_kernel(rel_ref, ew_ref, o_ref):
    o_ref[...] = rel_ref[...] * ew_ref[...]


def edge_feature_branch(rel_emb, edge_attr, edge_weight, p):
    E, hid = rel_emb.shape
    hid_p = _round_up(hid, LANE)

    if edge_attr is None and edge_weight is None:
        return rel_emb

    te = min(ROW_TILE, _round_up(E, SUBLANE))
    Ep = _round_up(E, te)
    grid = (Ep // te,)

    ew = (jnp.ones((E,), jnp.float32) if edge_weight is None
          else edge_weight.astype(jnp.float32)).reshape(-1, 1)
    ew = _pad_to(ew, (Ep, 1))
    rel = _pad_to(rel_emb.astype(jnp.float32), (Ep, hid_p))

    if edge_attr is not None:
        # keep edge_dim unpadded (full-array dim satisfies the tiling rule);
        # bf16 operands, f32 accumulation.
        ed = edge_attr.shape[1]
        ea = _pad_to(edge_attr, (Ep, ed)).astype(jnp.bfloat16)
        w1 = _pad_to(p["ee_w1"], (ed, hid_p)).astype(jnp.bfloat16)
        b1 = _pad_to(p["ee_b1"], (1, hid_p))
        w2 = _pad_to(p["ee_w2"], (hid_p, hid_p)).astype(jnp.bfloat16)
        b2 = _pad_to(p["ee_b2"], (1, hid_p))
        out = pl.pallas_call(
            _edge_mlp_kernel,
            out_shape=jax.ShapeDtypeStruct((Ep, hid_p), jnp.float32),
            grid_spec=pltpu.PrefetchScalarGridSpec(
                num_scalar_prefetch=0,
                grid=grid,
                in_specs=[
                    pl.BlockSpec((te, hid_p), lambda i: (i, 0)),
                    pl.BlockSpec((te, ed), lambda i: (i, 0)),
                    pl.BlockSpec((ed, hid_p), lambda i: (0, 0)),
                    pl.BlockSpec((1, hid_p), lambda i: (0, 0)),
                    pl.BlockSpec((hid_p, hid_p), lambda i: (0, 0)),
                    pl.BlockSpec((1, hid_p), lambda i: (0, 0)),
                    pl.BlockSpec((te, 1), lambda i: (i, 0)),
                ],
                out_specs=pl.BlockSpec((te, hid_p), lambda i: (i, 0)),
            ),
            compiler_params=pltpu.CompilerParams(
                dimension_semantics=("parallel",)),
        )(rel, ea, w1, b1, w2, b2, ew)
    else:  # only edge_weight given
        out = pl.pallas_call(
            _edge_scale_kernel,
            out_shape=jax.ShapeDtypeStruct((Ep, hid_p), jnp.float32),
            grid_spec=pltpu.PrefetchScalarGridSpec(
                num_scalar_prefetch=0,
                grid=grid,
                in_specs=[pl.BlockSpec((te, hid_p), lambda i: (i, 0)),
                          pl.BlockSpec((te, 1), lambda i: (i, 0))],
                out_specs=pl.BlockSpec((te, hid_p), lambda i: (i, 0)),
            ),
            compiler_params=pltpu.CompilerParams(
                dimension_semantics=("parallel",)),
        )(rel, ew)

    return out[:E, :hid]


# ----------------------------------------------------------------------------
# Glue: dense per-relation adjacency COUNTS (bf16, exact integers) + exact f32
# 1/deg for 'mean' aggregation, built from the edge lists.
# ----------------------------------------------------------------------------
def build_adjacency(edge_index, edge_type, num_nodes_padded, num_relations):
    # TODO(synk): for production-scale sparse graphs replace this dense
    # (R, N, N) adjacency with a relation-sorted edge/CSR formulation using
    # PrefetchScalarGridSpec scalar prefetch + gathered src-row DMA, so HBM
    # traffic scales with E instead of R*N^2 per conv layer.
    src, dst = edge_index[0], edge_index[1]
    # Exact integer edge counts built directly in bf16 (exact up to 256
    # parallel edges per (relation, dst, src) pair) -- avoids materializing an
    # f32 (R, N, N) intermediate in HBM before the cast.
    counts = jnp.zeros((num_relations, num_nodes_padded, num_nodes_padded),
                       jnp.bfloat16)
    counts = counts.at[edge_type, dst, src].add(1.0)
    # exact f32 per-(relation, dst) in-degree; 1/deg is applied in-kernel to
    # the f32-accumulated neighbour sums (no bf16 quantisation of 1/deg).
    deg = jnp.zeros((num_relations, num_nodes_padded), jnp.float32)
    deg = deg.at[edge_type, dst].add(1.0)
    deg_inv = (1.0 / jnp.maximum(deg, 1.0)).reshape(
        num_relations, num_nodes_padded, 1)
    return counts, deg_inv


# ----------------------------------------------------------------------------
# Full forward.
# ----------------------------------------------------------------------------
def edge_feature_rgcn_forward(params, x, edge_index, edge_type,
                              edge_attr=None, edge_weight=None):
    N, in_dim = x.shape
    R, _, hid = params["conv1_w"].shape
    out_dim = params["conv3_w"].shape[2]

    # lane-dense feature padding (zero padding is exact)
    in_p = _round_up(in_dim, LANE)
    hid_p = _round_up(hid, LANE)
    out_p = _round_up(out_dim, LANE)

    # node padding / tile choice: tiles up to 1024 amortize per-grid-step
    # overhead; always give the "parallel" dst-row axis >= 2 tiles so both
    # v7x TensorCores get work (harmless on single-TC v5e/v6e).
    Np = _round_up(N, LANE)
    tk = _pick_tile(Np)
    tm = _pick_tile(Np)
    if tm == Np:
        tm //= 2

    adj_counts, deg_inv = build_adjacency(edge_index, edge_type, Np, R)

    # relation / edge-feature embedding branch (returned, like torch computes it)
    rel_emb = params["rel_emb"][edge_type]                 # embedding gather (glue)
    rel_emb = edge_feature_branch(rel_emb, edge_attr, edge_weight, params)

    # fold eval-mode BatchNorm into per-channel scale/shift
    def bn_fold(i):
        scale = params[f"bn{i}_g"] * jax.lax.rsqrt(params[f"bn{i}_v"] + 1e-5)
        shift = params[f"bn{i}_b"] - params[f"bn{i}_m"] * scale
        return _pad_to(scale, (1, hid_p)), _pad_to(shift, (1, hid_p))

    s1, t1 = bn_fold(1)
    s2, t2 = bn_fold(2)

    # conv weights padded + pre-cast to bf16 (native MXU rate, half the traffic)
    def pad_conv(i, di_p, do_p):
        return (_pad_to(params[f"conv{i}_w"], (R, di_p, do_p)).astype(jnp.bfloat16),
                _pad_to(params[f"conv{i}_root"], (di_p, do_p)).astype(jnp.bfloat16),
                _pad_to(params[f"conv{i}_b"], (1, do_p)))

    w1, r1, b1 = pad_conv(1, in_p, hid_p)
    w2, r2, b2 = pad_conv(2, hid_p, hid_p)
    w3, r3, b3 = pad_conv(3, hid_p, out_p)

    h = _pad_to(x, (Np, in_p)).astype(jnp.bfloat16)
    # conv1/conv2 emit bf16 directly from the fused epilogue -> no external cast
    h = rgcn_conv(h, adj_counts, deg_inv, w1, r1, b1, tm=tm, tk=tk,
                  scale=s1, shift=t1, out_dtype=jnp.bfloat16)
    # dropout: inference mode (identity)
    h = rgcn_conv(h, adj_counts, deg_inv, w2, r2, b2, tm=tm, tk=tk,
                  scale=s2, shift=t2, out_dtype=jnp.bfloat16)
    # dropout: inference mode (identity)
    h = rgcn_conv(h, adj_counts, deg_inv, w3, r3, b3, tm=tm, tk=tk,
                  out_dtype=jnp.float32)
    return h[:N, :out_dim], rel_emb


# ----------------------------------------------------------------------------
# Deterministic parameter init (xavier-uniform like the torch module).
# ----------------------------------------------------------------------------
def _xavier(key, shape, fan_in, fan_out):
    bound = (6.0 / (fan_in + fan_out)) ** 0.5
    return jax.random.uniform(key, shape, jnp.float32, -bound, bound)


def init_params(key, in_dim, hidden_dim, out_dim, num_relations, edge_dim):
    ks = jax.random.split(key, 12)
    p = {}
    p["rel_emb"] = _xavier(ks[0], (num_relations, hidden_dim),
                           num_relations, hidden_dim)
    # edge encoder MLP (weights stored already-transposed: (in, out))
    p["ee_w1"] = _xavier(ks[1], (edge_dim, hidden_dim), edge_dim, hidden_dim)
    p["ee_b1"] = jnp.zeros((1, hidden_dim), jnp.float32)
    p["ee_w2"] = _xavier(ks[2], (hidden_dim, hidden_dim), hidden_dim, hidden_dim)
    p["ee_b2"] = jnp.zeros((1, hidden_dim), jnp.float32)
    # RGCNConv layers: per-relation weight (R, Din, Dout), root (Din, Dout), bias
    dims = [(in_dim, hidden_dim), (hidden_dim, hidden_dim), (hidden_dim, out_dim)]
    for i, (di, do) in enumerate(dims, start=1):
        p[f"conv{i}_w"] = _xavier(ks[2 + 2 * i], (num_relations, di, do), di, do)
        p[f"conv{i}_root"] = _xavier(ks[3 + 2 * i], (di, do), di, do)
        p[f"conv{i}_b"] = jnp.zeros((1, do), jnp.float32)
    # BatchNorm1d defaults (eval-mode running stats)
    for i in (1, 2):
        p[f"bn{i}_g"] = jnp.ones((1, hidden_dim), jnp.float32)
        p[f"bn{i}_b"] = jnp.zeros((1, hidden_dim), jnp.float32)
        p[f"bn{i}_m"] = jnp.zeros((1, hidden_dim), jnp.float32)
        p[f"bn{i}_v"] = jnp.ones((1, hidden_dim), jnp.float32)
    return p


# ----------------------------------------------------------------------------
# Pure-JAX f32 reference (sanity check against the bf16 kernels).
# ----------------------------------------------------------------------------
def _reference_forward(params, x, edge_index, edge_type):
    N = x.shape[0]
    R = params["conv1_w"].shape[0]
    src, dst = edge_index[0], edge_index[1]
    A = jnp.zeros((R, N, N), jnp.float32).at[edge_type, dst, src].add(1.0)
    A = A / jnp.maximum(A.sum(axis=2, keepdims=True), 1.0)

    def conv(h, w, root, b):
        return h @ root + b + jnp.einsum("rij,jd,rde->ie", A, h, w)

    def bn_lrelu(h, i):
        scale = params[f"bn{i}_g"] * jax.lax.rsqrt(params[f"bn{i}_v"] + 1e-5)
        shift = params[f"bn{i}_b"] - params[f"bn{i}_m"] * scale
        y = h * scale + shift
        return jnp.where(y >= 0, y, 0.1 * y)

    h = bn_lrelu(conv(x, params["conv1_w"], params["conv1_root"],
                      params["conv1_b"]), 1)
    h = bn_lrelu(conv(h, params["conv2_w"], params["conv2_root"],
                      params["conv2_b"]), 2)
    h = conv(h, params["conv3_w"], params["conv3_root"], params["conv3_b"])
    nrm = jnp.sqrt(jnp.sum(h * h, axis=1, keepdims=True))
    return h / jnp.maximum(nrm, 1e-12)


if __name__ == "__main__":
    N, E = 64, 96
    in_dim, hidden_dim, out_dim = 16, 32, 16
    num_relations, edge_dim = 4, 8

    key = jax.random.PRNGKey(0)
    k = jax.random.split(key, 8)

    x = jax.random.normal(k[0], (N, in_dim), jnp.float32)
    src = jax.random.randint(k[1], (E,), 0, N)
    dst = jax.random.randint(k[2], (E,), 0, N)
    edge_index = jnp.stack([src, dst], axis=0)
    edge_type = jax.random.randint(k[3], (E,), 0, num_relations)
    edge_attr = jax.random.normal(k[4], (E, edge_dim), jnp.float32)
    edge_weight = jax.random.uniform(k[5], (E,), jnp.float32)

    params = init_params(k[6], in_dim, hidden_dim, out_dim,
                         num_relations, edge_dim)

    fwd = jax.jit(edge_feature_rgcn_forward)
    out, rel_emb = fwd(params, x, edge_index, edge_type, edge_attr, edge_weight)
    out = jax.block_until_ready(out)
    rel_emb = jax.block_until_ready(rel_emb)

    assert out.shape == (N, out_dim)
    assert rel_emb.shape == (E, hidden_dim)
    assert bool(jnp.all(jnp.isfinite(out)))
    assert bool(jnp.all(jnp.isfinite(rel_emb)))

    # sanity check vs. pure-JAX f32 reference (bf16 weights/activations tolerance)
    ref = _reference_forward(params, x, edge_index, edge_type)
    err = float(jnp.max(jnp.abs(out - ref)))
    assert err < 7.5e-2, f"node-embedding max abs err vs reference: {err}"

    ee = jnp.maximum(edge_attr @ params["ee_w1"] + params["ee_b1"], 0.0)
    ee = ee @ params["ee_w2"] + params["ee_b2"]
    rel_ref = (params["rel_emb"][edge_type] + ee) * edge_weight[:, None]
    rerr = float(jnp.max(jnp.abs(rel_emb - rel_ref)))
    assert rerr < 5e-2, f"rel-emb max abs err vs reference: {rerr}"

    print("KERNEL_OK")
</pallas_src>

<mosaic_0001>
module attributes {stable_mosaic.version = 11 : i64} {
  func.func @_rgcn_bn_lrelu_kernel(%arg0: i32, %arg1: i32, %arg2: i32, %arg3: memref<64x128xbf16, #tpu.memory_space<vmem>>, %arg4: memref<128x128xbf16, #tpu.memory_space<vmem>>, %arg5: memref<1x64x128xbf16, #tpu.memory_space<vmem>>, %arg6: memref<1x64x1xf32, #tpu.memory_space<vmem>>, %arg7: memref<1x128x128xbf16, #tpu.memory_space<vmem>>, %arg8: memref<128x128xbf16, #tpu.memory_space<vmem>>, %arg9: memref<1x128xf32, #tpu.memory_space<vmem>>, %arg10: memref<1x128xf32, #tpu.memory_space<vmem>>, %arg11: memref<1x128xf32, #tpu.memory_space<vmem>>, %arg12: memref<64x128xbf16, #tpu.memory_space<vmem>>, %arg13: memref<64x128xf32, #tpu.memory_space<vmem>>, %arg14: memref<64x128xf32, #tpu.memory_space<vmem>>) attributes {dimension_semantics = [#tpu.dimension_semantics<parallel>, #tpu.dimension_semantics<arbitrary>, #tpu.dimension_semantics<arbitrary>], iteration_bounds = array<i64: 2, 4, 1>, scalar_prefetch = 0 : i64, scratch_operands = 2 : i64, tpu.core_type = #tpu.core_type<tc>, window_params = [{transform_indices = @transform_0, window_bounds = array<i64: 64, 128>}, {transform_indices = @transform_1, window_bounds = array<i64: 128, 128>}, {transform_indices = @transform_2, window_bounds = array<i64: 1, 64, 128>}, {transform_indices = @transform_3, window_bounds = array<i64: 1, 64, 1>}, {transform_indices = @transform_4, window_bounds = array<i64: 1, 128, 128>}, {pipeline_mode = #tpu.pipeline_mode<synchronous>, transform_indices = @transform_5, window_bounds = array<i64: 128, 128>}, {pipeline_mode = #tpu.pipeline_mode<synchronous>, transform_indices = @transform_6, window_bounds = array<i64: 1, 128>}, {pipeline_mode = #tpu.pipeline_mode<synchronous>, transform_indices = @transform_7, window_bounds = array<i64: 1, 128>}, {pipeline_mode = #tpu.pipeline_mode<synchronous>, transform_indices = @transform_8, window_bounds = array<i64: 1, 128>}, {transform_indices = @transform_9, window_bounds = array<i64: 64, 128>}]} {
    %c0_i32 = arith.constant 0 : i32
    %0 = arith.cmpi eq, %arg1, %c0_i32 : i32
    %c0_i32_0 = arith.constant 0 : i32
    %1 = arith.cmpi eq, %arg2, %c0_i32_0 : i32
    %2 = arith.andi %0, %1 : i1
    %3 = arith.extui %2 : i1 to i32
    %c0_i32_1 = arith.constant 0 : i32
    %4 = arith.cmpi ne, %3, %c0_i32_1 : i32
    scf.if %4 {
      %c0_14 = arith.constant 0 : index
      %c0_15 = arith.constant 0 : index
      %23 = vector.load %arg3[%c0_14, %c0_15] : memref<64x128xbf16, #tpu.memory_space<vmem>>, vector<64x128xbf16>
      %c0_16 = arith.constant 0 : index
      %c0_17 = arith.constant 0 : index
      %24 = vector.load %arg8[%c0_16, %c0_17] : memref<128x128xbf16, #tpu.memory_space<vmem>>, vector<128x128xbf16>
      %cst_18 = arith.constant dense<0.000000e+00> : vector<64x128xf32>
      %25 = tpu.matmul %23, %24, %cst_18 {dimension_numbers = #tpu.dot_dimension_numbers<[1], [0], [0], [1], [0, 0, 1, 1], [], []>} : vector<64x128xbf16>, vector<128x128xbf16>, vector<64x128xf32> -> vector<64x128xf32>
      %c0_19 = arith.constant 0 : index
      %c0_20 = arith.constant 0 : index
      %26 = vector.load %arg9[%c0_19, %c0_20] : memref<1x128xf32, #tpu.memory_space<vmem>>, vector<1x128xf32>
      %27 = vector.broadcast %26 : vector<1x128xf32> to vector<64x128xf32>
      %28 = arith.addf %25, %27 : vector<64x128xf32>
      %c0_21 = arith.constant 0 : index
      %c0_22 = arith.constant 0 : index
      %29 = vector.load %arg13[%c0_21, %c0_22] : memref<64x128xf32, #tpu.memory_space<vmem>>, vector<64x128xf32>
      tpu.vector_store %arg13[%c0_21, %c0_22], %28 {strides = array<i32>} : memref<64x128xf32, #tpu.memory_space<vmem>>, vector<64x128xf32>,
    } else {
    }
    %c0 = arith.constant 0 : index
    %c0_2 = arith.constant 0 : index
    %c0_3 = arith.constant 0 : index
    %5 = vector.load %arg5[%c0, %c0_2, %c0_3] : memref<1x64x128xbf16, #tpu.memory_space<vmem>>, vector<1x64x128xbf16>
    %6 = vector.shape_cast %5 : vector<1x64x128xbf16> to vector<64x128xbf16>
    %c0_4 = arith.constant 0 : index
    %c0_5 = arith.constant 0 : index
    %7 = vector.load %arg4[%c0_4, %c0_5] : memref<128x128xbf16, #tpu.memory_space<vmem>>, vector<128x128xbf16>
    %cst = arith.constant dense<0.000000e+00> : vector<64x128xf32>
    %8 = tpu.matmul %6, %7, %cst {dimension_numbers = #tpu.dot_dimension_numbers<[1], [0], [0], [1], [0, 0, 1, 1], [], []>} : vector<64x128xbf16>, vector<128x128xbf16>, vector<64x128xf32> -> vector<64x128xf32>
    %c0_i32_6 = arith.constant 0 : i32
    %9 = arith.cmpi eq, %arg2, %c0_i32_6 : i32
    %10 = arith.extui %9 : i1 to i32
    %c0_i32_7 = arith.constant 0 : i32
    %11 = arith.cmpi ne, %10, %c0_i32_7 : i32
    scf.if %11 {
      %c0_14 = arith.constant 0 : index
      %c0_15 = arith.constant 0 : index
      %23 = vector.load %arg14[%c0_14, %c0_15] : memref<64x128xf32, #tpu.memory_space<vmem>>, vector<64x128xf32>
      tpu.vector_store %arg14[%c0_14, %c0_15], %8 {strides = array<i32>} : memref<64x128xf32, #tpu.memory_space<vmem>>, vector<64x128xf32>,
    } else {
    }
    %c0_i32_8 = arith.constant 0 : i32
    %12 = arith.cmpi sgt, %arg2, %c0_i32_8 : i32
    %13 = arith.extui %12 : i1 to i32
    %c0_i32_9 = arith.constant 0 : i32
    %14 = arith.cmpi ne, %13, %c0_i32_9 : i32
    scf.if %14 {
      %c0_14 = arith.constant 0 : index
      %c0_15 = arith.constant 0 : index
      %23 = vector.load %arg14[%c0_14, %c0_15] : memref<64x128xf32, #tpu.memory_space<vmem>>, vector<64x128xf32>
      %24 = arith.addf %23, %8 : vector<64x128xf32>
      %c0_16 = arith.constant 0 : index
      %c0_17 = arith.constant 0 : index
      %25 = vector.load %arg14[%c0_16, %c0_17] : memref<64x128xf32, #tpu.memory_space<vmem>>, vector<64x128xf32>
      tpu.vector_store %arg14[%c0_16, %c0_17], %24 {strides = array<i32>} : memref<64x128xf32, #tpu.memory_space<vmem>>, vector<64x128xf32>,
    } else {
    }
    %c0_i32_10 = arith.constant 0 : i32
    %15 = arith.cmpi eq, %arg2, %c0_i32_10 : i32
    %16 = arith.extui %15 : i1 to i32
    %c0_i32_11 = arith.constant 0 : i32
    %17 = arith.cmpi ne, %16, %c0_i32_11 : i32
    scf.if %17 {
      %c0_14 = arith.constant 0 : index
      %c0_15 = arith.constant 0 : index
      %23 = vector.load %arg14[%c0_14, %c0_15] : memref<64x128xf32, #tpu.memory_space<vmem>>, vector<64x128xf32>
      %c0_16 = arith.constant 0 : index
      %c0_17 = arith.constant 0 : index
      %c0_18 = arith.constant 0 : index
      %24 = vector.load %arg6[%c0_16, %c0_17, %c0_18] : memref<1x64x1xf32, #tpu.memory_space<vmem>>, vector<1x64x1xf32>
      %25 = vector.shape_cast %24 : vector<1x64x1xf32> to vector<64x1xf32>
      %26 = vector.broadcast %25 : vector<64x1xf32> to vector<64x128xf32>
      %27 = arith.mulf %23, %26 : vector<64x128xf32>
      %28 = arith.truncf %27 : vector<64x128xf32> to vector<64x128xbf16>
      %c0_19 = arith.constant 0 : index
      %c0_20 = arith.constant 0 : index
      %29 = vector.load %arg13[%c0_19, %c0_20] : memref<64x128xf32, #tpu.memory_space<vmem>>, vector<64x128xf32>
      %c0_21 = arith.constant 0 : index
      %c0_22 = arith.constant 0 : index
      %c0_23 = arith.constant 0 : index
      %30 = vector.load %arg7[%c0_21, %c0_22, %c0_23] : memref<1x128x128xbf16, #tpu.memory_space<vmem>>, vector<1x128x128xbf16>
      %31 = vector.shape_cast %30 : vector<1x128x128xbf16> to vector<128x128xbf16>
      %cst_24 = arith.constant dense<0.000000e+00> : vector<64x128xf32>
      %32 = tpu.matmul %28, %31, %cst_24 {dimension_numbers = #tpu.dot_dimension_numbers<[1], [0], [0], [1], [0, 0, 1, 1], [], []>} : vector<64x128xbf16>, vector<128x128xbf16>, vector<64x128xf32> -> vector<64x128xf32>
      %33 = arith.addf %29, %32 : vector<64x128xf32>
      %c0_25 = arith.constant 0 : index
      %c0_26 = arith.constant 0 : index
      %34 = vector.load %arg13[%c0_25, %c0_26] : memref<64x128xf32, #tpu.memory_space<vmem>>, vector<64x128xf32>
      tpu.vector_store %arg13[%c0_25, %c0_26], %33 {strides = array<i32>} : memref<64x128xf32, #tpu.memory_space<vmem>>, vector<64x128xf32>,
    } else {
    }
    %c3_i32 = arith.constant 3 : i32
    %18 = arith.cmpi eq, %arg1, %c3_i32 : i32
    %c0_i32_12 = arith.constant 0 : i32
    %19 = arith.cmpi eq, %arg2, %c0_i32_12 : i32
    %20 = arith.andi %18, %19 : i1
    %21 = arith.extui %20 : i1 to i32
    %c0_i32_13 = arith.constant 0 : i32
    %22 = arith.cmpi ne, %21, %c0_i32_13 : i32
    scf.if %22 {
      %c0_14 = arith.constant 0 : index
      %c0_15 = arith.constant 0 : index
      %23 = vector.load %arg13[%c0_14, %c0_15] : memref<64x128xf32, #tpu.memory_space<vmem>>, vector<64x128xf32>
      %c0_16 = arith.constant 0 : index
      %c0_17 = arith.constant 0 : index
      %24 = vector.load %arg10[%c0_16, %c0_17] : memref<1x128xf32, #tpu.memory_space<vmem>>, vector<1x128xf32>
      %25 = vector.broadcast %24 : vector<1x128xf32> to vector<64x128xf32>
      %26 = arith.mulf %23, %25 : vector<64x128xf32>
      %c0_18 = arith.constant 0 : index
      %c0_19 = arith.constant 0 : index
      %27 = vector.load %arg11[%c0_18, %c0_19] : memref<1x128xf32, #tpu.memory_space<vmem>>, vector<1x128xf32>
      %28 = vector.broadcast %27 : vector<1x128xf32> to vector<64x128xf32>
      %29 = arith.addf %26, %28 : vector<64x128xf32>
      %cst_20 = arith.constant 0.000000e+00 : f32
      %30 = vector.broadcast %cst_20 : f32 to vector<64x128xf32>
      %31 = arith.cmpf oge, %29, %30 : vector<64x128xf32>
      %cst_21 = arith.constant 1.000000e-01 : f32
      %32 = vector.broadcast %cst_21 : f32 to vector<64x128xf32>
      %33 = arith.mulf %32, %29 : vector<64x128xf32>
      %34 = arith.select %31, %29, %33 : vector<64x128xi1>, vector<64x128xf32>
      %35 = arith.truncf %34 : vector<64x128xf32> to vector<64x128xbf16>
      %c0_22 = arith.constant 0 : index
      %c0_23 = arith.constant 0 : index
      %36 = vector.load %arg12[%c0_22, %c0_23] : memref<64x128xbf16, #tpu.memory_space<vmem>>, vector<64x128xbf16>
      tpu.vector_store %arg12[%c0_22, %c0_23], %35 {strides = array<i32>} : memref<64x128xbf16, #tpu.memory_space<vmem>>, vector<64x128xbf16>,
    } else {
    }
    return
  }
  func.func @transform_0(%arg0: i32, %arg1: i32, %arg2: i32) -> (i32, i32) {
    %c0_i32 = arith.constant 0 : i32
    %c0_i32_0 = arith.constant 0 : i32
    return %arg0, %c0_i32 : i32, i32
  }
  func.func @transform_1(%arg0: i32, %arg1: i32, %arg2: i32) -> (i32, i32) {
    %c0_i32 = arith.constant 0 : i32
    %c0_i32_0 = arith.constant 0 : i32
    return %arg2, %c0_i32 : i32, i32
  }
  func.func @transform_2(%arg0: i32, %arg1: i32, %arg2: i32) -> (i32, i32, i32) {
    %c0_i32 = arith.constant 0 : i32
    return %arg1, %arg0, %arg2 : i32, i32, i32
  }
  func.func @transform_3(%arg0: i32, %arg1: i32, %arg2: i32) -> (i32, i32, i32) {
    %c0_i32 = arith.constant 0 : i32
    %c0_i32_0 = arith.constant 0 : i32
    return %arg1, %arg0, %c0_i32 : i32, i32, i32
  }
  func.func @transform_4(%arg0: i32, %arg1: i32, %arg2: i32) -> (i32, i32, i32) {
    %c0_i32 = arith.constant 0 : i32
    %c0_i32_0 = arith.constant 0 : i32
    %c0_i32_1 = arith.constant 0 : i32
    return %arg1, %c0_i32, %c0_i32_0 : i32, i32, i32
  }
  func.func @transform_5(%arg0: i32, %arg1: i32, %arg2: i32) -> (i32, i32) {
    %c0_i32 = arith.constant 0 : i32
    %c0_i32_0 = arith.constant 0 : i32
    %c0_i32_1 = arith.constant 0 : i32
    return %c0_i32, %c0_i32_0 : i32, i32
  }
  func.func @transform_6(%arg0: i32, %arg1: i32, %arg2: i32) -> (i32, i32) {
    %c0_i32 = arith.constant 0 : i32
    %c0_i32_0 = arith.constant 0 : i32
    %c0_i32_1 = arith.constant 0 : i32
    return %c0_i32, %c0_i32_0 : i32, i32
  }
  func.func @transform_7(%arg0: i32, %arg1: i32, %arg2: i32) -> (i32, i32) {
    %c0_i32 = arith.constant 0 : i32
    %c0_i32_0 = arith.constant 0 : i32
    %c0_i32_1 = arith.constant 0 : i32
    return %c0_i32, %c0_i32_0 : i32, i32
  }
  func.func @transform_8(%arg0: i32, %arg1: i32, %arg2: i32) -> (i32, i32) {
    %c0_i32 = arith.constant 0 : i32
    %c0_i32_0 = arith.constant 0 : i32
    %c0_i32_1 = arith.constant 0 : i32
    return %c0_i32, %c0_i32_0 : i32, i32
  }
  func.func @transform_9(%arg0: i32, %arg1: i32, %arg2: i32) -> (i32, i32) {
    %c0_i32 = arith.constant 0 : i32
    %c0_i32_0 = arith.constant 0 : i32
    return %arg0, %c0_i32 : i32, i32
  }
}

module attributes {stable_mosaic.version = 11 : i64} {
  func.func @_rgcn_l2norm_kernel(%arg0: i32, %arg1: i32, %arg2: i32, %arg3: memref<64x128xbf16, #tpu.memory_space<vmem>>, %arg4: memref<128x128xbf16, #tpu.memory_space<vmem>>, %arg5: memref<1x64x128xbf16, #tpu.memory_space<vmem>>, %arg6: memref<1x64x1xf32, #tpu.memory_space<vmem>>, %arg7: memref<1x128x128xbf16, #tpu.memory_space<vmem>>, %arg8: memref<128x128xbf16, #tpu.memory_space<vmem>>, %arg9: memref<1x128xf32, #tpu.memory_space<vmem>>, %arg10: memref<64x128xf32, #tpu.memory_space<vmem>>, %arg11: memref<64x128xf32, #tpu.memory_space<vmem>>, %arg12: memref<64x128xf32, #tpu.memory_space<vmem>>) attributes {dimension_semantics = [#tpu.dimension_semantics<parallel>, #tpu.dimension_semantics<arbitrary>, #tpu.dimension_semantics<arbitrary>], iteration_bounds = array<i64: 2, 4, 1>, scalar_prefetch = 0 : i64, scratch_operands = 2 : i64, tpu.core_type = #tpu.core_type<tc>, window_params = [{transform_indices = @transform_0, window_bounds = array<i64: 64, 128>}, {transform_indices = @transform_1, window_bounds = array<i64: 128, 128>}, {transform_indices = @transform_2, window_bounds = array<i64: 1, 64, 128>}, {transform_indices = @transform_3, window_bounds = array<i64: 1, 64, 1>}, {transform_indices = @transform_4, window_bounds = array<i64: 1, 128, 128>}, {pipeline_mode = #tpu.pipeline_mode<synchronous>, transform_indices = @transform_5, window_bounds = array<i64: 128, 128>}, {pipeline_mode = #tpu.pipeline_mode<synchronous>, transform_indices = @transform_6, window_bounds = array<i64: 1, 128>}, {transform_indices = @transform_7, window_bounds = array<i64: 64, 128>}]} {
    %c0_i32 = arith.constant 0 : i32
    %0 = arith.cmpi eq, %arg1, %c0_i32 : i32
    %c0_i32_0 = arith.constant 0 : i32
    %1 = arith.cmpi eq, %arg2, %c0_i32_0 : i32
    %2 = arith.andi %0, %1 : i1
    %3 = arith.extui %2 : i1 to i32
    %c0_i32_1 = arith.constant 0 : i32
    %4 = arith.cmpi ne, %3, %c0_i32_1 : i32
    scf.if %4 {
      %c0_14 = arith.constant 0 : index
      %c0_15 = arith.constant 0 : index
      %23 = vector.load %arg3[%c0_14, %c0_15] : memref<64x128xbf16, #tpu.memory_space<vmem>>, vector<64x128xbf16>
      %c0_16 = arith.constant 0 : index
      %c0_17 = arith.constant 0 : index
      %24 = vector.load %arg8[%c0_16, %c0_17] : memref<128x128xbf16, #tpu.memory_space<vmem>>, vector<128x128xbf16>
      %cst_18 = arith.constant dense<0.000000e+00> : vector<64x128xf32>
      %25 = tpu.matmul %23, %24, %cst_18 {dimension_numbers = #tpu.dot_dimension_numbers<[1], [0], [0], [1], [0, 0, 1, 1], [], []>} : vector<64x128xbf16>, vector<128x128xbf16>, vector<64x128xf32> -> vector<64x128xf32>
      %c0_19 = arith.constant 0 : index
      %c0_20 = arith.constant 0 : index
      %26 = vector.load %arg9[%c0_19, %c0_20] : memref<1x128xf32, #tpu.memory_space<vmem>>, vector<1x128xf32>
      %27 = vector.broadcast %26 : vector<1x128xf32> to vector<64x128xf32>
      %28 = arith.addf %25, %27 : vector<64x128xf32>
      %c0_21 = arith.constant 0 : index
      %c0_22 = arith.constant 0 : index
      %29 = vector.load %arg11[%c0_21, %c0_22] : memref<64x128xf32, #tpu.memory_space<vmem>>, vector<64x128xf32>
      tpu.vector_store %arg11[%c0_21, %c0_22], %28 {strides = array<i32>} : memref<64x128xf32, #tpu.memory_space<vmem>>, vector<64x128xf32>,
    } else {
    }
    %c0 = arith.constant 0 : index
    %c0_2 = arith.constant 0 : index
    %c0_3 = arith.constant 0 : index
    %5 = vector.load %arg5[%c0, %c0_2, %c0_3] : memref<1x64x128xbf16, #tpu.memory_space<vmem>>, vector<1x64x128xbf16>
    %6 = vector.shape_cast %5 : vector<1x64x128xbf16> to vector<64x128xbf16>
    %c0_4 = arith.constant 0 : index
    %c0_5 = arith.constant 0 : index
    %7 = vector.load %arg4[%c0_4, %c0_5] : memref<128x128xbf16, #tpu.memory_space<vmem>>, vector<128x128xbf16>
    %cst = arith.constant dense<0.000000e+00> : vector<64x128xf32>
    %8 = tpu.matmul %6, %7, %cst {dimension_numbers = #tpu.dot_dimension_numbers<[1], [0], [0], [1], [0, 0, 1, 1], [], []>} : vector<64x128xbf16>, vector<128x128xbf16>, vector<64x128xf32> -> vector<64x128xf32>
    %c0_i32_6 = arith.constant 0 : i32
    %9 = arith.cmpi eq, %arg2, %c0_i32_6 : i32
    %10 = arith.extui %9 : i1 to i32
    %c0_i32_7 = arith.constant 0 : i32
    %11 = arith.cmpi ne, %10, %c0_i32_7 : i32
    scf.if %11 {
      %c0_14 = arith.constant 0 : index
      %c0_15 = arith.constant 0 : index
      %23 = vector.load %arg12[%c0_14, %c0_15] : memref<64x128xf32, #tpu.memory_space<vmem>>, vector<64x128xf32>
      tpu.vector_store %arg12[%c0_14, %c0_15], %8 {strides = array<i32>} : memref<64x128xf32, #tpu.memory_space<vmem>>, vector<64x128xf32>,
    } else {
    }
    %c0_i32_8 = arith.constant 0 : i32
    %12 = arith.cmpi sgt, %arg2, %c0_i32_8 : i32
    %13 = arith.extui %12 : i1 to i32
    %c0_i32_9 = arith.constant 0 : i32
    %14 = arith.cmpi ne, %13, %c0_i32_9 : i32
    scf.if %14 {
      %c0_14 = arith.constant 0 : index
      %c0_15 = arith.constant 0 : index
      %23 = vector.load %arg12[%c0_14, %c0_15] : memref<64x128xf32, #tpu.memory_space<vmem>>, vector<64x128xf32>
      %24 = arith.addf %23, %8 : vector<64x128xf32>
      %c0_16 = arith.constant 0 : index
      %c0_17 = arith.constant 0 : index
      %25 = vector.load %arg12[%c0_16, %c0_17] : memref<64x128xf32, #tpu.memory_space<vmem>>, vector<64x128xf32>
      tpu.vector_store %arg12[%c0_16, %c0_17], %24 {strides = array<i32>} : memref<64x128xf32, #tpu.memory_space<vmem>>, vector<64x128xf32>,
    } else {
    }
    %c0_i32_10 = arith.constant 0 : i32
    %15 = arith.cmpi eq, %arg2, %c0_i32_10 : i32
    %16 = arith.extui %15 : i1 to i32
    %c0_i32_11 = arith.constant 0 : i32
    %17 = arith.cmpi ne, %16, %c0_i32_11 : i32
    scf.if %17 {
      %c0_14 = arith.constant 0 : index
      %c0_15 = arith.constant 0 : index
      %23 = vector.load %arg12[%c0_14, %c0_15] : memref<64x128xf32, #tpu.memory_space<vmem>>, vector<64x128xf32>
      %c0_16 = arith.constant 0 : index
      %c0_17 = arith.constant 0 : index
      %c0_18 = arith.constant 0 : index
      %24 = vector.load %arg6[%c0_16, %c0_17, %c0_18] : memref<1x64x1xf32, #tpu.memory_space<vmem>>, vector<1x64x1xf32>
      %25 = vector.shape_cast %24 : vector<1x64x1xf32> to vector<64x1xf32>
      %26 = vector.broadcast %25 : vector<64x1xf32> to vector<64x128xf32>
      %27 = arith.mulf %23, %26 : vector<64x128xf32>
      %28 = arith.truncf %27 : vector<64x128xf32> to vector<64x128xbf16>
      %c0_19 = arith.constant 0 : index
      %c0_20 = arith.constant 0 : index
      %29 = vector.load %arg11[%c0_19, %c0_20] : memref<64x128xf32, #tpu.memory_space<vmem>>, vector<64x128xf32>
      %c0_21 = arith.constant 0 : index
      %c0_22 = arith.constant 0 : index
      %c0_23 = arith.constant 0 : index
      %30 = vector.load %arg7[%c0_21, %c0_22, %c0_23] : memref<1x128x128xbf16, #tpu.memory_space<vmem>>, vector<1x128x128xbf16>
      %31 = vector.shape_cast %30 : vector<1x128x128xbf16> to vector<128x128xbf16>
      %cst_24 = arith.constant dense<0.000000e+00> : vector<64x128xf32>
      %32 = tpu.matmul %28, %31, %cst_24 {dimension_numbers = #tpu.dot_dimension_numbers<[1], [0], [0], [1], [0, 0, 1, 1], [], []>} : vector<64x128xbf16>, vector<128x128xbf16>, vector<64x128xf32> -> vector<64x128xf32>
      %33 = arith.addf %29, %32 : vector<64x128xf32>
      %c0_25 = arith.constant 0 : index
      %c0_26 = arith.constant 0 : index
      %34 = vector.load %arg11[%c0_25, %c0_26] : memref<64x128xf32, #tpu.memory_space<vmem>>, vector<64x128xf32>
      tpu.vector_store %arg11[%c0_25, %c0_26], %33 {strides = array<i32>} : memref<64x128xf32, #tpu.memory_space<vmem>>, vector<64x128xf32>,
    } else {
    }
    %c3_i32 = arith.constant 3 : i32
    %18 = arith.cmpi eq, %arg1, %c3_i32 : i32
    %c0_i32_12 = arith.constant 0 : i32
    %19 = arith.cmpi eq, %arg2, %c0_i32_12 : i32
    %20 = arith.andi %18, %19 : i1
    %21 = arith.extui %20 : i1 to i32
    %c0_i32_13 = arith.constant 0 : i32
    %22 = arith.cmpi ne, %21, %c0_i32_13 : i32
    scf.if %22 {
      %c0_14 = arith.constant 0 : index
      %c0_15 = arith.constant 0 : index
      %23 = vector.load %arg11[%c0_14, %c0_15] : memref<64x128xf32, #tpu.memory_space<vmem>>, vector<64x128xf32>
      %24 = arith.mulf %23, %23 : vector<64x128xf32>
      %cst_16 = arith.constant dense<0.000000e+00> : vector<64xf32>
      %25 = vector.multi_reduction <add>, %24, %cst_16 [1] : vector<64x128xf32> to vector<64xf32>
      %26 = vector.shape_cast %25 : vector<64xf32> to vector<64x1xf32>
      %cst_17 = arith.constant 1.000000e-24 : f32
      %27 = vector.broadcast %cst_17 : f32 to vector<64x1xf32>
      %28 = arith.maximumf %26, %27 : vector<64x1xf32>
      %29 = math.rsqrt %28 : vector<64x1xf32>
      %30 = vector.broadcast %29 : vector<64x1xf32> to vector<64x128xf32>
      %31 = arith.mulf %23, %30 : vector<64x128xf32>
      %c0_18 = arith.constant 0 : index
      %c0_19 = arith.constant 0 : index
      %32 = vector.load %arg10[%c0_18, %c0_19] : memref<64x128xf32, #tpu.memory_space<vmem>>, vector<64x128xf32>
      tpu.vector_store %arg10[%c0_18, %c0_19], %31 {strides = array<i32>} : memref<64x128xf32, #tpu.memory_space<vmem>>, vector<64x128xf32>,
    } else {
    }
    return
  }
  func.func @transform_0(%arg0: i32, %arg1: i32, %arg2: i32) -> (i32, i32) {
    %c0_i32 = arith.constant 0 : i32
    %c0_i32_0 = arith.constant 0 : i32
    return %arg0, %c0_i32 : i32, i32
  }
  func.func @transform_1(%arg0: i32, %arg1: i32, %arg2: i32) -> (i32, i32) {
    %c0_i32 = arith.constant 0 : i32
    %c0_i32_0 = arith.constant 0 : i32
    return %arg2, %c0_i32 : i32, i32
  }
  func.func @transform_2(%arg0: i32, %arg1: i32, %arg2: i32) -> (i32, i32, i32) {
    %c0_i32 = arith.constant 0 : i32
    return %arg1, %arg0, %arg2 : i32, i32, i32
  }
  func.func @transform_3(%arg0: i32, %arg1: i32, %arg2: i32) -> (i32, i32, i32) {
    %c0_i32 = arith.constant 0 : i32
    %c0_i32_0 = arith.constant 0 : i32
    return %arg1, %arg0, %c0_i32 : i32, i32, i32
  }
  func.func @transform_4(%arg0: i32, %arg1: i32, %arg2: i32) -> (i32, i32, i32) {
    %c0_i32 = arith.constant 0 : i32
    %c0_i32_0 = arith.constant 0 : i32
    %c0_i32_1 = arith.constant 0 : i32
    return %arg1, %c0_i32, %c0_i32_0 : i32, i32, i32
  }
  func.func @transform_5(%arg0: i32, %arg1: i32, %arg2: i32) -> (i32, i32) {
    %c0_i32 = arith.constant 0 : i32
    %c0_i32_0 = arith.constant 0 : i32
    %c0_i32_1 = arith.constant 0 : i32
    return %c0_i32, %c0_i32_0 : i32, i32
  }
  func.func @transform_6(%arg0: i32, %arg1: i32, %arg2: i32) -> (i32, i32) {
    %c0_i32 = arith.constant 0 : i32
    %c0_i32_0 = arith.constant 0 : i32
    %c0_i32_1 = arith.constant 0 : i32
    return %c0_i32, %c0_i32_0 : i32, i32
  }
  func.func @transform_7(%arg0: i32, %arg1: i32, %arg2: i32) -> (i32, i32) {
    %c0_i32 = arith.constant 0 : i32
    %c0_i32_0 = arith.constant 0 : i32
    return %arg0, %c0_i32 : i32, i32
  }
}

module attributes {stable_mosaic.version = 11 : i64} {
  func.func @_edge_mlp_kernel(%arg0: i32, %arg1: memref<96x128xf32, #tpu.memory_space<vmem>>, %arg2: memref<96x8xbf16, #tpu.memory_space<vmem>>, %arg3: memref<8x128xbf16, #tpu.memory_space<vmem>>, %arg4: memref<1x128xf32, #tpu.memory_space<vmem>>, %arg5: memref<128x128xbf16, #tpu.memory_space<vmem>>, %arg6: memref<1x128xf32, #tpu.memory_space<vmem>>, %arg7: memref<96x1xf32, #tpu.memory_space<vmem>>, %arg8: memref<96x128xf32, #tpu.memory_space<vmem>>) attributes {dimension_semantics = [#tpu.dimension_semantics<parallel>], iteration_bounds = array<i64: 1>, scalar_prefetch = 0 : i64, scratch_operands = 0 : i64, tpu.core_type = #tpu.core_type<tc>, window_params = [{transform_indices = @transform_0, window_bounds = array<i64: 96, 128>}, {transform_indices = @transform_1, window_bounds = array<i64: 96, 8>}, {pipeline_mode = #tpu.pipeline_mode<synchronous>, transform_indices = @transform_2, window_bounds = array<i64: 8, 128>}, {pipeline_mode = #tpu.pipeline_mode<synchronous>, transform_indices = @transform_3, window_bounds = array<i64: 1, 128>}, {pipeline_mode = #tpu.pipeline_mode<synchronous>, transform_indices = @transform_4, window_bounds = array<i64: 128, 128>}, {pipeline_mode = #tpu.pipeline_mode<synchronous>, transform_indices = @transform_5, window_bounds = array<i64: 1, 128>}, {transform_indices = @transform_6, window_bounds = array<i64: 96, 1>}, {transform_indices = @transform_7, window_bounds = array<i64: 96, 128>}]} {
    %c0 = arith.constant 0 : index
    %c0_0 = arith.constant 0 : index
    %0 = vector.load %arg2[%c0, %c0_0] : memref<96x8xbf16, #tpu.memory_space<vmem>>, vector<96x8xbf16>
    %c0_1 = arith.constant 0 : index
    %c0_2 = arith.constant 0 : index
    %1 = vector.load %arg3[%c0_1, %c0_2] : memref<8x128xbf16, #tpu.memory_space<vmem>>, vector<8x128xbf16>
    %cst = arith.constant dense<0.000000e+00> : vector<96x128xf32>
    %2 = tpu.matmul %0, %1, %cst {dimension_numbers = #tpu.dot_dimension_numbers<[1], [0], [0], [1], [0, 0, 1, 1], [], []>} : vector<96x8xbf16>, vector<8x128xbf16>, vector<96x128xf32> -> vector<96x128xf32>
    %c0_3 = arith.constant 0 : index
    %c0_4 = arith.constant 0 : index
    %3 = vector.load %arg4[%c0_3, %c0_4] : memref<1x128xf32, #tpu.memory_space<vmem>>, vector<1x128xf32>
    %4 = vector.broadcast %3 : vector<1x128xf32> to vector<96x128xf32>
    %5 = arith.addf %2, %4 : vector<96x128xf32>
    %cst_5 = arith.constant 0.000000e+00 : f32
    %6 = vector.broadcast %cst_5 : f32 to vector<96x128xf32>
    %7 = arith.maximumf %5, %6 : vector<96x128xf32>
    %8 = arith.truncf %7 : vector<96x128xf32> to vector<96x128xbf16>
    %c0_6 = arith.constant 0 : index
    %c0_7 = arith.constant 0 : index
    %9 = vector.load %arg5[%c0_6, %c0_7] : memref<128x128xbf16, #tpu.memory_space<vmem>>, vector<128x128xbf16>
    %cst_8 = arith.constant dense<0.000000e+00> : vector<96x128xf32>
    %10 = tpu.matmul %8, %9, %cst_8 {dimension_numbers = #tpu.dot_dimension_numbers<[1], [0], [0], [1], [0, 0, 1, 1], [], []>} : vector<96x128xbf16>, vector<128x128xbf16>, vector<96x128xf32> -> vector<96x128xf32>
    %c0_9 = arith.constant 0 : index
    %c0_10 = arith.constant 0 : index
    %11 = vector.load %arg6[%c0_9, %c0_10] : memref<1x128xf32, #tpu.memory_space<vmem>>, vector<1x128xf32>
    %12 = vector.broadcast %11 : vector<1x128xf32> to vector<96x128xf32>
    %13 = arith.addf %10, %12 : vector<96x128xf32>
    %c0_11 = arith.constant 0 : index
    %c0_12 = arith.constant 0 : index
    %14 = vector.load %arg1[%c0_11, %c0_12] : memref<96x128xf32, #tpu.memory_space<vmem>>, vector<96x128xf32>
    %15 = arith.addf %14, %13 : vector<96x128xf32>
    %c0_13 = arith.constant 0 : index
    %c0_14 = arith.constant 0 : index
    %16 = vector.load %arg7[%c0_13, %c0_14] : memref<96x1xf32, #tpu.memory_space<vmem>>, vector<96x1xf32>
    %17 = vector.broadcast %16 : vector<96x1xf32> to vector<96x128xf32>
    %18 = arith.mulf %15, %17 : vector<96x128xf32>
    %c0_15 = arith.constant 0 : index
    %c0_16 = arith.constant 0 : index
    %19 = vector.load %arg8[%c0_15, %c0_16] : memref<96x128xf32, #tpu.memory_space<vmem>>, vector<96x128xf32>
    tpu.vector_store %arg8[%c0_15, %c0_16], %18 {strides = array<i32>} : memref<96x128xf32, #tpu.memory_space<vmem>>, vector<96x128xf32>,
    return
  }
  func.func @transform_0(%arg0: i32) -> (i32, i32) {
    %c0_i32 = arith.constant 0 : i32
    %c0_i32_0 = arith.constant 0 : i32
    return %arg0, %c0_i32 : i32, i32
  }
  func.func @transform_1(%arg0: i32) -> (i32, i32) {
    %c0_i32 = arith.constant 0 : i32
    %c0_i32_0 = arith.constant 0 : i32
    return %arg0, %c0_i32 : i32, i32
  }
  func.func @transform_2(%arg0: i32) -> (i32, i32) {
    %c0_i32 = arith.constant 0 : i32
    %c0_i32_0 = arith.constant 0 : i32
    %c0_i32_1 = arith.constant 0 : i32
    return %c0_i32, %c0_i32_0 : i32, i32
  }
  func.func @transform_3(%arg0: i32) -> (i32, i32) {
    %c0_i32 = arith.constant 0 : i32
    %c0_i32_0 = arith.constant 0 : i32
    %c0_i32_1 = arith.constant 0 : i32
    return %c0_i32, %c0_i32_0 : i32, i32
  }
  func.func @transform_4(%arg0: i32) -> (i32, i32) {
    %c0_i32 = arith.constant 0 : i32
    %c0_i32_0 = arith.constant 0 : i32
    %c0_i32_1 = arith.constant 0 : i32
    return %c0_i32, %c0_i32_0 : i32, i32
  }
  func.func @transform_5(%arg0: i32) -> (i32, i32) {
    %c0_i32 = arith.constant 0 : i32
    %c0_i32_0 = arith.constant 0 : i32
    %c0_i32_1 = arith.constant 0 : i32
    return %c0_i32, %c0_i32_0 : i32, i32
  }
  func.func @transform_6(%arg0: i32) -> (i32, i32) {
    %c0_i32 = arith.constant 0 : i32
    %c0_i32_0 = arith.constant 0 : i32
    return %arg0, %c0_i32 : i32, i32
  }
  func.func @transform_7(%arg0: i32) -> (i32, i32) {
    %c0_i32 = arith.constant 0 : i32
    %c0_i32_0 = arith.constant 0 : i32
    return %arg0, %c0_i32 : i32, i32
  }
}

</mosaic_0001>

<llo_original>
// kernel: edge_feature_rgcn_forward.5
$region0: #{edge_feature_rgcn_forward.5}
  #allocation0 [shape = 'u32[]', space=smem, size = 0x4, offset = 0x4, fixed_abs, tag = 'smem constant byte address 0x4 - core index']
  #allocation1 [shape = 'u32[72,128]{1,0:T(1,128)}', space=vmem, size = 0x9000, scoped, tag = 'internal scratch']
  #allocation2 [shape = 'f32[64,128]{1,0:T(8,128)}', space=vmem, size = 0x8000, scoped, tag = 'scratch operand']
  #allocation3 [shape = 'f32[64,128]{1,0:T(8,128)}', space=vmem, size = 0x8000, scoped, tag = 'scratch operand']
  %s0 = inlined_call_operand.vmem [shape: bf16[128,128], index: 0, kind: input, shape index: {}, may-alias: {0,1}]
  %s1 = inlined_call_operand.vmem [shape: bf16[128,128], index: 1, kind: input, shape index: {}, may-alias: {0,1}]
  %s2 = inlined_call_operand.vmem [shape: bf16[4,128,128], index: 2, kind: input, shape index: {}]
  %s3 = inlined_call_operand.vmem [shape: f32[4,128,1], index: 3, kind: input, shape index: {}]
  %s4 = inlined_call_operand.vmem [shape: bf16[4,128,128], index: 4, kind: input, shape index: {}]
  %s5 = inlined_call_operand.vmem [shape: bf16[128,128], index: 5, kind: input, shape index: {}]
  %s6 = inlined_call_operand.vmem [shape: f32[1,128], index: 6, kind: input, shape index: {}]
  %s7 = inlined_call_operand.vmem [shape: f32[1,128], index: 7, kind: input, shape index: {}]
  %s8 = inlined_call_operand.vmem [shape: f32[1,128], index: 8, kind: input, shape index: {}]
  %s9 = inlined_call_operand.vmem [shape: bf16[128,128], index: 9, kind: output, shape index: {}]
  %s10 = sld [smem:[#allocation0]]
  $region89: #{edge_feature_rgcn_forward.5} parent=0
    _
  %s12 = ssub.s32 1, %s10
  %s13 = scalar_select 0, %s12, %s10
  loop: start=0, step=1, limit=10
  $region2: #{edge_feature_rgcn_forward.5} parent=0 // loop_pre_header
    _
  $region3: #{edge_feature_rgcn_forward.5} parent=0 // loop_header
    %s15 = sphi 0, %s19
    %p16 = scmp.ge.s32.totalorder %s15, 10
    %s22 = sphi 0, %s41
    %s23 = sphi 0, %s37
    %s24 = sphi 0, %s33
    %s25 = sphi 0, %s22
    %s26 = sphi 0, %s23
    %s27 = sphi 0, %s24
    %s28 = sphi 0, %s25
    %s29 = sphi 0, %s26
    %s30 = sphi 0, %s27
    %s44 = sphi 0, %s46
    %s47 = sphi 0, %s44
    %s48 = sphi 0, %s47
    %s64 = sphi 0, %s48
    %s70 = sphi 0, %s72
    %s73 = sphi 0, %s70
    %s74 = sphi 0, %s73
    %s90 = sphi 0, %s74
    %s100 = sphi 0, %s102
    %s103 = sphi 0, %s100
    %s104 = sphi 0, %s103
    %s120 = sphi 0, %s104
    %s128 = sphi 0, %s130
    %s131 = sphi 0, %s128
    %s132 = sphi 0, %s131
    %s148 = sphi 0, %s132
    %s154 = sphi 0, %s156
    %s157 = sphi 0, %s154
    %s158 = sphi 0, %s157
    %s174 = sphi 0, %s158
    %s178 = sphi 0, %s178
    %s180 = sphi 0, %s178
    %s181 = sphi 0, %s180
    %s195 = sphi 0, %s181
    %s199 = sphi 0, %s199
    %s201 = sphi 0, %s199
    %s202 = sphi 0, %s201
    %s216 = sphi 0, %s202
    %s220 = sphi 0, %s220
    %s222 = sphi 0, %s220
    %s223 = sphi 0, %s222
    %s237 = sphi 0, %s223
    %s241 = sphi 0, %s241
    %s243 = sphi 0, %s241
    %s244 = sphi 0, %s243
    %s258 = sphi 0, %s244
    %s264 = sphi 0, %s266
    %s267 = sphi 0, %s264
    %s268 = sphi 0, %s267
    %s284 = sphi 0, %s268
  $region4: #{edge_feature_rgcn_forward.5} parent=0 // loop_header_branch
    %18 = sbr.rel (%p16) target = $region8
  $region5: #{edge_feature_rgcn_forward.5} parent=0 // loop_body
    %s20 = ssub.s32 %s15, 1
    %s21 = ssub.s32 %s15, 2
    %s31 = sadd.s32 1, %s24
    %p32 = scmp.ge.s32.totalorder %s31, 1
    %s33 = scalar_select %p32, 0, %s31
    %s34 = sadd.s32 1, %s23
    %s35 = scalar_select %p32, %s34, %s23
    %p36 = scmp.ge.s32.totalorder %s35, 4
    %s37 = scalar_select %p36, 0, %s35
    %s38 = sadd.s32 1, %s22
    %s39 = scalar_select %p36, %s38, %s22
    %p40 = scmp.ge.s32.totalorder %s39, 2
    %s41 = scalar_select %p40, 0, %s39
    %s42 = ssub.s32 %s22, %s41
    %p43 = scmp.eq.s32.totalorder %s42, 0
    %s45 = sadd.s32 %s44, 1
    %s46 = scalar_select %p43, %s44, %s45
    %p49 = pneg %p43
    %p50 = scmp.eq.s32.totalorder %s15, 7
    %p51 = por %p49, %p50
    %p52 = scmp.ne.s32.totalorder %s44, %s47
    %p53 = scmp.eq.s32.totalorder %s15, 0
    %p54 = por %p52, %p53
    %p55 = scmp.ne.s32.totalorder %s44, %s47
    %p56 = scmp.eq.s32.totalorder %s20, 7
    %p57 = por %p55, %p56
    %p58 = scmp.ne.s32.totalorder %s47, %s48
    %p59 = scmp.eq.s32.totalorder %s20, 0
    %p60 = por %p58, %p59
    %p61 = scmp.ne.s32.totalorder %s47, %s48
    %p62 = scmp.eq.s32.totalorder %s21, 7
    %p63 = por %p61, %p62
    %p65 = scmp.ne.s32.totalorder %s48, %s64
    %p66 = scmp.eq.s32.totalorder %s21, 0
    %p67 = por %p65, %p66
    %s68 = ssub.s32 %s24, %s33
    %p69 = scmp.eq.s32.totalorder %s68, 0
    %s71 = sadd.s32 %s70, 1
    %s72 = scalar_select %p69, %s70, %s71
    %p75 = pneg %p69
    %p76 = scmp.eq.s32.totalorder %s15, 7
    %p77 = por %p75, %p76
    %p78 = scmp.ne.s32.totalorder %s70, %s73
    %p79 = scmp.eq.s32.totalorder %s15, 0
    %p80 = por %p78, %p79
    %p81 = scmp.ne.s32.totalorder %s70, %s73
    %p82 = scmp.eq.s32.totalorder %s20, 7
    %p83 = por %p81, %p82
    %p84 = scmp.ne.s32.totalorder %s73, %s74
    %p85 = scmp.eq.s32.totalorder %s20, 0
    %p86 = por %p84, %p85
    %p87 = scmp.ne.s32.totalorder %s73, %s74
    %p88 = scmp.eq.s32.totalorder %s21, 7
    %p89 = por %p87, %p88
    %p91 = scmp.ne.s32.totalorder %s74, %s90
    %p92 = scmp.eq.s32.totalorder %s21, 0
    %p93 = por %p91, %p92
    %s94 = ssub.s32 %s23, %s37
    %s95 = ssub.s32 %s22, %s41
    %s96 = sor.u32 %s94, %s95
    %s97 = ssub.s32 %s24, %s33
    %s98 = sor.u32 %s96, %s97
    %p99 = scmp.eq.s32.totalorder %s98, 0
    %s101 = sadd.s32 %s100, 1
    %s102 = scalar_select %p99, %s100, %s101
    %p105 = pneg %p99
    %p106 = scmp.eq.s32.totalorder %s15, 7
    %p107 = por %p105, %p106
    %p108 = scmp.ne.s32.totalorder %s100, %s103
    %p109 = scmp.eq.s32.totalorder %s15, 0
    %p110 = por %p108, %p109
    %p111 = scmp.ne.s32.totalorder %s100, %s103
    %p112 = scmp.eq.s32.totalorder %s20, 7
    %p113 = por %p111, %p112
    %p114 = scmp.ne.s32.totalorder %s103, %s104
    %p115 = scmp.eq.s32.totalorder %s20, 0
    %p116 = por %p114, %p115
    %p117 = scmp.ne.s32.totalorder %s103, %s104
    %p118 = scmp.eq.s32.totalorder %s21, 7
    %p119 = por %p117, %p118
    %p121 = scmp.ne.s32.totalorder %s104, %s120
    %p122 = scmp.eq.s32.totalorder %s21, 0
    %p123 = por %p121, %p122
    %s124 = ssub.s32 %s23, %s37
    %s125 = ssub.s32 %s22, %s41
    %s126 = sor.u32 %s124, %s125
    %p127 = scmp.eq.s32.totalorder %s126, 0
    %s129 = sadd.s32 %s128, 1
    %s130 = scalar_select %p127, %s128, %s129
    %p133 = pneg %p127
    %p134 = scmp.eq.s32.totalorder %s15, 7
    %p135 = por %p133, %p134
    %p136 = scmp.ne.s32.totalorder %s128, %s131
    %p137 = scmp.eq.s32.totalorder %s15, 0
    %p138 = por %p136, %p137
    %p139 = scmp.ne.s32.totalorder %s128, %s131
    %p140 = scmp.eq.s32.totalorder %s20, 7
    %p141 = por %p139, %p140
    %p142 = scmp.ne.s32.totalorder %s131, %s132
    %p143 = scmp.eq.s32.totalorder %s20, 0
    %p144 = por %p142, %p143
    %p145 = scmp.ne.s32.totalorder %s131, %s132
    %p146 = scmp.eq.s32.totalorder %s21, 7
    %p147 = por %p145, %p146
    %p149 = scmp.ne.s32.totalorder %s132, %s148
    %p150 = scmp.eq.s32.totalorder %s21, 0
    %p151 = por %p149, %p150
    %s152 = ssub.s32 %s23, %s37
    %p153 = scmp.eq.s32.totalorder %s152, 0
    %s155 = sadd.s32 %s154, 1
    %s156 = scalar_select %p153, %s154, %s155
    %p159 = pneg %p153
    %p160 = scmp.eq.s32.totalorder %s15, 7
    %p161 = por %p159, %p160
    %p162 = scmp.ne.s32.totalorder %s154, %s157
    %p163 = scmp.eq.s32.totalorder %s15, 0
    %p164 = por %p162, %p163
    %p165 = scmp.ne.s32.totalorder %s154, %s157
    %p166 = scmp.eq.s32.totalorder %s20, 7
    %p167 = por %p165, %p166
    %p168 = scmp.ne.s32.totalorder %s157, %s158
    %p169 = scmp.eq.s32.totalorder %s20, 0
    %p170 = por %p168, %p169
    %p171 = scmp.ne.s32.totalorder %s157, %s158
    %p172 = scmp.eq.s32.totalorder %s21, 7
    %p173 = por %p171, %p172
    %p175 = scmp.ne.s32.totalorder %s158, %s174
    %p176 = scmp.eq.s32.totalorder %s21, 0
    %p177 = por %p175, %p176
    %s179 = sadd.s32 %s178, 1
    %p182 = scmp.eq.s32.totalorder %s15, 7
    %p183 = scmp.ne.s32.totalorder %s178, %s180
    %p184 = scmp.eq.s32.totalorder %s15, 0
    %p185 = por %p183, %p184
    %p186 = scmp.ne.s32.totalorder %s178, %s180
    %p187 = scmp.eq.s32.totalorder %s20, 7
    %p188 = por %p186, %p187
    %p189 = scmp.ne.s32.totalorder %s180, %s181
    %p190 = scmp.eq.s32.totalorder %s20, 0
    %p191 = por %p189, %p190
    %p192 = scmp.ne.s32.totalorder %s180, %s181
    %p193 = scmp.eq.s32.totalorder %s21, 7
    %p194 = por %p192, %p193
    %p196 = scmp.ne.s32.totalorder %s181, %s195
    %p197 = scmp.eq.s32.totalorder %s21, 0
    %p198 = por %p196, %p197
    %s200 = sadd.s32 %s199, 1
    %p203 = scmp.eq.s32.totalorder %s15, 7
    %p204 = scmp.ne.s32.totalorder %s199, %s201
    %p205 = scmp.eq.s32.totalorder %s15, 0
    %p206 = por %p204, %p205
    %p207 = scmp.ne.s32.totalorder %s199, %s201
    %p208 = scmp.eq.s32.totalorder %s20, 7
    %p209 = por %p207, %p208
    %p210 = scmp.ne.s32.totalorder %s201, %s202
    %p211 = scmp.eq.s32.totalorder %s20, 0
    %p212 = por %p210, %p211
    %p213 = scmp.ne.s32.totalorder %s201, %s202
    %p214 = scmp.eq.s32.totalorder %s21, 7
    %p215 = por %p213, %p214
    %p217 = scmp.ne.s32.totalorder %s202, %s216
    %p218 = scmp.eq.s32.totalorder %s21, 0
    %p219 = por %p217, %p218
    %s221 = sadd.s32 %s220, 1
    %p224 = scmp.eq.s32.totalorder %s15, 7
    %p225 = scmp.ne.s32.totalorder %s220, %s222
    %p226 = scmp.eq.s32.totalorder %s15, 0
    %p227 = por %p225, %p226
    %p228 = scmp.ne.s32.totalorder %s220, %s222
    %p229 = scmp.eq.s32.totalorder %s20, 7
    %p230 = por %p228, %p229
    %p231 = scmp.ne.s32.totalorder %s222, %s223
    %p232 = scmp.eq.s32.totalorder %s20, 0
    %p233 = por %p231, %p232
    %p234 = scmp.ne.s32.totalorder %s222, %s223
    %p235 = scmp.eq.s32.totalorder %s21, 7
    %p236 = por %p234, %p235
    %p238 = scmp.ne.s32.totalorder %s223, %s237
    %p239 = scmp.eq.s32.totalorder %s21, 0
    %p240 = por %p238, %p239
    %s242 = sadd.s32 %s241, 1
    %p245 = scmp.eq.s32.totalorder %s15, 7
    %p246 = scmp.ne.s32.totalorder %s241, %s243
    %p247 = scmp.eq.s32.totalorder %s15, 0
    %p248 = por %p246, %p247
    %p249 = scmp.ne.s32.totalorder %s241, %s243
    %p250 = scmp.eq.s32.totalorder %s20, 7
    %p251 = por %p249, %p250
    %p252 = scmp.ne.s32.totalorder %s243, %s244
    %p253 = scmp.eq.s32.totalorder %s20, 0
    %p254 = por %p252, %p253
    %p255 = scmp.ne.s32.totalorder %s243, %s244
    %p256 = scmp.eq.s32.totalorder %s21, 7
    %p257 = por %p255, %p256
    %p259 = scmp.ne.s32.totalorder %s244, %s258
    %p260 = scmp.eq.s32.totalorder %s21, 0
    %p261 = por %p259, %p260
    %s262 = ssub.s32 %s22, %s41
    %p263 = scmp.eq.s32.totalorder %s262, 0
    %s265 = sadd.s32 %s264, 1
    %s266 = scalar_select %p263, %s264, %s265
    %p269 = pneg %p263
    %p270 = scmp.eq.s32.totalorder %s15, 7
    %p271 = por %p269, %p270
    %p272 = scmp.ne.s32.totalorder %s264, %s267
    %p273 = scmp.eq.s32.totalorder %s15, 0
    %p274 = por %p272, %p273
    %p275 = scmp.ne.s32.totalorder %s264, %s267
    %p276 = scmp.eq.s32.totalorder %s20, 7
    %p277 = por %p275, %p276
    %p278 = scmp.ne.s32.totalorder %s267, %s268
    %p279 = scmp.eq.s32.totalorder %s20, 0
    %p280 = por %p278, %p279
    %p281 = scmp.ne.s32.totalorder %s267, %s268
    %p282 = scmp.eq.s32.totalorder %s21, 7
    %p283 = por %p281, %p282
    %p285 = scmp.ne.s32.totalorder %s268, %s284
    %p286 = scmp.eq.s32.totalorder %s21, 0
    %p287 = por %p285, %p286
    %p288 = scmp.le.s32.totalorder 1, %s15
    %p289 = scmp.lt.s32.totalorder %s15, 9
    %p290 = pnand %p288, %p289
    %p291 = pneg %p290
    // Predicated region
    $region9: #{edge_feature_rgcn_forward.5} parent=5 // pred_check
      _
    $region10: #{edge_feature_rgcn_forward.5} parent=5 // pred_check_branch
      %293 = sbr.rel (%p290) target = $region12
    $region11: #{edge_feature_rgcn_forward.5} parent=5 // pred_region
      %s294 = ssub.s32 %s15, 1
      // Predicated region
      $region13: #{edge_feature_rgcn_forward.5} parent=11 // pred_check
        %p295 = pneg %p86
      $region14: #{edge_feature_rgcn_forward.5} parent=11 // pred_check_branch
        %297 = sbr.rel (%p295) target = $region16
      $region15: #{edge_feature_rgcn_forward.5} parent=11 // pred_region
        %s298 = smul.u32 16, %s27
        %p299 = scmp.lt.s32.totalorder %s298, 15
        %s300 = scalar_select %p299, %s298, 15
        %s301 = smul.addr %s300, 4
        %s302 = scalar_lea.vmem %s1, %s301
        %s303 = smul.u32 16, %s27
      $region16: #{edge_feature_rgcn_forward.5} parent=11 // pred_fallthru
        _
      // Predicated region
      $region17: #{edge_feature_rgcn_forward.5} parent=11 // pred_check
        %p304 = pneg %p191
      $region18: #{edge_feature_rgcn_forward.5} parent=11 // pred_check_branch
        %306 = sbr.rel (%p304) target = $region20
      $region19: #{edge_feature_rgcn_forward.5} parent=11 // pred_region
        _
      $region20: #{edge_feature_rgcn_forward.5} parent=11 // pred_fallthru
        _
      // Predicated region
      $region21: #{edge_feature_rgcn_forward.5} parent=11 // pred_check
        %p307 = pneg %p212
      $region22: #{edge_feature_rgcn_forward.5} parent=11 // pred_check_branch
        %309 = sbr.rel (%p307) target = $region24
      $region23: #{edge_feature_rgcn_forward.5} parent=11 // pred_region
        _
      $region24: #{edge_feature_rgcn_forward.5} parent=11 // pred_fallthru
        _
      // Predicated region
      $region25: #{edge_feature_rgcn_forward.5} parent=11 // pred_check
        %p310 = pneg %p233
      $region26: #{edge_feature_rgcn_forward.5} parent=11 // pred_check_branch
        %312 = sbr.rel (%p310) target = $region28
      $region27: #{edge_feature_rgcn_forward.5} parent=11 // pred_region
        _
      $region28: #{edge_feature_rgcn_forward.5} parent=11 // pred_fallthru
        _
      // Predicated region
      $region29: #{edge_feature_rgcn_forward.5} parent=11 // pred_check
        %p313 = pneg %p254
      $region30: #{edge_feature_rgcn_forward.5} parent=11 // pred_check_branch
        %315 = sbr.rel (%p313) target = $region32
      $region31: #{edge_feature_rgcn_forward.5} parent=11 // pred_region
        _
      $region32: #{edge_feature_rgcn_forward.5} parent=11 // pred_fallthru
        _
    $region12: #{edge_feature_rgcn_forward.5} parent=5 // pred_fallthru
      _
    %p316 = scmp.lt.s32.totalorder %s15, 8
    // Predicated region
    $region33: #{edge_feature_rgcn_forward.5} parent=5 // pred_check
      %p317 = pneg %p316
    $region34: #{edge_feature_rgcn_forward.5} parent=5 // pred_check_branch
      %319 = sbr.rel (%p317) target = $region36
    $region35: #{edge_feature_rgcn_forward.5} parent=5 // pred_region
      // Predicated region
      $region37: #{edge_feature_rgcn_forward.5} parent=35 // pred_check
        %p320 = pneg %p54
      $region38: #{edge_feature_rgcn_forward.5} parent=35 // pred_check_branch
        %322 = sbr.rel (%p320) target = $region40
      $region39: #{edge_feature_rgcn_forward.5} parent=35 // pred_region
        %s323 = smul.u32 8, %s22
        %p324 = scmp.lt.s32.totalorder %s323, 15
        %s325 = scalar_select %p324, %s323, 15
        %s326 = smul.addr %s325, 4
        %s327 = scalar_lea.vmem %s0, %s326
        %s328 = smul.u32 8, %s22
      $region40: #{edge_feature_rgcn_forward.5} parent=35 // pred_fallthru
        _
      // Predicated region
      $region41: #{edge_feature_rgcn_forward.5} parent=35 // pred_check
        %p329 = pneg %p110
      $region42: #{edge_feature_rgcn_forward.5} parent=35 // pred_check_branch
        %331 = sbr.rel (%p329) target = $region44
      $region43: #{edge_feature_rgcn_forward.5} parent=35 // pred_region
        %s332 = smul.u32 8, %s22
        %p333 = scmp.lt.s32.totalorder %s23, 3
        %s334 = scalar_select %p333, %s23, 3
        %p335 = scmp.lt.s32.totalorder %s332, 15
        %s336 = scalar_select %p335, %s332, 15
        %p337 = scmp.lt.s32.totalorder %s24, 0
        %s338 = scalar_select %p337, %s24, 0
        %s339 = sadd.s32 %s338, %s336
        %s340 = smul.addr %s334, 16
        %s341 = sadd.s32 %s339, %s340
        %s342 = smul.addr %s341, 4
        %s343 = scalar_lea.vmem %s2, %s342
        %s344 = smul.u32 8, %s22
      $region44: #{edge_feature_rgcn_forward.5} parent=35 // pred_fallthru
        _
      // Predicated region
      $region45: #{edge_feature_rgcn_forward.5} parent=35 // pred_check
        %p345 = pneg %p138
      $region46: #{edge_feature_rgcn_forward.5} parent=35 // pred_check_branch
        %347 = sbr.rel (%p345) target = $region48
      $region47: #{edge_feature_rgcn_forward.5} parent=35 // pred_region
        %s348 = smul.u32 8, %s22
        %p349 = scmp.lt.s32.totalorder %s23, 3
        %s350 = scalar_select %p349, %s23, 3
        %p351 = scmp.lt.s32.totalorder %s348, 15
        %s352 = scalar_select %p351, %s348, 15
        %s353 = smul.addr %s350, 16
        %s354 = sadd.s32 %s352, %s353
        %s355 = smul.addr %s354, 8
        %s356 = scalar_lea.vmem %s3, %s355
        %s357 = smul.u32 8, %s22
      $region48: #{edge_feature_rgcn_forward.5} parent=35 // pred_fallthru
        _
      // Predicated region
      $region49: #{edge_feature_rgcn_forward.5} parent=35 // pred_check
        %p358 = pneg %p164
      $region50: #{edge_feature_rgcn_forward.5} parent=35 // pred_check_branch
        %360 = sbr.rel (%p358) target = $region52
      $region51: #{edge_feature_rgcn_forward.5} parent=35 // pred_region
        %p361 = scmp.lt.s32.totalorder %s23, 3
        %s362 = scalar_select %p361, %s23, 3
        %s363 = smul.addr %s362, 16
        %s364 = smul.addr %s363, 4
        %s365 = scalar_lea.vmem %s4, %s364
      $region52: #{edge_feature_rgcn_forward.5} parent=35 // pred_fallthru
        _
    $region36: #{edge_feature_rgcn_forward.5} parent=5 // pred_fallthru
      _
    %p366 = scmp.le.s32.totalorder 1, %s15
    %p367 = scmp.lt.s32.totalorder %s15, 9
    %p368 = pnand %p366, %p367
    %p369 = pneg %p368
    // Predicated region
    $region53: #{edge_feature_rgcn_forward.5} parent=5 // pred_check
      _
    $region54: #{edge_feature_rgcn_forward.5} parent=5 // pred_check_branch
      %371 = sbr.rel (%p368) target = $region56
    $region55: #{edge_feature_rgcn_forward.5} parent=5 // pred_region
      %s372 = ssub.s32 %s15, 1
      %s373 = smul.u32 8, %s25
      %p374 = scmp.lt.s32.totalorder %s373, 15
      %s375 = scalar_select %p374, %s373, 15
      %s376 = smul.addr %s375, 4
      %s377 = scalar_lea.vmem %s0, %s376
      %p378 = pneg %p60
      %p379 = pneg %p57
      %s380 = smul.u32 16, %s27
      %p381 = scmp.lt.s32.totalorder %s380, 15
      %s382 = scalar_select %p381, %s380, 15
      %s383 = smul.addr %s382, 4
      %s384 = scalar_lea.vmem %s1, %s383
      %p385 = pneg %p86
      %p386 = pneg %p83
      %s387 = smul.u32 8, %s25
      %p388 = scmp.lt.s32.totalorder %s26, 3
      %s389 = scalar_select %p388, %s26, 3
      %p390 = scmp.lt.s32.totalorder %s387, 15
      %s391 = scalar_select %p390, %s387, 15
      %p392 = scmp.lt.s32.totalorder %s27, 0
      %s393 = scalar_select %p392, %s27, 0
      %s394 = sadd.s32 %s393, %s391
      %s395 = smul.addr %s389, 16
      %s396 = sadd.s32 %s394, %s395
      %s397 = smul.addr %s396, 4
      %s398 = scalar_lea.vmem %s2, %s397
      %p399 = pneg %p116
      %p400 = pneg %p113
      %s401 = smul.u32 8, %s25
      %p402 = scmp.lt.s32.totalorder %s26, 3
      %s403 = scalar_select %p402, %s26, 3
      %p404 = scmp.lt.s32.totalorder %s401, 15
      %s405 = scalar_select %p404, %s401, 15
      %s406 = smul.addr %s403, 16
      %s407 = sadd.s32 %s405, %s406
      %s408 = smul.addr %s407, 8
      %s409 = scalar_lea.vmem %s3, %s408
      %p410 = pneg %p144
      %p411 = pneg %p141
      %p412 = scmp.lt.s32.totalorder %s26, 3
      %s413 = scalar_select %p412, %s26, 3
      %s414 = smul.addr %s413, 16
      %s415 = smul.addr %s414, 4
      %s416 = scalar_lea.vmem %s4, %s415
      %p417 = pneg %p170
      %p418 = pneg %p167
      %p419 = pneg %p191
      %p420 = pneg %p188
      %p421 = pneg %p212
      %p422 = pneg %p209
      %p423 = pneg %p233
      %p424 = pneg %p230
      %p425 = pneg %p254
      %p426 = pneg %p251
      %p427 = pneg %p280
      %p428 = pneg %p277
      %s429 = smul.u32 8, %s25
      %p430 = scmp.lt.s32.totalorder %s429, 15
      %s431 = scalar_select %p430, %s429, 15
      %s432 = smul.addr %s431, 4
      %s433 = scalar_lea.vmem %s9, %s432
      %s434 = smul.u32 8, %s25
      %p435 = scmp.lt.s32.totalorder %s434, 15
      %s436 = scalar_select %p435, %s434, 15
      %s437 = smul.addr %s436, 4
      %s438 = scalar_lea.vmem %s0, %s437
      %s439 = smul.u32 8, %s25
      %s440 = smul.u32 16, %s27
      %p441 = scmp.lt.s32.totalorder %s440, 15
      %s442 = scalar_select %p441, %s440, 15
      %s443 = smul.addr %s442, 4
      %s444 = scalar_lea.vmem %s1, %s443
      %s445 = smul.u32 16, %s27
      %s446 = smul.u32 8, %s25
      %p447 = scmp.lt.s32.totalorder %s26, 3
      %s448 = scalar_select %p447, %s26, 3
      %p449 = scmp.lt.s32.totalorder %s446, 15
      %s450 = scalar_select %p449, %s446, 15
      %p451 = scmp.lt.s32.totalorder %s27, 0
      %s452 = scalar_select %p451, %s27, 0
      %s453 = sadd.s32 %s452, %s450
      %s454 = smul.addr %s448, 16
      %s455 = sadd.s32 %s453, %s454
      %s456 = smul.addr %s455, 4
      %s457 = scalar_lea.vmem %s2, %s456
      %s458 = smul.u32 8, %s25
      %s459 = smul.u32 8, %s25
      %p460 = scmp.lt.s32.totalorder %s26, 3
      %s461 = scalar_select %p460, %s26, 3
      %p462 = scmp.lt.s32.totalorder %s459, 15
      %s463 = scalar_select %p462, %s459, 15
      %s464 = smul.addr %s461, 16
      %s465 = sadd.s32 %s463, %s464
      %s466 = smul.addr %s465, 8
      %s467 = scalar_lea.vmem %s3, %s466
      %s468 = smul.u32 8, %s25
      %p469 = scmp.lt.s32.totalorder %s26, 3
      %s470 = scalar_select %p469, %s26, 3
      %s471 = smul.addr %s470, 16
      %s472 = smul.addr %s471, 4
      %s473 = scalar_lea.vmem %s4, %s472
      %s474 = smul.u32 8, %s25
      %p475 = scmp.lt.s32.totalorder %s474, 15
      %s476 = scalar_select %p475, %s474, 15
      %s477 = smul.addr %s476, 4
      %s478 = scalar_lea.vmem %s9, %s477
      %s479 = smul.u32 8, %s25
      %p480 = scmp.eq.s32.totalorder %s26, 0
      %p481 = scmp.eq.s32.totalorder %s27, 0
      %p482 = pnand %p480, %p481
      %p483 = pneg %p482
      // Predicated region
      $region57: #{edge_feature_rgcn_forward.5} parent=55 // pred_check
        _
      $region58: #{edge_feature_rgcn_forward.5} parent=55 // pred_check_branch
        %485 = sbr.rel (%p482) target = $region60
      $region59: #{edge_feature_rgcn_forward.5} parent=55 // pred_region
        %v486 = vld [vmem:[%s438] sm:$0xf]
        %v487 = vld [vmem:[%s438 + $0x4] sm:$0xf]
        %v488 = vld [vmem:[%s438 + $0x8] sm:$0xf]
        %v489 = vld [vmem:[%s438 + $0xc] sm:$0xf]
        %v490 = vld [vmem:[%s438 + $0x10] sm:$0xf]
        %v491 = vld [vmem:[%s438 + $0x14] sm:$0xf]
        %v492 = vld [vmem:[%s438 + $0x18] sm:$0xf]
        %v493 = vld [vmem:[%s438 + $0x1c] sm:$0xf]
        %v494 = vld [vmem:[%s5] sm:$0xf]
        %v495 = vld [vmem:[%s5 + $0x4] sm:$0xf]
        %v496 = vld [vmem:[%s5 + $0x8] sm:$0xf]
        %v497 = vld [vmem:[%s5 + $0xc] sm:$0xf]
        %v498 = vld [vmem:[%s5 + $0x10] sm:$0xf]
        %v499 = vld [vmem:[%s5 + $0x14] sm:$0xf]
        %v500 = vld [vmem:[%s5 + $0x18] sm:$0xf]
        %v501 = vld [vmem:[%s5 + $0x1c] sm:$0xf]
        %v502 = vld [vmem:[%s5 + $0x20] sm:$0xf]
        %v503 = vld [vmem:[%s5 + $0x24] sm:$0xf]
        %v504 = vld [vmem:[%s5 + $0x28] sm:$0xf]
        %v505 = vld [vmem:[%s5 + $0x2c] sm:$0xf]
        %v506 = vld [vmem:[%s5 + $0x30] sm:$0xf]
        %v507 = vld [vmem:[%s5 + $0x34] sm:$0xf]
        %v508 = vld [vmem:[%s5 + $0x38] sm:$0xf]
        %v509 = vld [vmem:[%s5 + $0x3c] sm:$0xf]
        %v510 = vld [vmem:[%s6] sm:$0x1]
        %v512 = vperm.slane %v510, 0
        %v522 = vunpack.c.l.b16 %v486
        %v523 = vunpack.c.l.b16 %v487
        %v524 = vunpack.c.l.b16 %v488
        %v525 = vunpack.c.l.b16 %v489
        %v526 = vunpack.c.l.b16 %v490
        %v527 = vunpack.c.l.b16 %v491
        %v528 = vunpack.c.l.b16 %v492
        %v529 = vunpack.c.l.b16 %v493
        %v530 = vpack.c.b16 %v523, %v522
        %v531 = vpack.c.b16 %v525, %v524
        %v532 = vpack.c.b16 %v527, %v526
        %v533 = vpack.c.b16 %v529, %v528
        %v554 = vunpack.c.l.b16 %v494
        %v555 = vunpack.c.l.b16 %v495
        %v556 = vunpack.c.l.b16 %v496
        %v557 = vunpack.c.l.b16 %v497
        %v558 = vunpack.c.l.b16 %v498
        %v559 = vunpack.c.l.b16 %v499
        %v560 = vunpack.c.l.b16 %v500
        %v561 = vunpack.c.l.b16 %v501
        %v562 = vunpack.c.l.b16 %v502
        %v563 = vunpack.c.l.b16 %v503
        %v564 = vunpack.c.l.b16 %v504
        %v565 = vunpack.c.l.b16 %v505
        %v566 = vunpack.c.l.b16 %v506
        %v567 = vunpack.c.l.b16 %v507
        %v568 = vunpack.c.l.b16 %v508
        %v569 = vunpack.c.l.b16 %v509
        %v570 = vpack.c.b16 %v555, %v554
        %v571 = vpack.c.b16 %v557, %v556
        %v572 = vpack.c.b16 %v559, %v558
        %v573 = vpack.c.b16 %v561, %v560
        %v574 = vpack.c.b16 %v563, %v562
        %v575 = vpack.c.b16 %v565, %v564
        %v576 = vpack.c.b16 %v567, %v566
        %v577 = vpack.c.b16 %v569, %v568
        %586 = vmatpush.bf16.msra.mxu0 %v577
        %587 = vmatpush.bf16.msra.mxu0 %v576
        %588 = vmatpush.bf16.msra.mxu0 %v575
        %589 = vmatpush.bf16.msra.mxu0 %v574
        %590 = vmatpush.bf16.msra.mxu0 %v573
        %591 = vmatpush.bf16.msra.mxu0 %v572
        %592 = vmatpush.bf16.msra.mxu0 %v571
        %593 = vmatpush.bf16.msra.mxu0 %v570
        %594 = vmatmul.bf16.gmra.mxu0 %v530
        %v595 = vpop.f32.mrf.mxu0
        %v596 = vadd.f32 %v512, %v595
        %v597 = vpop.f32.mrf.mxu0
        %v598 = vadd.f32 %v512, %v597
        %599 = vmatmul.bf16.gmra.mxu0 %v531
        %v600 = vpop.f32.mrf.mxu0
        %v601 = vadd.f32 %v512, %v600
        %v602 = vpop.f32.mrf.mxu0
        %v603 = vadd.f32 %v512, %v602
        %604 = vmatmul.bf16.gmra.mxu0 %v532
        %v605 = vpop.f32.mrf.mxu0
        %v606 = vadd.f32 %v512, %v605
        %v607 = vpop.f32.mrf.mxu0
        %v608 = vadd.f32 %v512, %v607
        %609 = vmatmul.bf16.gmra.mxu0 %v533
        %v610 = vpop.f32.mrf.mxu0
        %v611 = vadd.f32 %v512, %v610
        %v612 = vpop.f32.mrf.mxu0
        %v613 = vadd.f32 %v512, %v612
        %614 = vdwg.mxu0
        %615 = vst [vmem:[#allocation2] sm:$0xff] %v596
        %616 = vst [vmem:[#allocation2 + $0x8] sm:$0xff] %v598
        %617 = vst [vmem:[#allocation2 + $0x10] sm:$0xff] %v601
        %618 = vst [vmem:[#allocation2 + $0x18] sm:$0xff] %v603
        %619 = vst [vmem:[#allocation2 + $0x20] sm:$0xff] %v606
        %620 = vst [vmem:[#allocation2 + $0x28] sm:$0xff] %v608
        %621 = vst [vmem:[#allocation2 + $0x30] sm:$0xff] %v611
        %622 = vst [vmem:[#allocation2 + $0x38] sm:$0xff] %v613
      $region60: #{edge_feature_rgcn_forward.5} parent=55 // pred_fallthru
        _
      %v623 = vld [vmem:[%s457] sm:$0xf]
      %v624 = vld [vmem:[%s457 + $0x4] sm:$0xf]
      %v625 = vld [vmem:[%s457 + $0x8] sm:$0xf]
      %v626 = vld [vmem:[%s457 + $0xc] sm:$0xf]
      %v627 = vld [vmem:[%s457 + $0x10] sm:$0xf]
      %v628 = vld [vmem:[%s457 + $0x14] sm:$0xf]
      %v629 = vld [vmem:[%s457 + $0x18] sm:$0xf]
      %v630 = vld [vmem:[%s457 + $0x1c] sm:$0xf]
      %v631 = vld [vmem:[%s444] sm:$0xf]
      %v632 = vld [vmem:[%s444 + $0x4] sm:$0xf]
      %v633 = vld [vmem:[%s444 + $0x8] sm:$0xf]
      %v634 = vld [vmem:[%s444 + $0xc] sm:$0xf]
      %v635 = vld [vmem:[%s444 + $0x10] sm:$0xf]
      %v636 = vld [vmem:[%s444 + $0x14] sm:$0xf]
      %v637 = vld [vmem:[%s444 + $0x18] sm:$0xf]
      %v638 = vld [vmem:[%s444 + $0x1c] sm:$0xf]
      %v639 = vld [vmem:[%s444 + $0x20] sm:$0xf]
      %v640 = vld [vmem:[%s444 + $0x24] sm:$0xf]
      %v641 = vld [vmem:[%s444 + $0x28] sm:$0xf]
      %v642 = vld [vmem:[%s444 + $0x2c] sm:$0xf]
      %v643 = vld [vmem:[%s444 + $0x30] sm:$0xf]
      %v644 = vld [vmem:[%s444 + $0x34] sm:$0xf]
      %v645 = vld [vmem:[%s444 + $0x38] sm:$0xf]
      %v646 = vld [vmem:[%s444 + $0x3c] sm:$0xf]
      %v655 = vunpack.c.l.b16 %v623
      %v656 = vunpack.c.l.b16 %v624
      %v657 = vunpack.c.l.b16 %v625
      %v658 = vunpack.c.l.b16 %v626
      %v659 = vunpack.c.l.b16 %v627
      %v660 = vunpack.c.l.b16 %v628
      %v661 = vunpack.c.l.b16 %v629
      %v662 = vunpack.c.l.b16 %v630
      %v663 = vpack.c.b16 %v656, %v655
      %v664 = vpack.c.b16 %v658, %v657
      %v665 = vpack.c.b16 %v660, %v659
      %v666 = vpack.c.b16 %v662, %v661
      %v687 = vunpack.c.l.b16 %v631
      %v688 = vunpack.c.l.b16 %v632
      %v689 = vunpack.c.l.b16 %v633
      %v690 = vunpack.c.l.b16 %v634
      %v691 = vunpack.c.l.b16 %v635
      %v692 = vunpack.c.l.b16 %v636
      %v693 = vunpack.c.l.b16 %v637
      %v694 = vunpack.c.l.b16 %v638
      %v695 = vunpack.c.l.b16 %v639
      %v696 = vunpack.c.l.b16 %v640
      %v697 = vunpack.c.l.b16 %v641
      %v698 = vunpack.c.l.b16 %v642
      %v699 = vunpack.c.l.b16 %v643
      %v700 = vunpack.c.l.b16 %v644
      %v701 = vunpack.c.l.b16 %v645
      %v702 = vunpack.c.l.b16 %v646
      %v703 = vpack.c.b16 %v688, %v687
      %v704 = vpack.c.b16 %v690, %v689
      %v705 = vpack.c.b16 %v692, %v691
      %v706 = vpack.c.b16 %v694, %v693
      %v707 = vpack.c.b16 %v696, %v695
      %v708 = vpack.c.b16 %v698, %v697
      %v709 = vpack.c.b16 %v700, %v699
      %v710 = vpack.c.b16 %v702, %v701
      %719 = vmatpush.bf16.msra.mxu0 %v710
      %720 = vmatpush.bf16.msra.mxu0 %v709
      %721 = vmatpush.bf16.msra.mxu0 %v708
      %722 = vmatpush.bf16.msra.mxu0 %v707
      %723 = vmatpush.bf16.msra.mxu0 %v706
      %724 = vmatpush.bf16.msra.mxu0 %v705
      %725 = vmatpush.bf16.msra.mxu0 %v704
      %726 = vmatpush.bf16.msra.mxu0 %v703
      %727 = vmatmul.bf16.gmra.mxu0 %v663
      %v728 = vpop.f32.mrf.mxu0
      %v729 = vadd.f32 0.0, %v728
      %v730 = vpop.f32.mrf.mxu0
      %v731 = vadd.f32 0.0, %v730
      %732 = vmatmul.bf16.gmra.mxu0 %v664
      %v733 = vpop.f32.mrf.mxu0
      %v734 = vadd.f32 0.0, %v733
      %v735 = vpop.f32.mrf.mxu0
      %v736 = vadd.f32 0.0, %v735
      %737 = vmatmul.bf16.gmra.mxu0 %v665
      %v738 = vpop.f32.mrf.mxu0
      %v739 = vadd.f32 0.0, %v738
      %v740 = vpop.f32.mrf.mxu0
      %v741 = vadd.f32 0.0, %v740
      %742 = vmatmul.bf16.gmra.mxu0 %v666
      %v743 = vpop.f32.mrf.mxu0
      %v744 = vadd.f32 0.0, %v743
      %v745 = vpop.f32.mrf.mxu0
      %v746 = vadd.f32 0.0, %v745
      %747 = vdwg.mxu0
      // Predicated region
      $region61: #{edge_feature_rgcn_forward.5} parent=55 // pred_check
        %p748 = pneg %p481
      $region62: #{edge_feature_rgcn_forward.5} parent=55 // pred_check_branch
        %750 = sbr.rel (%p748) target = $region64
      $region63: #{edge_feature_rgcn_forward.5} parent=55 // pred_region
        %751 = vst [vmem:[#allocation3] sm:$0xff] %v729
        %752 = vst [vmem:[#allocation3 + $0x8] sm:$0xff] %v731
        %753 = vst [vmem:[#allocation3 + $0x10] sm:$0xff] %v734
        %754 = vst [vmem:[#allocation3 + $0x18] sm:$0xff] %v736
        %755 = vst [vmem:[#allocation3 + $0x20] sm:$0xff] %v739
        %756 = vst [vmem:[#allocation3 + $0x28] sm:$0xff] %v741
        %757 = vst [vmem:[#allocation3 + $0x30] sm:$0xff] %v744
        %758 = vst [vmem:[#allocation3 + $0x38] sm:$0xff] %v746
      $region64: #{edge_feature_rgcn_forward.5} parent=55 // pred_fallthru
        _
      %p759 = scmp.gt.s32.totalorder %s27, 0
      // Predicated region
      $region65: #{edge_feature_rgcn_forward.5} parent=55 // pred_check
        %p760 = pneg %p759
      $region66: #{edge_feature_rgcn_forward.5} parent=55 // pred_check_branch
        %762 = sbr.rel (%p760) target = $region68
      $region67: #{edge_feature_rgcn_forward.5} parent=55 // pred_region
        %v763 = vld [vmem:[#allocation3] sm:$0xff]
        %v764 = vld [vmem:[#allocation3 + $0x8] sm:$0xff]
        %v765 = vld [vmem:[#allocation3 + $0x10] sm:$0xff]
        %v766 = vld [vmem:[#allocation3 + $0x18] sm:$0xff]
        %v767 = vld [vmem:[#allocation3 + $0x20] sm:$0xff]
        %v768 = vld [vmem:[#allocation3 + $0x28] sm:$0xff]
        %v769 = vld [vmem:[#allocation3 + $0x30] sm:$0xff]
        %v770 = vld [vmem:[#allocation3 + $0x38] sm:$0xff]
        %v771 = vadd.f32 %v763, %v729
        %v772 = vadd.f32 %v764, %v731
        %v773 = vadd.f32 %v765, %v734
        %v774 = vadd.f32 %v766, %v736
        %v775 = vadd.f32 %v767, %v739
        %v776 = vadd.f32 %v768, %v741
        %v777 = vadd.f32 %v769, %v744
        %v778 = vadd.f32 %v770, %v746
        %779 = vst [vmem:[#allocation3] sm:$0xff] %v771
        %780 = vst [vmem:[#allocation3 + $0x8] sm:$0xff] %v772
        %781 = vst [vmem:[#allocation3 + $0x10] sm:$0xff] %v773
        %782 = vst [vmem:[#allocation3 + $0x18] sm:$0xff] %v774
        %783 = vst [vmem:[#allocation3 + $0x20] sm:$0xff] %v775
        %784 = vst [vmem:[#allocation3 + $0x28] sm:$0xff] %v776
        %785 = vst [vmem:[#allocation3 + $0x30] sm:$0xff] %v777
        %786 = vst [vmem:[#allocation3 + $0x38] sm:$0xff] %v778
      $region68: #{edge_feature_rgcn_forward.5} parent=55 // pred_fallthru
        _
      // Predicated region
      $region69: #{edge_feature_rgcn_forward.5} parent=55 // pred_check
        %p787 = pneg %p481
      $region70: #{edge_feature_rgcn_forward.5} parent=55 // pred_check_branch
        %789 = sbr.rel (%p787) target = $region72
      $region71: #{edge_feature_rgcn_forward.5} parent=55 // pred_region
        %v790 = vld [vmem:[#allocation3] sm:$0xff]
        %v791 = vld [vmem:[#allocation3 + $0x8] sm:$0xff]
        %v792 = vld [vmem:[#allocation3 + $0x10] sm:$0xff]
        %v793 = vld [vmem:[#allocation3 + $0x18] sm:$0xff]
        %v794 = vld [vmem:[#allocation3 + $0x20] sm:$0xff]
        %v795 = vld [vmem:[#allocation3 + $0x28] sm:$0xff]
        %v796 = vld [vmem:[#allocation3 + $0x30] sm:$0xff]
        %v797 = vld [vmem:[#allocation3 + $0x38] sm:$0xff]
        %v798 = vld [vmem:[%s467] sm:$0xff]
        %v799 = vld [vmem:[%s467 + $0x8] sm:$0xff]
        %v800 = vld [vmem:[%s467 + $0x10] sm:$0xff]
        %v801 = vld [vmem:[%s467 + $0x18] sm:$0xff]
        %v802 = vld [vmem:[%s467 + $0x20] sm:$0xff]
        %v803 = vld [vmem:[%s467 + $0x28] sm:$0xff]
        %v804 = vld [vmem:[%s467 + $0x30] sm:$0xff]
        %v805 = vld [vmem:[%s467 + $0x38] sm:$0xff]
        %807 = vset.pattern.permute.xlu0 0
        %808 = vperm.xlu0 %807, %v798
        %v809 = vpop.permute.xlu0 %808
        %812 = vset.pattern.permute.xlu0 0
        %813 = vperm.xlu0 %812, %v799
        %v814 = vpop.permute.xlu0 %813
        %817 = vset.pattern.permute.xlu0 0
        %818 = vperm.xlu0 %817, %v800
        %v819 = vpop.permute.xlu0 %818
        %822 = vset.pattern.permute.xlu0 0
        %823 = vperm.xlu0 %822, %v801
        %v824 = vpop.permute.xlu0 %823
        %827 = vset.pattern.permute.xlu0 0
        %828 = vperm.xlu0 %827, %v802
        %v829 = vpop.permute.xlu0 %828
        %832 = vset.pattern.permute.xlu0 0
        %833 = vperm.xlu0 %832, %v803
        %v834 = vpop.permute.xlu0 %833
        %837 = vset.pattern.permute.xlu0 0
        %838 = vperm.xlu0 %837, %v804
        %v839 = vpop.permute.xlu0 %838
        %842 = vset.pattern.permute.xlu0 0
        %843 = vperm.xlu0 %842, %v805
        %v844 = vpop.permute.xlu0 %843
        %v846 = vmul.f32 %v790, %v809
        %v847 = vmul.f32 %v791, %v814
        %v848 = vmul.f32 %v792, %v819
        %v849 = vmul.f32 %v793, %v824
        %v850 = vmul.f32 %v794, %v829
        %v851 = vmul.f32 %v795, %v834
        %v852 = vmul.f32 %v796, %v839
        %v853 = vmul.f32 %v797, %v844
        %v854 = vpack.c.bf16 %v847, %v846
        %v855 = vpack.c.bf16 %v849, %v848
        %v856 = vpack.c.bf16 %v851, %v850
        %v857 = vpack.c.bf16 %v853, %v852
        %v858 = vld [vmem:[#allocation2] sm:$0xff]
        %v859 = vld [vmem:[#allocation2 + $0x8] sm:$0xff]
        %v860 = vld [vmem:[#allocation2 + $0x10] sm:$0xff]
        %v861 = vld [vmem:[#allocation2 + $0x18] sm:$0xff]
        %v862 = vld [vmem:[#allocation2 + $0x20] sm:$0xff]
        %v863 = vld [vmem:[#allocation2 + $0x28] sm:$0xff]
        %v864 = vld [vmem:[#allocation2 + $0x30] sm:$0xff]
        %v865 = vld [vmem:[#allocation2 + $0x38] sm:$0xff]
        %v866 = vld [vmem:[%s473] sm:$0xf]
        %v867 = vld [vmem:[%s473 + $0x4] sm:$0xf]
        %v868 = vld [vmem:[%s473 + $0x8] sm:$0xf]
        %v869 = vld [vmem:[%s473 + $0xc] sm:$0xf]
        %v870 = vld [vmem:[%s473 + $0x10] sm:$0xf]
        %v871 = vld [vmem:[%s473 + $0x14] sm:$0xf]
        %v872 = vld [vmem:[%s473 + $0x18] sm:$0xf]
        %v873 = vld [vmem:[%s473 + $0x1c] sm:$0xf]
        %v874 = vld [vmem:[%s473 + $0x20] sm:$0xf]
        %v875 = vld [vmem:[%s473 + $0x24] sm:$0xf]
        %v876 = vld [vmem:[%s473 + $0x28] sm:$0xf]
        %v877 = vld [vmem:[%s473 + $0x2c] sm:$0xf]
        %v878 = vld [vmem:[%s473 + $0x30] sm:$0xf]
        %v879 = vld [vmem:[%s473 + $0x34] sm:$0xf]
        %v880 = vld [vmem:[%s473 + $0x38] sm:$0xf]
        %v881 = vld [vmem:[%s473 + $0x3c] sm:$0xf]
        %v898 = vunpack.c.l.b16 %v866
        %v899 = vunpack.c.l.b16 %v867
        %v900 = vunpack.c.l.b16 %v868
        %v901 = vunpack.c.l.b16 %v869
        %v902 = vunpack.c.l.b16 %v870
        %v903 = vunpack.c.l.b16 %v871
        %v904 = vunpack.c.l.b16 %v872
        %v905 = vunpack.c.l.b16 %v873
        %v906 = vunpack.c.l.b16 %v874
        %v907 = vunpack.c.l.b16 %v875
        %v908 = vunpack.c.l.b16 %v876
        %v909 = vunpack.c.l.b16 %v877
        %v910 = vunpack.c.l.b16 %v878
        %v911 = vunpack.c.l.b16 %v879
        %v912 = vunpack.c.l.b16 %v880
        %v913 = vunpack.c.l.b16 %v881
        %v914 = vpack.c.b16 %v899, %v898
        %v915 = vpack.c.b16 %v901, %v900
        %v916 = vpack.c.b16 %v903, %v902
        %v917 = vpack.c.b16 %v905, %v904
        %v918 = vpack.c.b16 %v907, %v906
        %v919 = vpack.c.b16 %v909, %v908
        %v920 = vpack.c.b16 %v911, %v910
        %v921 = vpack.c.b16 %v913, %v912
        %930 = vmatpush.bf16.msra.mxu0 %v921
        %931 = vmatpush.bf16.msra.mxu0 %v920
        %932 = vmatpush.bf16.msra.mxu0 %v919
        %933 = vmatpush.bf16.msra.mxu0 %v918
        %934 = vmatpush.bf16.msra.mxu0 %v917
        %935 = vmatpush.bf16.msra.mxu0 %v916
        %936 = vmatpush.bf16.msra.mxu0 %v915
        %937 = vmatpush.bf16.msra.mxu0 %v914
        %938 = vmatmul.bf16.gmra.mxu0 %v854
        %v939 = vpop.f32.mrf.mxu0
        %v940 = vadd.f32 0.0, %v939
        %v941 = vpop.f32.mrf.mxu0
        %v942 = vadd.f32 0.0, %v941
        %943 = vmatmul.bf16.gmra.mxu0 %v855
        %v944 = vpop.f32.mrf.mxu0
        %v945 = vadd.f32 0.0, %v944
        %v946 = vpop.f32.mrf.mxu0
        %v947 = vadd.f32 0.0, %v946
        %948 = vmatmul.bf16.gmra.mxu0 %v856
        %v949 = vpop.f32.mrf.mxu0
        %v950 = vadd.f32 0.0, %v949
        %v951 = vpop.f32.mrf.mxu0
        %v952 = vadd.f32 0.0, %v951
        %953 = vmatmul.bf16.gmra.mxu0 %v857
        %v954 = vpop.f32.mrf.mxu0
        %v955 = vadd.f32 0.0, %v954
        %v956 = vpop.f32.mrf.mxu0
        %v957 = vadd.f32 0.0, %v956
        %958 = vdwg.mxu0
        %v959 = vadd.f32 %v858, %v940
        %v960 = vadd.f32 %v859, %v942
        %v961 = vadd.f32 %v860, %v945
        %v962 = vadd.f32 %v861, %v947
        %v963 = vadd.f32 %v862, %v950
        %v964 = vadd.f32 %v863, %v952
        %v965 = vadd.f32 %v864, %v955
        %v966 = vadd.f32 %v865, %v957
        %967 = vst [vmem:[#allocation2] sm:$0xff] %v959
        %968 = vst [vmem:[#allocation2 + $0x8] sm:$0xff] %v960
        %969 = vst [vmem:[#allocation2 + $0x10] sm:$0xff] %v961
        %970 = vst [vmem:[#allocation2 + $0x18] sm:$0xff] %v962
        %971 = vst [vmem:[#allocation2 + $0x20] sm:$0xff] %v963
        %972 = vst [vmem:[#allocation2 + $0x28] sm:$0xff] %v964
        %973 = vst [vmem:[#allocation2 + $0x30] sm:$0xff] %v965
        %974 = vst [vmem:[#allocation2 + $0x38] sm:$0xff] %v966
      $region72: #{edge_feature_rgcn_forward.5} parent=55 // pred_fallthru
        _
      %p975 = scmp.eq.s32.totalorder %s26, 3
      %p976 = pnand %p975, %p481
      %p977 = pneg %p976
      // Predicated region
      $region73: #{edge_feature_rgcn_forward.5} parent=55 // pred_check
        _
      $region74: #{edge_feature_rgcn_forward.5} parent=55 // pred_check_branch
        %979 = sbr.rel (%p976) target = $region76
      $region75: #{edge_feature_rgcn_forward.5} parent=55 // pred_region
        %v980 = vld [vmem:[#allocation2] sm:$0xff]
        %v981 = vld [vmem:[#allocation2 + $0x8] sm:$0xff]
        %v982 = vld [vmem:[#allocation2 + $0x10] sm:$0xff]
        %v983 = vld [vmem:[#allocation2 + $0x18] sm:$0xff]
        %v984 = vld [vmem:[#allocation2 + $0x20] sm:$0xff]
        %v985 = vld [vmem:[#allocation2 + $0x28] sm:$0xff]
        %v986 = vld [vmem:[#allocation2 + $0x30] sm:$0xff]
        %v987 = vld [vmem:[#allocation2 + $0x38] sm:$0xff]
        %v988 = vld [vmem:[%s7] sm:$0x1]
        %v990 = vperm.slane %v988, 0
        %v992 = vmul.f32 %v980, %v990
        %v993 = vmul.f32 %v981, %v990
        %v994 = vmul.f32 %v982, %v990
        %v995 = vmul.f32 %v983, %v990
        %v996 = vmul.f32 %v984, %v990
        %v997 = vmul.f32 %v985, %v990
        %v998 = vmul.f32 %v986, %v990
        %v999 = vmul.f32 %v987, %v990
        %v1000 = vld [vmem:[%s8] sm:$0x1]
        %v1002 = vperm.slane %v1000, 0
        %v1004 = vadd.f32 %v992, %v1002
        %v1005 = vadd.f32 %v993, %v1002
        %v1006 = vadd.f32 %v994, %v1002
        %v1007 = vadd.f32 %v995, %v1002
        %v1008 = vadd.f32 %v996, %v1002
        %v1009 = vadd.f32 %v997, %v1002
        %v1010 = vadd.f32 %v998, %v1002
        %v1011 = vadd.f32 %v999, %v1002
        %vm1012 = vcmp.ge.f32.partialorder %v1004, 0.0
        %vm1013 = vcmp.ge.f32.partialorder %v1005, 0.0
        %vm1014 = vcmp.ge.f32.partialorder %v1006, 0.0
        %vm1015 = vcmp.ge.f32.partialorder %v1007, 0.0
        %vm1016 = vcmp.ge.f32.partialorder %v1008, 0.0
        %vm1017 = vcmp.ge.f32.partialorder %v1009, 0.0
        %vm1018 = vcmp.ge.f32.partialorder %v1010, 0.0
        %vm1019 = vcmp.ge.f32.partialorder %v1011, 0.0
        %v1020 = vmul.f32 %v1004, 0.1
        %v1021 = vmul.f32 %v1005, 0.1
        %v1022 = vmul.f32 %v1006, 0.1
        %v1023 = vmul.f32 %v1007, 0.1
        %v1024 = vmul.f32 %v1008, 0.1
        %v1025 = vmul.f32 %v1009, 0.1
        %v1026 = vmul.f32 %v1010, 0.1
        %v1027 = vmul.f32 %v1011, 0.1
        %v1028 = vsel %vm1012, %v1004, %v1020
        %v1029 = vsel %vm1013, %v1005, %v1021
        %v1030 = vsel %vm1014, %v1006, %v1022
        %v1031 = vsel %vm1015, %v1007, %v1023
        %v1032 = vsel %vm1016, %v1008, %v1024
        %v1033 = vsel %vm1017, %v1009, %v1025
        %v1034 = vsel %vm1018, %v1010, %v1026
        %v1035 = vsel %vm1019, %v1011, %v1027
        %v1036 = vpack.c.bf16 %v1028, %v1028
        %v1037 = vpack.c.bf16 %v1029, %v1029
        %v1038 = vpack.c.bf16 %v1030, %v1030
        %v1039 = vpack.c.bf16 %v1031, %v1031
        %v1040 = vpack.c.bf16 %v1032, %v1032
        %v1041 = vpack.c.bf16 %v1033, %v1033
        %v1042 = vpack.c.bf16 %v1034, %v1034
        %v1043 = vpack.c.bf16 %v1035, %v1035
        %1044 = vst [vmem:[%s478] sm:$0xf] %v1036
        %1045 = vst [vmem:[%s478 + $0x4] sm:$0xf] %v1037
        %1046 = vst [vmem:[%s478 + $0x8] sm:$0xf] %v1038
        %1047 = vst [vmem:[%s478 + $0xc] sm:$0xf] %v1039
        %1048 = vst [vmem:[%s478 + $0x10] sm:$0xf] %v1040
        %1049 = vst [vmem:[%s478 + $0x14] sm:$0xf] %v1041
        %1050 = vst [vmem:[%s478 + $0x18] sm:$0xf] %v1042
        %1051 = vst [vmem:[%s478 + $0x1c] sm:$0xf] %v1043
      $region76: #{edge_feature_rgcn_forward.5} parent=55 // pred_fallthru
        _
      %s1052 = smul.u32 8, %s25
      %p1053 = scmp.lt.s32.totalorder %s1052, 15
      %s1054 = scalar_select %p1053, %s1052, 15
      %s1055 = smul.addr %s1054, 4
      %s1056 = scalar_lea.vmem %s9, %s1055
      // Predicated region
      $region77: #{edge_feature_rgcn_forward.5} parent=55 // pred_check
        %p1057 = pneg %p277
      $region78: #{edge_feature_rgcn_forward.5} parent=55 // pred_check_branch
        %1059 = sbr.rel (%p1057) target = $region80
      $region79: #{edge_feature_rgcn_forward.5} parent=55 // pred_region
        %s1060 = smul.u32 8, %s25
      $region80: #{edge_feature_rgcn_forward.5} parent=55 // pred_fallthru
        _
    $region56: #{edge_feature_rgcn_forward.5} parent=5 // pred_fallthru
      _
    %p1061 = scmp.le.s32.totalorder 2, %s15
    // Predicated region
    $region81: #{edge_feature_rgcn_forward.5} parent=5 // pred_check
      %p1062 = pneg %p1061
    $region82: #{edge_feature_rgcn_forward.5} parent=5 // pred_check_branch
      %1064 = sbr.rel (%p1062) target = $region84
    $region83: #{edge_feature_rgcn_forward.5} parent=5 // pred_region
      %s1065 = ssub.s32 %s15, 2
      // Predicated region
      $region85: #{edge_feature_rgcn_forward.5} parent=83 // pred_check
        %p1066 = pneg %p283
      $region86: #{edge_feature_rgcn_forward.5} parent=83 // pred_check_branch
        %1068 = sbr.rel (%p1066) target = $region88
      $region87: #{edge_feature_rgcn_forward.5} parent=83 // pred_region
        %s1069 = smul.u32 8, %s28
        %p1070 = scmp.lt.s32.totalorder %s1069, 15
        %s1071 = scalar_select %p1070, %s1069, 15
        %s1072 = smul.addr %s1071, 4
        %s1073 = scalar_lea.vmem %s9, %s1072
      $region88: #{edge_feature_rgcn_forward.5} parent=83 // pred_fallthru
        _
    $region84: #{edge_feature_rgcn_forward.5} parent=5 // pred_fallthru
      _
  $region6: #{edge_feature_rgcn_forward.5} parent=0 // loop_footer
    %s19 = sadd.s32 1, %s15
  $region7: #{edge_feature_rgcn_forward.5} parent=0 // loop_footer_branch
    %14 = sbr.rel target = $region3
  $region8: #{edge_feature_rgcn_forward.5} parent=0 // loop_exit
    _

// kernel: edge_feature_rgcn_forward.7
$region0: #{edge_feature_rgcn_forward.7}
  #allocation0 [shape = 'u32[]', space=smem, size = 0x4, offset = 0x4, fixed_abs, tag = 'smem constant byte address 0x4 - core index']
  #allocation1 [shape = 'u32[72,128]{1,0:T(1,128)}', space=vmem, size = 0x9000, scoped, tag = 'internal scratch']
  #allocation2 [shape = 'f32[64,128]{1,0:T(8,128)}', space=vmem, size = 0x8000, scoped, tag = 'scratch operand']
  #allocation3 [shape = 'f32[64,128]{1,0:T(8,128)}', space=vmem, size = 0x8000, scoped, tag = 'scratch operand']
  %s0 = inlined_call_operand.vmem [shape: bf16[128,128], index: 0, kind: input, shape index: {}, may-alias: {0,1}]
  %s1 = inlined_call_operand.vmem [shape: bf16[128,128], index: 1, kind: input, shape index: {}, may-alias: {0,1}]
  %s2 = inlined_call_operand.vmem [shape: bf16[4,128,128], index: 2, kind: input, shape index: {}]
  %s3 = inlined_call_operand.vmem [shape: f32[4,128,1], index: 3, kind: input, shape index: {}]
  %s4 = inlined_call_operand.vmem [shape: bf16[4,128,128], index: 4, kind: input, shape index: {}]
  %s5 = inlined_call_operand.vmem [shape: bf16[128,128], index: 5, kind: input, shape index: {}]
  %s6 = inlined_call_operand.vmem [shape: f32[1,128], index: 6, kind: input, shape index: {}]
  %s7 = inlined_call_operand.vmem [shape: f32[128,128], index: 7, kind: output, shape index: {}]
  %s8 = sld [smem:[#allocation0]]
  $region81: #{edge_feature_rgcn_forward.7} parent=0
    _
  %s10 = ssub.s32 1, %s8
  %s11 = scalar_select 0, %s10, %s8
  loop: start=0, step=1, limit=10
  $region2: #{edge_feature_rgcn_forward.7} parent=0 // loop_pre_header
    _
  $region3: #{edge_feature_rgcn_forward.7} parent=0 // loop_header
    %s13 = sphi 0, %s17
    %p14 = scmp.ge.s32.totalorder %s13, 10
    %s20 = sphi 0, %s39
    %s21 = sphi 0, %s35
    %s22 = sphi 0, %s31
    %s23 = sphi 0, %s20
    %s24 = sphi 0, %s21
    %s25 = sphi 0, %s22
    %s26 = sphi 0, %s23
    %s27 = sphi 0, %s24
    %s28 = sphi 0, %s25
    %s42 = sphi 0, %s44
    %s45 = sphi 0, %s42
    %s46 = sphi 0, %s45
    %s62 = sphi 0, %s46
    %s68 = sphi 0, %s70
    %s71 = sphi 0, %s68
    %s72 = sphi 0, %s71
    %s88 = sphi 0, %s72
    %s98 = sphi 0, %s100
    %s101 = sphi 0, %s98
    %s102 = sphi 0, %s101
    %s118 = sphi 0, %s102
    %s126 = sphi 0, %s128
    %s129 = sphi 0, %s126
    %s130 = sphi 0, %s129
    %s146 = sphi 0, %s130
    %s152 = sphi 0, %s154
    %s155 = sphi 0, %s152
    %s156 = sphi 0, %s155
    %s172 = sphi 0, %s156
    %s176 = sphi 0, %s176
    %s178 = sphi 0, %s176
    %s179 = sphi 0, %s178
    %s193 = sphi 0, %s179
    %s197 = sphi 0, %s197
    %s199 = sphi 0, %s197
    %s200 = sphi 0, %s199
    %s214 = sphi 0, %s200
    %s220 = sphi 0, %s222
    %s223 = sphi 0, %s220
    %s224 = sphi 0, %s223
    %s240 = sphi 0, %s224
  $region4: #{edge_feature_rgcn_forward.7} parent=0 // loop_header_branch
    %16 = sbr.rel (%p14) target = $region8
  $region5: #{edge_feature_rgcn_forward.7} parent=0 // loop_body
    %s18 = ssub.s32 %s13, 1
    %s19 = ssub.s32 %s13, 2
    %s29 = sadd.s32 1, %s22
    %p30 = scmp.ge.s32.totalorder %s29, 1
    %s31 = scalar_select %p30, 0, %s29
    %s32 = sadd.s32 1, %s21
    %s33 = scalar_select %p30, %s32, %s21
    %p34 = scmp.ge.s32.totalorder %s33, 4
    %s35 = scalar_select %p34, 0, %s33
    %s36 = sadd.s32 1, %s20
    %s37 = scalar_select %p34, %s36, %s20
    %p38 = scmp.ge.s32.totalorder %s37, 2
    %s39 = scalar_select %p38, 0, %s37
    %s40 = ssub.s32 %s20, %s39
    %p41 = scmp.eq.s32.totalorder %s40, 0
    %s43 = sadd.s32 %s42, 1
    %s44 = scalar_select %p41, %s42, %s43
    %p47 = pneg %p41
    %p48 = scmp.eq.s32.totalorder %s13, 7
    %p49 = por %p47, %p48
    %p50 = scmp.ne.s32.totalorder %s42, %s45
    %p51 = scmp.eq.s32.totalorder %s13, 0
    %p52 = por %p50, %p51
    %p53 = scmp.ne.s32.totalorder %s42, %s45
    %p54 = scmp.eq.s32.totalorder %s18, 7
    %p55 = por %p53, %p54
    %p56 = scmp.ne.s32.totalorder %s45, %s46
    %p57 = scmp.eq.s32.totalorder %s18, 0
    %p58 = por %p56, %p57
    %p59 = scmp.ne.s32.totalorder %s45, %s46
    %p60 = scmp.eq.s32.totalorder %s19, 7
    %p61 = por %p59, %p60
    %p63 = scmp.ne.s32.totalorder %s46, %s62
    %p64 = scmp.eq.s32.totalorder %s19, 0
    %p65 = por %p63, %p64
    %s66 = ssub.s32 %s22, %s31
    %p67 = scmp.eq.s32.totalorder %s66, 0
    %s69 = sadd.s32 %s68, 1
    %s70 = scalar_select %p67, %s68, %s69
    %p73 = pneg %p67
    %p74 = scmp.eq.s32.totalorder %s13, 7
    %p75 = por %p73, %p74
    %p76 = scmp.ne.s32.totalorder %s68, %s71
    %p77 = scmp.eq.s32.totalorder %s13, 0
    %p78 = por %p76, %p77
    %p79 = scmp.ne.s32.totalorder %s68, %s71
    %p80 = scmp.eq.s32.totalorder %s18, 7
    %p81 = por %p79, %p80
    %p82 = scmp.ne.s32.totalorder %s71, %s72
    %p83 = scmp.eq.s32.totalorder %s18, 0
    %p84 = por %p82, %p83
    %p85 = scmp.ne.s32.totalorder %s71, %s72
    %p86 = scmp.eq.s32.totalorder %s19, 7
    %p87 = por %p85, %p86
    %p89 = scmp.ne.s32.totalorder %s72, %s88
    %p90 = scmp.eq.s32.totalorder %s19, 0
    %p91 = por %p89, %p90
    %s92 = ssub.s32 %s21, %s35
    %s93 = ssub.s32 %s20, %s39
    %s94 = sor.u32 %s92, %s93
    %s95 = ssub.s32 %s22, %s31
    %s96 = sor.u32 %s94, %s95
    %p97 = scmp.eq.s32.totalorder %s96, 0
    %s99 = sadd.s32 %s98, 1
    %s100 = scalar_select %p97, %s98, %s99
    %p103 = pneg %p97
    %p104 = scmp.eq.s32.totalorder %s13, 7
    %p105 = por %p103, %p104
    %p106 = scmp.ne.s32.totalorder %s98, %s101
    %p107 = scmp.eq.s32.totalorder %s13, 0
    %p108 = por %p106, %p107
    %p109 = scmp.ne.s32.totalorder %s98, %s101
    %p110 = scmp.eq.s32.totalorder %s18, 7
    %p111 = por %p109, %p110
    %p112 = scmp.ne.s32.totalorder %s101, %s102
    %p113 = scmp.eq.s32.totalorder %s18, 0
    %p114 = por %p112, %p113
    %p115 = scmp.ne.s32.totalorder %s101, %s102
    %p116 = scmp.eq.s32.totalorder %s19, 7
    %p117 = por %p115, %p116
    %p119 = scmp.ne.s32.totalorder %s102, %s118
    %p120 = scmp.eq.s32.totalorder %s19, 0
    %p121 = por %p119, %p120
    %s122 = ssub.s32 %s21, %s35
    %s123 = ssub.s32 %s20, %s39
    %s124 = sor.u32 %s122, %s123
    %p125 = scmp.eq.s32.totalorder %s124, 0
    %s127 = sadd.s32 %s126, 1
    %s128 = scalar_select %p125, %s126, %s127
    %p131 = pneg %p125
    %p132 = scmp.eq.s32.totalorder %s13, 7
    %p133 = por %p131, %p132
    %p134 = scmp.ne.s32.totalorder %s126, %s129
    %p135 = scmp.eq.s32.totalorder %s13, 0
    %p136 = por %p134, %p135
    %p137 = scmp.ne.s32.totalorder %s126, %s129
    %p138 = scmp.eq.s32.totalorder %s18, 7
    %p139 = por %p137, %p138
    %p140 = scmp.ne.s32.totalorder %s129, %s130
    %p141 = scmp.eq.s32.totalorder %s18, 0
    %p142 = por %p140, %p141
    %p143 = scmp.ne.s32.totalorder %s129, %s130
    %p144 = scmp.eq.s32.totalorder %s19, 7
    %p145 = por %p143, %p144
    %p147 = scmp.ne.s32.totalorder %s130, %s146
    %p148 = scmp.eq.s32.totalorder %s19, 0
    %p149 = por %p147, %p148
    %s150 = ssub.s32 %s21, %s35
    %p151 = scmp.eq.s32.totalorder %s150, 0
    %s153 = sadd.s32 %s152, 1
    %s154 = scalar_select %p151, %s152, %s153
    %p157 = pneg %p151
    %p158 = scmp.eq.s32.totalorder %s13, 7
    %p159 = por %p157, %p158
    %p160 = scmp.ne.s32.totalorder %s152, %s155
    %p161 = scmp.eq.s32.totalorder %s13, 0
    %p162 = por %p160, %p161
    %p163 = scmp.ne.s32.totalorder %s152, %s155
    %p164 = scmp.eq.s32.totalorder %s18, 7
    %p165 = por %p163, %p164
    %p166 = scmp.ne.s32.totalorder %s155, %s156
    %p167 = scmp.eq.s32.totalorder %s18, 0
    %p168 = por %p166, %p167
    %p169 = scmp.ne.s32.totalorder %s155, %s156
    %p170 = scmp.eq.s32.totalorder %s19, 7
    %p171 = por %p169, %p170
    %p173 = scmp.ne.s32.totalorder %s156, %s172
    %p174 = scmp.eq.s32.totalorder %s19, 0
    %p175 = por %p173, %p174
    %s177 = sadd.s32 %s176, 1
    %p180 = scmp.eq.s32.totalorder %s13, 7
    %p181 = scmp.ne.s32.totalorder %s176, %s178
    %p182 = scmp.eq.s32.totalorder %s13, 0
    %p183 = por %p181, %p182
    %p184 = scmp.ne.s32.totalorder %s176, %s178
    %p185 = scmp.eq.s32.totalorder %s18, 7
    %p186 = por %p184, %p185
    %p187 = scmp.ne.s32.totalorder %s178, %s179
    %p188 = scmp.eq.s32.totalorder %s18, 0
    %p189 = por %p187, %p188
    %p190 = scmp.ne.s32.totalorder %s178, %s179
    %p191 = scmp.eq.s32.totalorder %s19, 7
    %p192 = por %p190, %p191
    %p194 = scmp.ne.s32.totalorder %s179, %s193
    %p195 = scmp.eq.s32.totalorder %s19, 0
    %p196 = por %p194, %p195
    %s198 = sadd.s32 %s197, 1
    %p201 = scmp.eq.s32.totalorder %s13, 7
    %p202 = scmp.ne.s32.totalorder %s197, %s199
    %p203 = scmp.eq.s32.totalorder %s13, 0
    %p204 = por %p202, %p203
    %p205 = scmp.ne.s32.totalorder %s197, %s199
    %p206 = scmp.eq.s32.totalorder %s18, 7
    %p207 = por %p205, %p206
    %p208 = scmp.ne.s32.totalorder %s199, %s200
    %p209 = scmp.eq.s32.totalorder %s18, 0
    %p210 = por %p208, %p209
    %p211 = scmp.ne.s32.totalorder %s199, %s200
    %p212 = scmp.eq.s32.totalorder %s19, 7
    %p213 = por %p211, %p212
    %p215 = scmp.ne.s32.totalorder %s200, %s214
    %p216 = scmp.eq.s32.totalorder %s19, 0
    %p217 = por %p215, %p216
    %s218 = ssub.s32 %s20, %s39
    %p219 = scmp.eq.s32.totalorder %s218, 0
    %s221 = sadd.s32 %s220, 1
    %s222 = scalar_select %p219, %s220, %s221
    %p225 = pneg %p219
    %p226 = scmp.eq.s32.totalorder %s13, 7
    %p227 = por %p225, %p226
    %p228 = scmp.ne.s32.totalorder %s220, %s223
    %p229 = scmp.eq.s32.totalorder %s13, 0
    %p230 = por %p228, %p229
    %p231 = scmp.ne.s32.totalorder %s220, %s223
    %p232 = scmp.eq.s32.totalorder %s18, 7
    %p233 = por %p231, %p232
    %p234 = scmp.ne.s32.totalorder %s223, %s224
    %p235 = scmp.eq.s32.totalorder %s18, 0
    %p236 = por %p234, %p235
    %p237 = scmp.ne.s32.totalorder %s223, %s224
    %p238 = scmp.eq.s32.totalorder %s19, 7
    %p239 = por %p237, %p238
    %p241 = scmp.ne.s32.totalorder %s224, %s240
    %p242 = scmp.eq.s32.totalorder %s19, 0
    %p243 = por %p241, %p242
    %p244 = scmp.le.s32.totalorder 1, %s13
    %p245 = scmp.lt.s32.totalorder %s13, 9
    %p246 = pnand %p244, %p245
    %p247 = pneg %p246
    // Predicated region
    $region9: #{edge_feature_rgcn_forward.7} parent=5 // pred_check
      _
    $region10: #{edge_feature_rgcn_forward.7} parent=5 // pred_check_branch
      %249 = sbr.rel (%p246) target = $region12
    $region11: #{edge_feature_rgcn_forward.7} parent=5 // pred_region
      %s250 = ssub.s32 %s13, 1
      // Predicated region
      $region13: #{edge_feature_rgcn_forward.7} parent=11 // pred_check
        %p251 = pneg %p84
      $region14: #{edge_feature_rgcn_forward.7} parent=11 // pred_check_branch
        %253 = sbr.rel (%p251) target = $region16
      $region15: #{edge_feature_rgcn_forward.7} parent=11 // pred_region
        %s254 = smul.u32 16, %s25
        %p255 = scmp.lt.s32.totalorder %s254, 15
        %s256 = scalar_select %p255, %s254, 15
        %s257 = smul.addr %s256, 4
        %s258 = scalar_lea.vmem %s1, %s257
        %s259 = smul.u32 16, %s25
      $region16: #{edge_feature_rgcn_forward.7} parent=11 // pred_fallthru
        _
      // Predicated region
      $region17: #{edge_feature_rgcn_forward.7} parent=11 // pred_check
        %p260 = pneg %p189
      $region18: #{edge_feature_rgcn_forward.7} parent=11 // pred_check_branch
        %262 = sbr.rel (%p260) target = $region20
      $region19: #{edge_feature_rgcn_forward.7} parent=11 // pred_region
        _
      $region20: #{edge_feature_rgcn_forward.7} parent=11 // pred_fallthru
        _
      // Predicated region
      $region21: #{edge_feature_rgcn_forward.7} parent=11 // pred_check
        %p263 = pneg %p210
      $region22: #{edge_feature_rgcn_forward.7} parent=11 // pred_check_branch
        %265 = sbr.rel (%p263) target = $region24
      $region23: #{edge_feature_rgcn_forward.7} parent=11 // pred_region
        _
      $region24: #{edge_feature_rgcn_forward.7} parent=11 // pred_fallthru
        _
    $region12: #{edge_feature_rgcn_forward.7} parent=5 // pred_fallthru
      _
    %p266 = scmp.lt.s32.totalorder %s13, 8
    // Predicated region
    $region25: #{edge_feature_rgcn_forward.7} parent=5 // pred_check
      %p267 = pneg %p266
    $region26: #{edge_feature_rgcn_forward.7} parent=5 // pred_check_branch
      %269 = sbr.rel (%p267) target = $region28
    $region27: #{edge_feature_rgcn_forward.7} parent=5 // pred_region
      // Predicated region
      $region29: #{edge_feature_rgcn_forward.7} parent=27 // pred_check
        %p270 = pneg %p52
      $region30: #{edge_feature_rgcn_forward.7} parent=27 // pred_check_branch
        %272 = sbr.rel (%p270) target = $region32
      $region31: #{edge_feature_rgcn_forward.7} parent=27 // pred_region
        %s273 = smul.u32 8, %s20
        %p274 = scmp.lt.s32.totalorder %s273, 15
        %s275 = scalar_select %p274, %s273, 15
        %s276 = smul.addr %s275, 4
        %s277 = scalar_lea.vmem %s0, %s276
        %s278 = smul.u32 8, %s20
      $region32: #{edge_feature_rgcn_forward.7} parent=27 // pred_fallthru
        _
      // Predicated region
      $region33: #{edge_feature_rgcn_forward.7} parent=27 // pred_check
        %p279 = pneg %p108
      $region34: #{edge_feature_rgcn_forward.7} parent=27 // pred_check_branch
        %281 = sbr.rel (%p279) target = $region36
      $region35: #{edge_feature_rgcn_forward.7} parent=27 // pred_region
        %s282 = smul.u32 8, %s20
        %p283 = scmp.lt.s32.totalorder %s21, 3
        %s284 = scalar_select %p283, %s21, 3
        %p285 = scmp.lt.s32.totalorder %s282, 15
        %s286 = scalar_select %p285, %s282, 15
        %p287 = scmp.lt.s32.totalorder %s22, 0
        %s288 = scalar_select %p287, %s22, 0
        %s289 = sadd.s32 %s288, %s286
        %s290 = smul.addr %s284, 16
        %s291 = sadd.s32 %s289, %s290
        %s292 = smul.addr %s291, 4
        %s293 = scalar_lea.vmem %s2, %s292
        %s294 = smul.u32 8, %s20
      $region36: #{edge_feature_rgcn_forward.7} parent=27 // pred_fallthru
        _
      // Predicated region
      $region37: #{edge_feature_rgcn_forward.7} parent=27 // pred_check
        %p295 = pneg %p136
      $region38: #{edge_feature_rgcn_forward.7} parent=27 // pred_check_branch
        %297 = sbr.rel (%p295) target = $region40
      $region39: #{edge_feature_rgcn_forward.7} parent=27 // pred_region
        %s298 = smul.u32 8, %s20
        %p299 = scmp.lt.s32.totalorder %s21, 3
        %s300 = scalar_select %p299, %s21, 3
        %p301 = scmp.lt.s32.totalorder %s298, 15
        %s302 = scalar_select %p301, %s298, 15
        %s303 = smul.addr %s300, 16
        %s304 = sadd.s32 %s302, %s303
        %s305 = smul.addr %s304, 8
        %s306 = scalar_lea.vmem %s3, %s305
        %s307 = smul.u32 8, %s20
      $region40: #{edge_feature_rgcn_forward.7} parent=27 // pred_fallthru
        _
      // Predicated region
      $region41: #{edge_feature_rgcn_forward.7} parent=27 // pred_check
        %p308 = pneg %p162
      $region42: #{edge_feature_rgcn_forward.7} parent=27 // pred_check_branch
        %310 = sbr.rel (%p308) target = $region44
      $region43: #{edge_feature_rgcn_forward.7} parent=27 // pred_region
        %p311 = scmp.lt.s32.totalorder %s21, 3
        %s312 = scalar_select %p311, %s21, 3
        %s313 = smul.addr %s312, 16
        %s314 = smul.addr %s313, 4
        %s315 = scalar_lea.vmem %s4, %s314
      $region44: #{edge_feature_rgcn_forward.7} parent=27 // pred_fallthru
        _
    $region28: #{edge_feature_rgcn_forward.7} parent=5 // pred_fallthru
      _
    %p316 = scmp.le.s32.totalorder 1, %s13
    %p317 = scmp.lt.s32.totalorder %s13, 9
    %p318 = pnand %p316, %p317
    %p319 = pneg %p318
    // Predicated region
    $region45: #{edge_feature_rgcn_forward.7} parent=5 // pred_check
      _
    $region46: #{edge_feature_rgcn_forward.7} parent=5 // pred_check_branch
      %321 = sbr.rel (%p318) target = $region48
    $region47: #{edge_feature_rgcn_forward.7} parent=5 // pred_region
      %s322 = ssub.s32 %s13, 1
      %s323 = smul.u32 8, %s23
      %p324 = scmp.lt.s32.totalorder %s323, 15
      %s325 = scalar_select %p324, %s323, 15
      %s326 = smul.addr %s325, 4
      %s327 = scalar_lea.vmem %s0, %s326
      %p328 = pneg %p58
      %p329 = pneg %p55
      %s330 = smul.u32 16, %s25
      %p331 = scmp.lt.s32.totalorder %s330, 15
      %s332 = scalar_select %p331, %s330, 15
      %s333 = smul.addr %s332, 4
      %s334 = scalar_lea.vmem %s1, %s333
      %p335 = pneg %p84
      %p336 = pneg %p81
      %s337 = smul.u32 8, %s23
      %p338 = scmp.lt.s32.totalorder %s24, 3
      %s339 = scalar_select %p338, %s24, 3
      %p340 = scmp.lt.s32.totalorder %s337, 15
      %s341 = scalar_select %p340, %s337, 15
      %p342 = scmp.lt.s32.totalorder %s25, 0
      %s343 = scalar_select %p342, %s25, 0
      %s344 = sadd.s32 %s343, %s341
      %s345 = smul.addr %s339, 16
      %s346 = sadd.s32 %s344, %s345
      %s347 = smul.addr %s346, 4
      %s348 = scalar_lea.vmem %s2, %s347
      %p349 = pneg %p114
      %p350 = pneg %p111
      %s351 = smul.u32 8, %s23
      %p352 = scmp.lt.s32.totalorder %s24, 3
      %s353 = scalar_select %p352, %s24, 3
      %p354 = scmp.lt.s32.totalorder %s351, 15
      %s355 = scalar_select %p354, %s351, 15
      %s356 = smul.addr %s353, 16
      %s357 = sadd.s32 %s355, %s356
      %s358 = smul.addr %s357, 8
      %s359 = scalar_lea.vmem %s3, %s358
      %p360 = pneg %p142
      %p361 = pneg %p139
      %p362 = scmp.lt.s32.totalorder %s24, 3
      %s363 = scalar_select %p362, %s24, 3
      %s364 = smul.addr %s363, 16
      %s365 = smul.addr %s364, 4
      %s366 = scalar_lea.vmem %s4, %s365
      %p367 = pneg %p168
      %p368 = pneg %p165
      %p369 = pneg %p189
      %p370 = pneg %p186
      %p371 = pneg %p210
      %p372 = pneg %p207
      %p373 = pneg %p236
      %p374 = pneg %p233
      %s375 = smul.u32 8, %s23
      %p376 = scmp.lt.s32.totalorder %s375, 15
      %s377 = scalar_select %p376, %s375, 15
      %s378 = smul.addr %s377, 8
      %s379 = scalar_lea.vmem %s7, %s378
      %s380 = smul.u32 8, %s23
      %p381 = scmp.lt.s32.totalorder %s380, 15
      %s382 = scalar_select %p381, %s380, 15
      %s383 = smul.addr %s382, 4
      %s384 = scalar_lea.vmem %s0, %s383
      %s385 = smul.u32 8, %s23
      %s386 = smul.u32 16, %s25
      %p387 = scmp.lt.s32.totalorder %s386, 15
      %s388 = scalar_select %p387, %s386, 15
      %s389 = smul.addr %s388, 4
      %s390 = scalar_lea.vmem %s1, %s389
      %s391 = smul.u32 16, %s25
      %s392 = smul.u32 8, %s23
      %p393 = scmp.lt.s32.totalorder %s24, 3
      %s394 = scalar_select %p393, %s24, 3
      %p395 = scmp.lt.s32.totalorder %s392, 15
      %s396 = scalar_select %p395, %s392, 15
      %p397 = scmp.lt.s32.totalorder %s25, 0
      %s398 = scalar_select %p397, %s25, 0
      %s399 = sadd.s32 %s398, %s396
      %s400 = smul.addr %s394, 16
      %s401 = sadd.s32 %s399, %s400
      %s402 = smul.addr %s401, 4
      %s403 = scalar_lea.vmem %s2, %s402
      %s404 = smul.u32 8, %s23
      %s405 = smul.u32 8, %s23
      %p406 = scmp.lt.s32.totalorder %s24, 3
      %s407 = scalar_select %p406, %s24, 3
      %p408 = scmp.lt.s32.totalorder %s405, 15
      %s409 = scalar_select %p408, %s405, 15
      %s410 = smul.addr %s407, 16
      %s411 = sadd.s32 %s409, %s410
      %s412 = smul.addr %s411, 8
      %s413 = scalar_lea.vmem %s3, %s412
      %s414 = smul.u32 8, %s23
      %p415 = scmp.lt.s32.totalorder %s24, 3
      %s416 = scalar_select %p415, %s24, 3
      %s417 = smul.addr %s416, 16
      %s418 = smul.addr %s417, 4
      %s419 = scalar_lea.vmem %s4, %s418
      %s420 = smul.u32 8, %s23
      %p421 = scmp.lt.s32.totalorder %s420, 15
      %s422 = scalar_select %p421, %s420, 15
      %s423 = smul.addr %s422, 8
      %s424 = scalar_lea.vmem %s7, %s423
      %s425 = smul.u32 8, %s23
      %p426 = scmp.eq.s32.totalorder %s24, 0
      %p427 = scmp.eq.s32.totalorder %s25, 0
      %p428 = pnand %p426, %p427
      %p429 = pneg %p428
      // Predicated region
      $region49: #{edge_feature_rgcn_forward.7} parent=47 // pred_check
        _
      $region50: #{edge_feature_rgcn_forward.7} parent=47 // pred_check_branch
        %431 = sbr.rel (%p428) target = $region52
      $region51: #{edge_feature_rgcn_forward.7} parent=47 // pred_region
        %v432 = vld [vmem:[%s384] sm:$0xf]
        %v433 = vld [vmem:[%s384 + $0x4] sm:$0xf]
        %v434 = vld [vmem:[%s384 + $0x8] sm:$0xf]
        %v435 = vld [vmem:[%s384 + $0xc] sm:$0xf]
        %v436 = vld [vmem:[%s384 + $0x10] sm:$0xf]
        %v437 = vld [vmem:[%s384 + $0x14] sm:$0xf]
        %v438 = vld [vmem:[%s384 + $0x18] sm:$0xf]
        %v439 = vld [vmem:[%s384 + $0x1c] sm:$0xf]
        %v440 = vld [vmem:[%s5] sm:$0xf]
        %v441 = vld [vmem:[%s5 + $0x4] sm:$0xf]
        %v442 = vld [vmem:[%s5 + $0x8] sm:$0xf]
        %v443 = vld [vmem:[%s5 + $0xc] sm:$0xf]
        %v444 = vld [vmem:[%s5 + $0x10] sm:$0xf]
        %v445 = vld [vmem:[%s5 + $0x14] sm:$0xf]
        %v446 = vld [vmem:[%s5 + $0x18] sm:$0xf]
        %v447 = vld [vmem:[%s5 + $0x1c] sm:$0xf]
        %v448 = vld [vmem:[%s5 + $0x20] sm:$0xf]
        %v449 = vld [vmem:[%s5 + $0x24] sm:$0xf]
        %v450 = vld [vmem:[%s5 + $0x28] sm:$0xf]
        %v451 = vld [vmem:[%s5 + $0x2c] sm:$0xf]
        %v452 = vld [vmem:[%s5 + $0x30] sm:$0xf]
        %v453 = vld [vmem:[%s5 + $0x34] sm:$0xf]
        %v454 = vld [vmem:[%s5 + $0x38] sm:$0xf]
        %v455 = vld [vmem:[%s5 + $0x3c] sm:$0xf]
        %v456 = vld [vmem:[%s6] sm:$0x1]
        %v458 = vperm.slane %v456, 0
        %v468 = vunpack.c.l.b16 %v432
        %v469 = vunpack.c.l.b16 %v433
        %v470 = vunpack.c.l.b16 %v434
        %v471 = vunpack.c.l.b16 %v435
        %v472 = vunpack.c.l.b16 %v436
        %v473 = vunpack.c.l.b16 %v437
        %v474 = vunpack.c.l.b16 %v438
        %v475 = vunpack.c.l.b16 %v439
        %v476 = vpack.c.b16 %v469, %v468
        %v477 = vpack.c.b16 %v471, %v470
        %v478 = vpack.c.b16 %v473, %v472
        %v479 = vpack.c.b16 %v475, %v474
        %v500 = vunpack.c.l.b16 %v440
        %v501 = vunpack.c.l.b16 %v441
        %v502 = vunpack.c.l.b16 %v442
        %v503 = vunpack.c.l.b16 %v443
        %v504 = vunpack.c.l.b16 %v444
        %v505 = vunpack.c.l.b16 %v445
        %v506 = vunpack.c.l.b16 %v446
        %v507 = vunpack.c.l.b16 %v447
        %v508 = vunpack.c.l.b16 %v448
        %v509 = vunpack.c.l.b16 %v449
        %v510 = vunpack.c.l.b16 %v450
        %v511 = vunpack.c.l.b16 %v451
        %v512 = vunpack.c.l.b16 %v452
        %v513 = vunpack.c.l.b16 %v453
        %v514 = vunpack.c.l.b16 %v454
        %v515 = vunpack.c.l.b16 %v455
        %v516 = vpack.c.b16 %v501, %v500
        %v517 = vpack.c.b16 %v503, %v502
        %v518 = vpack.c.b16 %v505, %v504
        %v519 = vpack.c.b16 %v507, %v506
        %v520 = vpack.c.b16 %v509, %v508
        %v521 = vpack.c.b16 %v511, %v510
        %v522 = vpack.c.b16 %v513, %v512
        %v523 = vpack.c.b16 %v515, %v514
        %532 = vmatpush.bf16.msra.mxu0 %v523
        %533 = vmatpush.bf16.msra.mxu0 %v522
        %534 = vmatpush.bf16.msra.mxu0 %v521
        %535 = vmatpush.bf16.msra.mxu0 %v520
        %536 = vmatpush.bf16.msra.mxu0 %v519
        %537 = vmatpush.bf16.msra.mxu0 %v518
        %538 = vmatpush.bf16.msra.mxu0 %v517
        %539 = vmatpush.bf16.msra.mxu0 %v516
        %540 = vmatmul.bf16.gmra.mxu0 %v476
        %v541 = vpop.f32.mrf.mxu0
        %v542 = vadd.f32 %v458, %v541
        %v543 = vpop.f32.mrf.mxu0
        %v544 = vadd.f32 %v458, %v543
        %545 = vmatmul.bf16.gmra.mxu0 %v477
        %v546 = vpop.f32.mrf.mxu0
        %v547 = vadd.f32 %v458, %v546
        %v548 = vpop.f32.mrf.mxu0
        %v549 = vadd.f32 %v458, %v548
        %550 = vmatmul.bf16.gmra.mxu0 %v478
        %v551 = vpop.f32.mrf.mxu0
        %v552 = vadd.f32 %v458, %v551
        %v553 = vpop.f32.mrf.mxu0
        %v554 = vadd.f32 %v458, %v553
        %555 = vmatmul.bf16.gmra.mxu0 %v479
        %v556 = vpop.f32.mrf.mxu0
        %v557 = vadd.f32 %v458, %v556
        %v558 = vpop.f32.mrf.mxu0
        %v559 = vadd.f32 %v458, %v558
        %560 = vdwg.mxu0
        %561 = vst [vmem:[#allocation2] sm:$0xff] %v542
        %562 = vst [vmem:[#allocation2 + $0x8] sm:$0xff] %v544
        %563 = vst [vmem:[#allocation2 + $0x10] sm:$0xff] %v547
        %564 = vst [vmem:[#allocation2 + $0x18] sm:$0xff] %v549
        %565 = vst [vmem:[#allocation2 + $0x20] sm:$0xff] %v552
        %566 = vst [vmem:[#allocation2 + $0x28] sm:$0xff] %v554
        %567 = vst [vmem:[#allocation2 + $0x30] sm:$0xff] %v557
        %568 = vst [vmem:[#allocation2 + $0x38] sm:$0xff] %v559
      $region52: #{edge_feature_rgcn_forward.7} parent=47 // pred_fallthru
        _
      %v569 = vld [vmem:[%s403] sm:$0xf]
      %v570 = vld [vmem:[%s403 + $0x4] sm:$0xf]
      %v571 = vld [vmem:[%s403 + $0x8] sm:$0xf]
      %v572 = vld [vmem:[%s403 + $0xc] sm:$0xf]
      %v573 = vld [vmem:[%s403 + $0x10] sm:$0xf]
      %v574 = vld [vmem:[%s403 + $0x14] sm:$0xf]
      %v575 = vld [vmem:[%s403 + $0x18] sm:$0xf]
      %v576 = vld [vmem:[%s403 + $0x1c] sm:$0xf]
      %v577 = vld [vmem:[%s390] sm:$0xf]
      %v578 = vld [vmem:[%s390 + $0x4] sm:$0xf]
      %v579 = vld [vmem:[%s390 + $0x8] sm:$0xf]
      %v580 = vld [vmem:[%s390 + $0xc] sm:$0xf]
      %v581 = vld [vmem:[%s390 + $0x10] sm:$0xf]
      %v582 = vld [vmem:[%s390 + $0x14] sm:$0xf]
      %v583 = vld [vmem:[%s390 + $0x18] sm:$0xf]
      %v584 = vld [vmem:[%s390 + $0x1c] sm:$0xf]
      %v585 = vld [vmem:[%s390 + $0x20] sm:$0xf]
      %v586 = vld [vmem:[%s390 + $0x24] sm:$0xf]
      %v587 = vld [vmem:[%s390 + $0x28] sm:$0xf]
      %v588 = vld [vmem:[%s390 + $0x2c] sm:$0xf]
      %v589 = vld [vmem:[%s390 + $0x30] sm:$0xf]
      %v590 = vld [vmem:[%s390 + $0x34] sm:$0xf]
      %v591 = vld [vmem:[%s390 + $0x38] sm:$0xf]
      %v592 = vld [vmem:[%s390 + $0x3c] sm:$0xf]
      %v601 = vunpack.c.l.b16 %v569
      %v602 = vunpack.c.l.b16 %v570
      %v603 = vunpack.c.l.b16 %v571
      %v604 = vunpack.c.l.b16 %v572
      %v605 = vunpack.c.l.b16 %v573
      %v606 = vunpack.c.l.b16 %v574
      %v607 = vunpack.c.l.b16 %v575
      %v608 = vunpack.c.l.b16 %v576
      %v609 = vpack.c.b16 %v602, %v601
      %v610 = vpack.c.b16 %v604, %v603
      %v611 = vpack.c.b16 %v606, %v605
      %v612 = vpack.c.b16 %v608, %v607
      %v633 = vunpack.c.l.b16 %v577
      %v634 = vunpack.c.l.b16 %v578
      %v635 = vunpack.c.l.b16 %v579
      %v636 = vunpack.c.l.b16 %v580
      %v637 = vunpack.c.l.b16 %v581
      %v638 = vunpack.c.l.b16 %v582
      %v639 = vunpack.c.l.b16 %v583
      %v640 = vunpack.c.l.b16 %v584
      %v641 = vunpack.c.l.b16 %v585
      %v642 = vunpack.c.l.b16 %v586
      %v643 = vunpack.c.l.b16 %v587
      %v644 = vunpack.c.l.b16 %v588
      %v645 = vunpack.c.l.b16 %v589
      %v646 = vunpack.c.l.b16 %v590
      %v647 = vunpack.c.l.b16 %v591
      %v648 = vunpack.c.l.b16 %v592
      %v649 = vpack.c.b16 %v634, %v633
      %v650 = vpack.c.b16 %v636, %v635
      %v651 = vpack.c.b16 %v638, %v637
      %v652 = vpack.c.b16 %v640, %v639
      %v653 = vpack.c.b16 %v642, %v641
      %v654 = vpack.c.b16 %v644, %v643
      %v655 = vpack.c.b16 %v646, %v645
      %v656 = vpack.c.b16 %v648, %v647
      %665 = vmatpush.bf16.msra.mxu0 %v656
      %666 = vmatpush.bf16.msra.mxu0 %v655
      %667 = vmatpush.bf16.msra.mxu0 %v654
      %668 = vmatpush.bf16.msra.mxu0 %v653
      %669 = vmatpush.bf16.msra.mxu0 %v652
      %670 = vmatpush.bf16.msra.mxu0 %v651
      %671 = vmatpush.bf16.msra.mxu0 %v650
      %672 = vmatpush.bf16.msra.mxu0 %v649
      %673 = vmatmul.bf16.gmra.mxu0 %v609
      %v674 = vpop.f32.mrf.mxu0
      %v675 = vadd.f32 0.0, %v674
      %v676 = vpop.f32.mrf.mxu0
      %v677 = vadd.f32 0.0, %v676
      %678 = vmatmul.bf16.gmra.mxu0 %v610
      %v679 = vpop.f32.mrf.mxu0
      %v680 = vadd.f32 0.0, %v679
      %v681 = vpop.f32.mrf.mxu0
      %v682 = vadd.f32 0.0, %v681
      %683 = vmatmul.bf16.gmra.mxu0 %v611
      %v684 = vpop.f32.mrf.mxu0
      %v685 = vadd.f32 0.0, %v684
      %v686 = vpop.f32.mrf.mxu0
      %v687 = vadd.f32 0.0, %v686
      %688 = vmatmul.bf16.gmra.mxu0 %v612
      %v689 = vpop.f32.mrf.mxu0
      %v690 = vadd.f32 0.0, %v689
      %v691 = vpop.f32.mrf.mxu0
      %v692 = vadd.f32 0.0, %v691
      %693 = vdwg.mxu0
      // Predicated region
      $region53: #{edge_feature_rgcn_forward.7} parent=47 // pred_check
        %p694 = pneg %p427
      $region54: #{edge_feature_rgcn_forward.7} parent=47 // pred_check_branch
        %696 = sbr.rel (%p694) target = $region56
      $region55: #{edge_feature_rgcn_forward.7} parent=47 // pred_region
        %697 = vst [vmem:[#allocation3] sm:$0xff] %v675
        %698 = vst [vmem:[#allocation3 + $0x8] sm:$0xff] %v677
        %699 = vst [vmem:[#allocation3 + $0x10] sm:$0xff] %v680
        %700 = vst [vmem:[#allocation3 + $0x18] sm:$0xff] %v682
        %701 = vst [vmem:[#allocation3 + $0x20] sm:$0xff] %v685
        %702 = vst [vmem:[#allocation3 + $0x28] sm:$0xff] %v687
        %703 = vst [vmem:[#allocation3 + $0x30] sm:$0xff] %v690
        %704 = vst [vmem:[#allocation3 + $0x38] sm:$0xff] %v692
      $region56: #{edge_feature_rgcn_forward.7} parent=47 // pred_fallthru
        _
      %p705 = scmp.gt.s32.totalorder %s25, 0
      // Predicated region
      $region57: #{edge_feature_rgcn_forward.7} parent=47 // pred_check
        %p706 = pneg %p705
      $region58: #{edge_feature_rgcn_forward.7} parent=47 // pred_check_branch
        %708 = sbr.rel (%p706) target = $region60
      $region59: #{edge_feature_rgcn_forward.7} parent=47 // pred_region
        %v709 = vld [vmem:[#allocation3] sm:$0xff]
        %v710 = vld [vmem:[#allocation3 + $0x8] sm:$0xff]
        %v711 = vld [vmem:[#allocation3 + $0x10] sm:$0xff]
        %v712 = vld [vmem:[#allocation3 + $0x18] sm:$0xff]
        %v713 = vld [vmem:[#allocation3 + $0x20] sm:$0xff]
        %v714 = vld [vmem:[#allocation3 + $0x28] sm:$0xff]
        %v715 = vld [vmem:[#allocation3 + $0x30] sm:$0xff]
        %v716 = vld [vmem:[#allocation3 + $0x38] sm:$0xff]
        %v717 = vadd.f32 %v709, %v675
        %v718 = vadd.f32 %v710, %v677
        %v719 = vadd.f32 %v711, %v680
        %v720 = vadd.f32 %v712, %v682
        %v721 = vadd.f32 %v713, %v685
        %v722 = vadd.f32 %v714, %v687
        %v723 = vadd.f32 %v715, %v690
        %v724 = vadd.f32 %v716, %v692
        %725 = vst [vmem:[#allocation3] sm:$0xff] %v717
        %726 = vst [vmem:[#allocation3 + $0x8] sm:$0xff] %v718
        %727 = vst [vmem:[#allocation3 + $0x10] sm:$0xff] %v719
        %728 = vst [vmem:[#allocation3 + $0x18] sm:$0xff] %v720
        %729 = vst [vmem:[#allocation3 + $0x20] sm:$0xff] %v721
        %730 = vst [vmem:[#allocation3 + $0x28] sm:$0xff] %v722
        %731 = vst [vmem:[#allocation3 + $0x30] sm:$0xff] %v723
        %732 = vst [vmem:[#allocation3 + $0x38] sm:$0xff] %v724
      $region60: #{edge_feature_rgcn_forward.7} parent=47 // pred_fallthru
        _
      // Predicated region
      $region61: #{edge_feature_rgcn_forward.7} parent=47 // pred_check
        %p733 = pneg %p427
      $region62: #{edge_feature_rgcn_forward.7} parent=47 // pred_check_branch
        %735 = sbr.rel (%p733) target = $region64
      $region63: #{edge_feature_rgcn_forward.7} parent=47 // pred_region
        %v736 = vld [vmem:[#allocation3] sm:$0xff]
        %v737 = vld [vmem:[#allocation3 + $0x8] sm:$0xff]
        %v738 = vld [vmem:[#allocation3 + $0x10] sm:$0xff]
        %v739 = vld [vmem:[#allocation3 + $0x18] sm:$0xff]
        %v740 = vld [vmem:[#allocation3 + $0x20] sm:$0xff]
        %v741 = vld [vmem:[#allocation3 + $0x28] sm:$0xff]
        %v742 = vld [vmem:[#allocation3 + $0x30] sm:$0xff]
        %v743 = vld [vmem:[#allocation3 + $0x38] sm:$0xff]
        %v744 = vld [vmem:[%s413] sm:$0xff]
        %v745 = vld [vmem:[%s413 + $0x8] sm:$0xff]
        %v746 = vld [vmem:[%s413 + $0x10] sm:$0xff]
        %v747 = vld [vmem:[%s413 + $0x18] sm:$0xff]
        %v748 = vld [vmem:[%s413 + $0x20] sm:$0xff]
        %v749 = vld [vmem:[%s413 + $0x28] sm:$0xff]
        %v750 = vld [vmem:[%s413 + $0x30] sm:$0xff]
        %v751 = vld [vmem:[%s413 + $0x38] sm:$0xff]
        %753 = vset.pattern.permute.xlu0 0
        %754 = vperm.xlu0 %753, %v744
        %v755 = vpop.permute.xlu0 %754
        %758 = vset.pattern.permute.xlu0 0
        %759 = vperm.xlu0 %758, %v745
        %v760 = vpop.permute.xlu0 %759
        %763 = vset.pattern.permute.xlu0 0
        %764 = vperm.xlu0 %763, %v746
        %v765 = vpop.permute.xlu0 %764
        %768 = vset.pattern.permute.xlu0 0
        %769 = vperm.xlu0 %768, %v747
        %v770 = vpop.permute.xlu0 %769
        %773 = vset.pattern.permute.xlu0 0
        %774 = vperm.xlu0 %773, %v748
        %v775 = vpop.permute.xlu0 %774
        %778 = vset.pattern.permute.xlu0 0
        %779 = vperm.xlu0 %778, %v749
        %v780 = vpop.permute.xlu0 %779
        %783 = vset.pattern.permute.xlu0 0
        %784 = vperm.xlu0 %783, %v750
        %v785 = vpop.permute.xlu0 %784
        %788 = vset.pattern.permute.xlu0 0
        %789 = vperm.xlu0 %788, %v751
        %v790 = vpop.permute.xlu0 %789
        %v792 = vmul.f32 %v736, %v755
        %v793 = vmul.f32 %v737, %v760
        %v794 = vmul.f32 %v738, %v765
        %v795 = vmul.f32 %v739, %v770
        %v796 = vmul.f32 %v740, %v775
        %v797 = vmul.f32 %v741, %v780
        %v798 = vmul.f32 %v742, %v785
        %v799 = vmul.f32 %v743, %v790
        %v800 = vpack.c.bf16 %v793, %v792
        %v801 = vpack.c.bf16 %v795, %v794
        %v802 = vpack.c.bf16 %v797, %v796
        %v803 = vpack.c.bf16 %v799, %v798
        %v804 = vld [vmem:[#allocation2] sm:$0xff]
        %v805 = vld [vmem:[#allocation2 + $0x8] sm:$0xff]
        %v806 = vld [vmem:[#allocation2 + $0x10] sm:$0xff]
        %v807 = vld [vmem:[#allocation2 + $0x18] sm:$0xff]
        %v808 = vld [vmem:[#allocation2 + $0x20] sm:$0xff]
        %v809 = vld [vmem:[#allocation2 + $0x28] sm:$0xff]
        %v810 = vld [vmem:[#allocation2 + $0x30] sm:$0xff]
        %v811 = vld [vmem:[#allocation2 + $0x38] sm:$0xff]
        %v812 = vld [vmem:[%s419] sm:$0xf]
        %v813 = vld [vmem:[%s419 + $0x4] sm:$0xf]
        %v814 = vld [vmem:[%s419 + $0x8] sm:$0xf]
        %v815 = vld [vmem:[%s419 + $0xc] sm:$0xf]
        %v816 = vld [vmem:[%s419 + $0x10] sm:$0xf]
        %v817 = vld [vmem:[%s419 + $0x14] sm:$0xf]
        %v818 = vld [vmem:[%s419 + $0x18] sm:$0xf]
        %v819 = vld [vmem:[%s419 + $0x1c] sm:$0xf]
        %v820 = vld [vmem:[%s419 + $0x20] sm:$0xf]
        %v821 = vld [vmem:[%s419 + $0x24] sm:$0xf]
        %v822 = vld [vmem:[%s419 + $0x28] sm:$0xf]
        %v823 = vld [vmem:[%s419 + $0x2c] sm:$0xf]
        %v824 = vld [vmem:[%s419 + $0x30] sm:$0xf]
        %v825 = vld [vmem:[%s419 + $0x34] sm:$0xf]
        %v826 = vld [vmem:[%s419 + $0x38] sm:$0xf]
        %v827 = vld [vmem:[%s419 + $0x3c] sm:$0xf]
        %v844 = vunpack.c.l.b16 %v812
        %v845 = vunpack.c.l.b16 %v813
        %v846 = vunpack.c.l.b16 %v814
        %v847 = vunpack.c.l.b16 %v815
        %v848 = vunpack.c.l.b16 %v816
        %v849 = vunpack.c.l.b16 %v817
        %v850 = vunpack.c.l.b16 %v818
        %v851 = vunpack.c.l.b16 %v819
        %v852 = vunpack.c.l.b16 %v820
        %v853 = vunpack.c.l.b16 %v821
        %v854 = vunpack.c.l.b16 %v822
        %v855 = vunpack.c.l.b16 %v823
        %v856 = vunpack.c.l.b16 %v824
        %v857 = vunpack.c.l.b16 %v825
        %v858 = vunpack.c.l.b16 %v826
        %v859 = vunpack.c.l.b16 %v827
        %v860 = vpack.c.b16 %v845, %v844
        %v861 = vpack.c.b16 %v847, %v846
        %v862 = vpack.c.b16 %v849, %v848
        %v863 = vpack.c.b16 %v851, %v850
        %v864 = vpack.c.b16 %v853, %v852
        %v865 = vpack.c.b16 %v855, %v854
        %v866 = vpack.c.b16 %v857, %v856
        %v867 = vpack.c.b16 %v859, %v858
        %876 = vmatpush.bf16.msra.mxu0 %v867
        %877 = vmatpush.bf16.msra.mxu0 %v866
        %878 = vmatpush.bf16.msra.mxu0 %v865
        %879 = vmatpush.bf16.msra.mxu0 %v864
        %880 = vmatpush.bf16.msra.mxu0 %v863
        %881 = vmatpush.bf16.msra.mxu0 %v862
        %882 = vmatpush.bf16.msra.mxu0 %v861
        %883 = vmatpush.bf16.msra.mxu0 %v860
        %884 = vmatmul.bf16.gmra.mxu0 %v800
        %v885 = vpop.f32.mrf.mxu0
        %v886 = vadd.f32 0.0, %v885
        %v887 = vpop.f32.mrf.mxu0
        %v888 = vadd.f32 0.0, %v887
        %889 = vmatmul.bf16.gmra.mxu0 %v801
        %v890 = vpop.f32.mrf.mxu0
        %v891 = vadd.f32 0.0, %v890
        %v892 = vpop.f32.mrf.mxu0
        %v893 = vadd.f32 0.0, %v892
        %894 = vmatmul.bf16.gmra.mxu0 %v802
        %v895 = vpop.f32.mrf.mxu0
        %v896 = vadd.f32 0.0, %v895
        %v897 = vpop.f32.mrf.mxu0
        %v898 = vadd.f32 0.0, %v897
        %899 = vmatmul.bf16.gmra.mxu0 %v803
        %v900 = vpop.f32.mrf.mxu0
        %v901 = vadd.f32 0.0, %v900
        %v902 = vpop.f32.mrf.mxu0
        %v903 = vadd.f32 0.0, %v902
        %904 = vdwg.mxu0
        %v905 = vadd.f32 %v804, %v886
        %v906 = vadd.f32 %v805, %v888
        %v907 = vadd.f32 %v806, %v891
        %v908 = vadd.f32 %v807, %v893
        %v909 = vadd.f32 %v808, %v896
        %v910 = vadd.f32 %v809, %v898
        %v911 = vadd.f32 %v810, %v901
        %v912 = vadd.f32 %v811, %v903
        %913 = vst [vmem:[#allocation2] sm:$0xff] %v905
        %914 = vst [vmem:[#allocation2 + $0x8] sm:$0xff] %v906
        %915 = vst [vmem:[#allocation2 + $0x10] sm:$0xff] %v907
        %916 = vst [vmem:[#allocation2 + $0x18] sm:$0xff] %v908
        %917 = vst [vmem:[#allocation2 + $0x20] sm:$0xff] %v909
        %918 = vst [vmem:[#allocation2 + $0x28] sm:$0xff] %v910
        %919 = vst [vmem:[#allocation2 + $0x30] sm:$0xff] %v911
        %920 = vst [vmem:[#allocation2 + $0x38] sm:$0xff] %v912
      $region64: #{edge_feature_rgcn_forward.7} parent=47 // pred_fallthru
        _
      %p921 = scmp.eq.s32.totalorder %s24, 3
      %p922 = pnand %p921, %p427
      %p923 = pneg %p922
      // Predicated region
      $region65: #{edge_feature_rgcn_forward.7} parent=47 // pred_check
        _
      $region66: #{edge_feature_rgcn_forward.7} parent=47 // pred_check_branch
        %925 = sbr.rel (%p922) target = $region68
      $region67: #{edge_feature_rgcn_forward.7} parent=47 // pred_region
        %v926 = vld [vmem:[#allocation2] sm:$0xff]
        %v927 = vld [vmem:[#allocation2 + $0x8] sm:$0xff]
        %v928 = vld [vmem:[#allocation2 + $0x10] sm:$0xff]
        %v929 = vld [vmem:[#allocation2 + $0x18] sm:$0xff]
        %v930 = vld [vmem:[#allocation2 + $0x20] sm:$0xff]
        %v931 = vld [vmem:[#allocation2 + $0x28] sm:$0xff]
        %v932 = vld [vmem:[#allocation2 + $0x30] sm:$0xff]
        %v933 = vld [vmem:[#allocation2 + $0x38] sm:$0xff]
        %v934 = vmul.f32 %v926, %v926
        %v935 = vmul.f32 %v927, %v927
        %v936 = vmul.f32 %v928, %v928
        %v937 = vmul.f32 %v929, %v929
        %v938 = vmul.f32 %v930, %v930
        %v939 = vmul.f32 %v931, %v931
        %v940 = vmul.f32 %v932, %v932
        %v941 = vmul.f32 %v933, %v933
        %942 = vadd.xlane.f32.xlu0 %v934
        %v943 = vpop.xlane.xlu0 %942
        %944 = vadd.xlane.f32.xlu0 %v935
        %v945 = vpop.xlane.xlu0 %944
        %946 = vadd.xlane.f32.xlu0 %v936
        %v947 = vpop.xlane.xlu0 %946
        %948 = vadd.xlane.f32.xlu0 %v937
        %v949 = vpop.xlane.xlu0 %948
        %950 = vadd.xlane.f32.xlu0 %v938
        %v951 = vpop.xlane.xlu0 %950
        %952 = vadd.xlane.f32.xlu0 %v939
        %v953 = vpop.xlane.xlu0 %952
        %954 = vadd.xlane.f32.xlu0 %v940
        %v955 = vpop.xlane.xlu0 %954
        %956 = vadd.xlane.f32.xlu0 %v941
        %v957 = vpop.xlane.xlu0 %956
        %v958 = vmax.f32 %v943, 1e-24
        %v959 = vmax.f32 %v945, 1e-24
        %v960 = vmax.f32 %v947, 1e-24
        %v961 = vmax.f32 %v949, 1e-24
        %v962 = vmax.f32 %v951, 1e-24
        %v963 = vmax.f32 %v953, 1e-24
        %v964 = vmax.f32 %v955, 1e-24
        %v965 = vmax.f32 %v957, 1e-24
        %v966 = vrsqrt.pop %v958
        %v967 = vmul.f32 %v966, %v958
        %v968 = vmul.f32 %v967, %v966
        %v969 = vmul.f32 0.5, %v968
        %v970 = vsub.f32 1.5, %v969
        %v971 = vmul.f32 %v966, %v970
        %vm972 = vweird.f32 %v958
        %vm973 = vweird.f32 %v966
        %vm974 = vmor %vm972, %vm973
        %v975 = vsel %vm974, %v966, %v971
        %v976 = vrsqrt.pop %v959
        %v977 = vmul.f32 %v976, %v959
        %v978 = vmul.f32 %v977, %v976
        %v979 = vmul.f32 0.5, %v978
        %v980 = vsub.f32 1.5, %v979
        %v981 = vmul.f32 %v976, %v980
        %vm982 = vweird.f32 %v959
        %vm983 = vweird.f32 %v976
        %vm984 = vmor %vm982, %vm983
        %v985 = vsel %vm984, %v976, %v981
        %v986 = vrsqrt.pop %v960
        %v987 = vmul.f32 %v986, %v960
        %v988 = vmul.f32 %v987, %v986
        %v989 = vmul.f32 0.5, %v988
        %v990 = vsub.f32 1.5, %v989
        %v991 = vmul.f32 %v986, %v990
        %vm992 = vweird.f32 %v960
        %vm993 = vweird.f32 %v986
        %vm994 = vmor %vm992, %vm993
        %v995 = vsel %vm994, %v986, %v991
        %v996 = vrsqrt.pop %v961
        %v997 = vmul.f32 %v996, %v961
        %v998 = vmul.f32 %v997, %v996
        %v999 = vmul.f32 0.5, %v998
        %v1000 = vsub.f32 1.5, %v999
        %v1001 = vmul.f32 %v996, %v1000
        %vm1002 = vweird.f32 %v961
        %vm1003 = vweird.f32 %v996
        %vm1004 = vmor %vm1002, %vm1003
        %v1005 = vsel %vm1004, %v996, %v1001
        %v1006 = vrsqrt.pop %v962
        %v1007 = vmul.f32 %v1006, %v962
        %v1008 = vmul.f32 %v1007, %v1006
        %v1009 = vmul.f32 0.5, %v1008
        %v1010 = vsub.f32 1.5, %v1009
        %v1011 = vmul.f32 %v1006, %v1010
        %vm1012 = vweird.f32 %v962
        %vm1013 = vweird.f32 %v1006
        %vm1014 = vmor %vm1012, %vm1013
        %v1015 = vsel %vm1014, %v1006, %v1011
        %v1016 = vrsqrt.pop %v963
        %v1017 = vmul.f32 %v1016, %v963
        %v1018 = vmul.f32 %v1017, %v1016
        %v1019 = vmul.f32 0.5, %v1018
        %v1020 = vsub.f32 1.5, %v1019
        %v1021 = vmul.f32 %v1016, %v1020
        %vm1022 = vweird.f32 %v963
        %vm1023 = vweird.f32 %v1016
        %vm1024 = vmor %vm1022, %vm1023
        %v1025 = vsel %vm1024, %v1016, %v1021
        %v1026 = vrsqrt.pop %v964
        %v1027 = vmul.f32 %v1026, %v964
        %v1028 = vmul.f32 %v1027, %v1026
        %v1029 = vmul.f32 0.5, %v1028
        %v1030 = vsub.f32 1.5, %v1029
        %v1031 = vmul.f32 %v1026, %v1030
        %vm1032 = vweird.f32 %v964
        %vm1033 = vweird.f32 %v1026
        %vm1034 = vmor %vm1032, %vm1033
        %v1035 = vsel %vm1034, %v1026, %v1031
        %v1036 = vrsqrt.pop %v965
        %v1037 = vmul.f32 %v1036, %v965
        %v1038 = vmul.f32 %v1037, %v1036
        %v1039 = vmul.f32 0.5, %v1038
        %v1040 = vsub.f32 1.5, %v1039
        %v1041 = vmul.f32 %v1036, %v1040
        %vm1042 = vweird.f32 %v965
        %vm1043 = vweird.f32 %v1036
        %vm1044 = vmor %vm1042, %vm1043
        %v1045 = vsel %vm1044, %v1036, %v1041
        %v1046 = vmul.f32 %v926, %v975
        %v1047 = vmul.f32 %v927, %v985
        %v1048 = vmul.f32 %v928, %v995
        %v1049 = vmul.f32 %v929, %v1005
        %v1050 = vmul.f32 %v930, %v1015
        %v1051 = vmul.f32 %v931, %v1025
        %v1052 = vmul.f32 %v932, %v1035
        %v1053 = vmul.f32 %v933, %v1045
        %1054 = vst [vmem:[%s424] sm:$0xff] %v1046
        %1055 = vst [vmem:[%s424 + $0x8] sm:$0xff] %v1047
        %1056 = vst [vmem:[%s424 + $0x10] sm:$0xff] %v1048
        %1057 = vst [vmem:[%s424 + $0x18] sm:$0xff] %v1049
        %1058 = vst [vmem:[%s424 + $0x20] sm:$0xff] %v1050
        %1059 = vst [vmem:[%s424 + $0x28] sm:$0xff] %v1051
        %1060 = vst [vmem:[%s424 + $0x30] sm:$0xff] %v1052
        %1061 = vst [vmem:[%s424 + $0x38] sm:$0xff] %v1053
      $region68: #{edge_feature_rgcn_forward.7} parent=47 // pred_fallthru
        _
      %s1062 = smul.u32 8, %s23
      %p1063 = scmp.lt.s32.totalorder %s1062, 15
      %s1064 = scalar_select %p1063, %s1062, 15
      %s1065 = smul.addr %s1064, 8
      %s1066 = scalar_lea.vmem %s7, %s1065
      // Predicated region
      $region69: #{edge_feature_rgcn_forward.7} parent=47 // pred_check
        %p1067 = pneg %p233
      $region70: #{edge_feature_rgcn_forward.7} parent=47 // pred_check_branch
        %1069 = sbr.rel (%p1067) target = $region72
      $region71: #{edge_feature_rgcn_forward.7} parent=47 // pred_region
        %s1070 = smul.u32 8, %s23
      $region72: #{edge_feature_rgcn_forward.7} parent=47 // pred_fallthru
        _
    $region48: #{edge_feature_rgcn_forward.7} parent=5 // pred_fallthru
      _
    %p1071 = scmp.le.s32.totalorder 2, %s13
    // Predicated region
    $region73: #{edge_feature_rgcn_forward.7} parent=5 // pred_check
      %p1072 = pneg %p1071
    $region74: #{edge_feature_rgcn_forward.7} parent=5 // pred_check_branch
      %1074 = sbr.rel (%p1072) target = $region76
    $region75: #{edge_feature_rgcn_forward.7} parent=5 // pred_region
      %s1075 = ssub.s32 %s13, 2
      // Predicated region
      $region77: #{edge_feature_rgcn_forward.7} parent=75 // pred_check
        %p1076 = pneg %p239
      $region78: #{edge_feature_rgcn_forward.7} parent=75 // pred_check_branch
        %1078 = sbr.rel (%p1076) target = $region80
      $region79: #{edge_feature_rgcn_forward.7} parent=75 // pred_region
        %s1079 = smul.u32 8, %s26
        %p1080 = scmp.lt.s32.totalorder %s1079, 15
        %s1081 = scalar_select %p1080, %s1079, 15
        %s1082 = smul.addr %s1081, 8
        %s1083 = scalar_lea.vmem %s7, %s1082
      $region80: #{edge_feature_rgcn_forward.7} parent=75 // pred_fallthru
        _
    $region76: #{edge_feature_rgcn_forward.7} parent=5 // pred_fallthru
      _
  $region6: #{edge_feature_rgcn_forward.7} parent=0 // loop_footer
    %s17 = sadd.s32 1, %s13
  $region7: #{edge_feature_rgcn_forward.7} parent=0 // loop_footer_branch
    %12 = sbr.rel target = $region3
  $region8: #{edge_feature_rgcn_forward.7} parent=0 // loop_exit
    _

// kernel: edge_feature_rgcn_forward.4
$region0: #{edge_feature_rgcn_forward.4}
  #allocation0 [shape = 'u32[]', space=smem, size = 0x4, offset = 0x4, fixed_abs, tag = 'smem constant byte address 0x4 - core index']
  #allocation1 [shape = 'u32[72,128]{1,0:T(1,128)}', space=vmem, size = 0x9000, scoped, tag = 'internal scratch']
  %s0 = inlined_call_operand.vmem [shape: f32[96,128], index: 0, kind: input, shape index: {}]
  %s1 = inlined_call_operand.vmem [shape: bf16[96,8], index: 1, kind: input, shape index: {}]
  %s2 = inlined_call_operand.vmem [shape: bf16[8,128], index: 2, kind: input, shape index: {}]
  %s3 = inlined_call_operand.vmem [shape: f32[1,128], index: 3, kind: input, shape index: {}]
  %s4 = inlined_call_operand.vmem [shape: bf16[128,128], index: 4, kind: input, shape index: {}]
  %s5 = inlined_call_operand.vmem [shape: f32[1,128], index: 5, kind: input, shape index: {}]
  %s6 = inlined_call_operand.vmem [shape: f32[96,1], index: 6, kind: input, shape index: {}]
  %s7 = inlined_call_operand.vmem [shape: f32[96,128], index: 7, kind: output, shape index: {}]
  %s8 = sld [smem:[#allocation0]]
  $region38: #{edge_feature_rgcn_forward.4} parent=0
    _
  %s10 = ssub.s32 1, %s8
  %s11 = scalar_select 0, %s10, %s8
  // Predicated region
  $region2: #{edge_feature_rgcn_forward.4} parent=0 // pred_check
    _
  $region3: #{edge_feature_rgcn_forward.4} parent=0 // pred_check_branch
    %13 = sbr.rel (0) target = $region5
  $region4: #{edge_feature_rgcn_forward.4} parent=0 // pred_region
    _
  $region5: #{edge_feature_rgcn_forward.4} parent=0 // pred_fallthru
    _
  // Predicated region
  $region6: #{edge_feature_rgcn_forward.4} parent=0 // pred_check
    _
  $region7: #{edge_feature_rgcn_forward.4} parent=0 // pred_check_branch
    %15 = sbr.rel (0) target = $region9
  $region8: #{edge_feature_rgcn_forward.4} parent=0 // pred_region
    _
  $region9: #{edge_feature_rgcn_forward.4} parent=0 // pred_fallthru
    _
  // Predicated region
  $region10: #{edge_feature_rgcn_forward.4} parent=0 // pred_check
    _
  $region11: #{edge_feature_rgcn_forward.4} parent=0 // pred_check_branch
    %17 = sbr.rel (0) target = $region13
  $region12: #{edge_feature_rgcn_forward.4} parent=0 // pred_region
    _
  $region13: #{edge_feature_rgcn_forward.4} parent=0 // pred_fallthru
    _
  // Predicated region
  $region14: #{edge_feature_rgcn_forward.4} parent=0 // pred_check
    _
  $region15: #{edge_feature_rgcn_forward.4} parent=0 // pred_check_branch
    %19 = sbr.rel (0) target = $region17
  $region16: #{edge_feature_rgcn_forward.4} parent=0 // pred_region
    _
  $region17: #{edge_feature_rgcn_forward.4} parent=0 // pred_fallthru
    _
  // Predicated region
  $region18: #{edge_feature_rgcn_forward.4} parent=0 // pred_check
    _
  $region19: #{edge_feature_rgcn_forward.4} parent=0 // pred_check_branch
    %21 = sbr.rel (0) target = $region21
  $region20: #{edge_feature_rgcn_forward.4} parent=0 // pred_region
    _
  $region21: #{edge_feature_rgcn_forward.4} parent=0 // pred_fallthru
    _
  // Predicated region
  $region22: #{edge_feature_rgcn_forward.4} parent=0 // pred_check
    _
  $region23: #{edge_feature_rgcn_forward.4} parent=0 // pred_check_branch
    %23 = sbr.rel (0) target = $region25
  $region24: #{edge_feature_rgcn_forward.4} parent=0 // pred_region
    _
  $region25: #{edge_feature_rgcn_forward.4} parent=0 // pred_fallthru
    _
  // Predicated region
  $region26: #{edge_feature_rgcn_forward.4} parent=0 // pred_check
    _
  $region27: #{edge_feature_rgcn_forward.4} parent=0 // pred_check_branch
    %25 = sbr.rel (0) target = $region29
  $region28: #{edge_feature_rgcn_forward.4} parent=0 // pred_region
    _
  $region29: #{edge_feature_rgcn_forward.4} parent=0 // pred_fallthru
    _
  %v27 = vld [vmem:[%s1] sm:$0xf]
  %v28 = vld [vmem:[%s1 + $0x4] sm:$0xf]
  %v29 = vld [vmem:[%s1 + $0x8] sm:$0xf]
  %v30 = vld [vmem:[%s1 + $0xc] sm:$0xf]
  %v31 = vld [vmem:[%s1 + $0x10] sm:$0xf]
  %v32 = vld [vmem:[%s1 + $0x14] sm:$0xf]
  %v33 = vld [vmem:[%s1 + $0x18] sm:$0xf]
  %v34 = vld [vmem:[%s1 + $0x1c] sm:$0xf]
  %v35 = vld [vmem:[%s1 + $0x20] sm:$0xf]
  %v36 = vld [vmem:[%s1 + $0x24] sm:$0xf]
  %v37 = vld [vmem:[%s1 + $0x28] sm:$0xf]
  %v38 = vld [vmem:[%s1 + $0x2c] sm:$0xf]
  %v39 = vld [vmem:[%s2] sm:$0xf]
  %v40 = vld [vmem:[%s3] sm:$0x1]
  %v42 = vperm.slane %v40, 0
  %v56 = vunpack.c.l.b16 %v27
  %v57 = vunpack.c.l.b16 %v28
  %v58 = vunpack.c.l.b16 %v29
  %v59 = vunpack.c.l.b16 %v30
  %v60 = vunpack.c.l.b16 %v31
  %v61 = vunpack.c.l.b16 %v32
  %v62 = vunpack.c.l.b16 %v33
  %v63 = vunpack.c.l.b16 %v34
  %v64 = vunpack.c.l.b16 %v35
  %v65 = vunpack.c.l.b16 %v36
  %v66 = vunpack.c.l.b16 %v37
  %v67 = vunpack.c.l.b16 %v38
  %v68 = vpack.c.b16 %v57, %v56
  %v69 = vpack.c.b16 %v59, %v58
  %v70 = vpack.c.b16 %v61, %v60
  %v71 = vpack.c.b16 %v63, %v62
  %v72 = vpack.c.b16 %v65, %v64
  %v73 = vpack.c.b16 %v67, %v66
  %vm74 = vcmask 64512
  %v76 = vsel %vm74, %v68, 0
  %v79 = vsel %vm74, %v69, 0
  %v82 = vsel %vm74, %v70, 0
  %v85 = vsel %vm74, %v71, 0
  %v88 = vsel %vm74, %v72, 0
  %v91 = vsel %vm74, %v73, 0
  %vm93 = vcmask 1043456
  %v95 = vsel %vm93, %v39, 0
  %97 = vmatpush.bf16.msra.mxu0 0
  %98 = vmatpush.bf16.msra.mxu0 0
  %99 = vmatpush.bf16.msra.mxu0 0
  %100 = vmatpush.bf16.msra.mxu0 0
  %101 = vmatpush.bf16.msra.mxu0 0
  %102 = vmatpush.bf16.msra.mxu0 0
  %103 = vmatpush.bf16.msra.mxu0 0
  %104 = vmatpush.bf16.msra.mxu0 %v95
  %105 = vmatmul.bf16.gmra.mxu0 %v76
  %v106 = vpop.f32.mrf.mxu0
  %v107 = vadd.f32 %v42, %v106
  %v108 = vpop.f32.mrf.mxu0
  %v109 = vadd.f32 %v42, %v108
  %110 = vmatmul.bf16.gmra.mxu0 %v79
  %v111 = vpop.f32.mrf.mxu0
  %v112 = vadd.f32 %v42, %v111
  %v113 = vpop.f32.mrf.mxu0
  %v114 = vadd.f32 %v42, %v113
  %115 = vmatmul.bf16.gmra.mxu0 %v82
  %v116 = vpop.f32.mrf.mxu0
  %v117 = vadd.f32 %v42, %v116
  %v118 = vpop.f32.mrf.mxu0
  %v119 = vadd.f32 %v42, %v118
  %120 = vmatmul.bf16.gmra.mxu0 %v85
  %v121 = vpop.f32.mrf.mxu0
  %v122 = vadd.f32 %v42, %v121
  %v123 = vpop.f32.mrf.mxu0
  %v124 = vadd.f32 %v42, %v123
  %125 = vmatmul.bf16.gmra.mxu0 %v88
  %v126 = vpop.f32.mrf.mxu0
  %v127 = vadd.f32 %v42, %v126
  %v128 = vpop.f32.mrf.mxu0
  %v129 = vadd.f32 %v42, %v128
  %130 = vmatmul.bf16.gmra.mxu0 %v91
  %v131 = vpop.f32.mrf.mxu0
  %v132 = vadd.f32 %v42, %v131
  %v133 = vpop.f32.mrf.mxu0
  %v134 = vadd.f32 %v42, %v133
  %135 = vdwg.mxu0
  %v136 = vmax.f32 %v107, 0.0
  %v137 = vmax.f32 %v109, 0.0
  %v138 = vmax.f32 %v112, 0.0
  %v139 = vmax.f32 %v114, 0.0
  %v140 = vmax.f32 %v117, 0.0
  %v141 = vmax.f32 %v119, 0.0
  %v142 = vmax.f32 %v122, 0.0
  %v143 = vmax.f32 %v124, 0.0
  %v144 = vmax.f32 %v127, 0.0
  %v145 = vmax.f32 %v129, 0.0
  %v146 = vmax.f32 %v132, 0.0
  %v147 = vmax.f32 %v134, 0.0
  %v148 = vpack.c.bf16 %v137, %v136
  %v149 = vpack.c.bf16 %v139, %v138
  %v150 = vpack.c.bf16 %v141, %v140
  %v151 = vpack.c.bf16 %v143, %v142
  %v152 = vpack.c.bf16 %v145, %v144
  %v153 = vpack.c.bf16 %v147, %v146
  %v154 = vld [vmem:[%s4] sm:$0xf]
  %v155 = vld [vmem:[%s4 + $0x4] sm:$0xf]
  %v156 = vld [vmem:[%s4 + $0x8] sm:$0xf]
  %v157 = vld [vmem:[%s4 + $0xc] sm:$0xf]
  %v158 = vld [vmem:[%s4 + $0x10] sm:$0xf]
  %v159 = vld [vmem:[%s4 + $0x14] sm:$0xf]
  %v160 = vld [vmem:[%s4 + $0x18] sm:$0xf]
  %v161 = vld [vmem:[%s4 + $0x1c] sm:$0xf]
  %v162 = vld [vmem:[%s4 + $0x20] sm:$0xf]
  %v163 = vld [vmem:[%s4 + $0x24] sm:$0xf]
  %v164 = vld [vmem:[%s4 + $0x28] sm:$0xf]
  %v165 = vld [vmem:[%s4 + $0x2c] sm:$0xf]
  %v166 = vld [vmem:[%s4 + $0x30] sm:$0xf]
  %v167 = vld [vmem:[%s4 + $0x34] sm:$0xf]
  %v168 = vld [vmem:[%s4 + $0x38] sm:$0xf]
  %v169 = vld [vmem:[%s4 + $0x3c] sm:$0xf]
  %v170 = vld [vmem:[%s5] sm:$0x1]
  %v172 = vperm.slane %v170, 0
  %v190 = vunpack.c.l.b16 %v154
  %v191 = vunpack.c.l.b16 %v155
  %v192 = vunpack.c.l.b16 %v156
  %v193 = vunpack.c.l.b16 %v157
  %v194 = vunpack.c.l.b16 %v158
  %v195 = vunpack.c.l.b16 %v159
  %v196 = vunpack.c.l.b16 %v160
  %v197 = vunpack.c.l.b16 %v161
  %v198 = vunpack.c.l.b16 %v162
  %v199 = vunpack.c.l.b16 %v163
  %v200 = vunpack.c.l.b16 %v164
  %v201 = vunpack.c.l.b16 %v165
  %v202 = vunpack.c.l.b16 %v166
  %v203 = vunpack.c.l.b16 %v167
  %v204 = vunpack.c.l.b16 %v168
  %v205 = vunpack.c.l.b16 %v169
  %v206 = vpack.c.b16 %v191, %v190
  %v207 = vpack.c.b16 %v193, %v192
  %v208 = vpack.c.b16 %v195, %v194
  %v209 = vpack.c.b16 %v197, %v196
  %v210 = vpack.c.b16 %v199, %v198
  %v211 = vpack.c.b16 %v201, %v200
  %v212 = vpack.c.b16 %v203, %v202
  %v213 = vpack.c.b16 %v205, %v204
  %222 = vmatpush.bf16.msra.mxu0 %v213
  %223 = vmatpush.bf16.msra.mxu0 %v212
  %224 = vmatpush.bf16.msra.mxu0 %v211
  %225 = vmatpush.bf16.msra.mxu0 %v210
  %226 = vmatpush.bf16.msra.mxu0 %v209
  %227 = vmatpush.bf16.msra.mxu0 %v208
  %228 = vmatpush.bf16.msra.mxu0 %v207
  %229 = vmatpush.bf16.msra.mxu0 %v206
  %230 = vmatmul.bf16.gmra.mxu0 %v148
  %v231 = vpop.f32.mrf.mxu0
  %v232 = vadd.f32 %v172, %v231
  %v233 = vpop.f32.mrf.mxu0
  %v234 = vadd.f32 %v172, %v233
  %235 = vmatmul.bf16.gmra.mxu0 %v149
  %v236 = vpop.f32.mrf.mxu0
  %v237 = vadd.f32 %v172, %v236
  %v238 = vpop.f32.mrf.mxu0
  %v239 = vadd.f32 %v172, %v238
  %240 = vmatmul.bf16.gmra.mxu0 %v150
  %v241 = vpop.f32.mrf.mxu0
  %v242 = vadd.f32 %v172, %v241
  %v243 = vpop.f32.mrf.mxu0
  %v244 = vadd.f32 %v172, %v243
  %245 = vmatmul.bf16.gmra.mxu0 %v151
  %v246 = vpop.f32.mrf.mxu0
  %v247 = vadd.f32 %v172, %v246
  %v248 = vpop.f32.mrf.mxu0
  %v249 = vadd.f32 %v172, %v248
  %250 = vmatmul.bf16.gmra.mxu0 %v152
  %v251 = vpop.f32.mrf.mxu0
  %v252 = vadd.f32 %v172, %v251
  %v253 = vpop.f32.mrf.mxu0
  %v254 = vadd.f32 %v172, %v253
  %255 = vmatmul.bf16.gmra.mxu0 %v153
  %v256 = vpop.f32.mrf.mxu0
  %v257 = vadd.f32 %v172, %v256
  %v258 = vpop.f32.mrf.mxu0
  %v259 = vadd.f32 %v172, %v258
  %260 = vdwg.mxu0
  %v261 = vld [vmem:[%s0] sm:$0xff]
  %v262 = vld [vmem:[%s0 + $0x8] sm:$0xff]
  %v263 = vld [vmem:[%s0 + $0x10] sm:$0xff]
  %v264 = vld [vmem:[%s0 + $0x18] sm:$0xff]
  %v265 = vld [vmem:[%s0 + $0x20] sm:$0xff]
  %v266 = vld [vmem:[%s0 + $0x28] sm:$0xff]
  %v267 = vld [vmem:[%s0 + $0x30] sm:$0xff]
  %v268 = vld [vmem:[%s0 + $0x38] sm:$0xff]
  %v269 = vld [vmem:[%s0 + $0x40] sm:$0xff]
  %v270 = vld [vmem:[%s0 + $0x48] sm:$0xff]
  %v271 = vld [vmem:[%s0 + $0x50] sm:$0xff]
  %v272 = vld [vmem:[%s0 + $0x58] sm:$0xff]
  %v273 = vadd.f32 %v261, %v232
  %v274 = vadd.f32 %v262, %v234
  %v275 = vadd.f32 %v263, %v237
  %v276 = vadd.f32 %v264, %v239
  %v277 = vadd.f32 %v265, %v242
  %v278 = vadd.f32 %v266, %v244
  %v279 = vadd.f32 %v267, %v247
  %v280 = vadd.f32 %v268, %v249
  %v281 = vadd.f32 %v269, %v252
  %v282 = vadd.f32 %v270, %v254
  %v283 = vadd.f32 %v271, %v257
  %v284 = vadd.f32 %v272, %v259
  %v285 = vld [vmem:[%s6] sm:$0xff]
  %v286 = vld [vmem:[%s6 + $0x8] sm:$0xff]
  %v287 = vld [vmem:[%s6 + $0x10] sm:$0xff]
  %v288 = vld [vmem:[%s6 + $0x18] sm:$0xff]
  %v289 = vld [vmem:[%s6 + $0x20] sm:$0xff]
  %v290 = vld [vmem:[%s6 + $0x28] sm:$0xff]
  %v291 = vld [vmem:[%s6 + $0x30] sm:$0xff]
  %v292 = vld [vmem:[%s6 + $0x38] sm:$0xff]
  %v293 = vld [vmem:[%s6 + $0x40] sm:$0xff]
  %v294 = vld [vmem:[%s6 + $0x48] sm:$0xff]
  %v295 = vld [vmem:[%s6 + $0x50] sm:$0xff]
  %v296 = vld [vmem:[%s6 + $0x58] sm:$0xff]
  %298 = vset.pattern.permute.xlu0 0
  %299 = vperm.xlu0 %298, %v285
  %v300 = vpop.permute.xlu0 %299
  %303 = vset.pattern.permute.xlu0 0
  %304 = vperm.xlu0 %303, %v286
  %v305 = vpop.permute.xlu0 %304
  %308 = vset.pattern.permute.xlu0 0
  %309 = vperm.xlu0 %308, %v287
  %v310 = vpop.permute.xlu0 %309
  %313 = vset.pattern.permute.xlu0 0
  %314 = vperm.xlu0 %313, %v288
  %v315 = vpop.permute.xlu0 %314
  %318 = vset.pattern.permute.xlu0 0
  %319 = vperm.xlu0 %318, %v289
  %v320 = vpop.permute.xlu0 %319
  %323 = vset.pattern.permute.xlu0 0
  %324 = vperm.xlu0 %323, %v290
  %v325 = vpop.permute.xlu0 %324
  %328 = vset.pattern.permute.xlu0 0
  %329 = vperm.xlu0 %328, %v291
  %v330 = vpop.permute.xlu0 %329
  %333 = vset.pattern.permute.xlu0 0
  %334 = vperm.xlu0 %333, %v292
  %v335 = vpop.permute.xlu0 %334
  %338 = vset.pattern.permute.xlu0 0
  %339 = vperm.xlu0 %338, %v293
  %v340 = vpop.permute.xlu0 %339
  %343 = vset.pattern.permute.xlu0 0
  %344 = vperm.xlu0 %343, %v294
  %v345 = vpop.permute.xlu0 %344
  %348 = vset.pattern.permute.xlu0 0
  %349 = vperm.xlu0 %348, %v295
  %v350 = vpop.permute.xlu0 %349
  %353 = vset.pattern.permute.xlu0 0
  %354 = vperm.xlu0 %353, %v296
  %v355 = vpop.permute.xlu0 %354
  %v357 = vmul.f32 %v273, %v300
  %v358 = vmul.f32 %v274, %v305
  %v359 = vmul.f32 %v275, %v310
  %v360 = vmul.f32 %v276, %v315
  %v361 = vmul.f32 %v277, %v320
  %v362 = vmul.f32 %v278, %v325
  %v363 = vmul.f32 %v279, %v330
  %v364 = vmul.f32 %v280, %v335
  %v365 = vmul.f32 %v281, %v340
  %v366 = vmul.f32 %v282, %v345
  %v367 = vmul.f32 %v283, %v350
  %v368 = vmul.f32 %v284, %v355
  %369 = vst [vmem:[%s7] sm:$0xff] %v357
  %370 = vst [vmem:[%s7 + $0x8] sm:$0xff] %v358
  %371 = vst [vmem:[%s7 + $0x10] sm:$0xff] %v359
  %372 = vst [vmem:[%s7 + $0x18] sm:$0xff] %v360
  %373 = vst [vmem:[%s7 + $0x20] sm:$0xff] %v361
  %374 = vst [vmem:[%s7 + $0x28] sm:$0xff] %v362
  %375 = vst [vmem:[%s7 + $0x30] sm:$0xff] %v363
  %376 = vst [vmem:[%s7 + $0x38] sm:$0xff] %v364
  %377 = vst [vmem:[%s7 + $0x40] sm:$0xff] %v365
  %378 = vst [vmem:[%s7 + $0x48] sm:$0xff] %v366
  %379 = vst [vmem:[%s7 + $0x50] sm:$0xff] %v367
  %380 = vst [vmem:[%s7 + $0x58] sm:$0xff] %v368
  // Predicated region
  $region30: #{edge_feature_rgcn_forward.4} parent=0 // pred_check
    _
  $region31: #{edge_feature_rgcn_forward.4} parent=0 // pred_check_branch
    %382 = sbr.rel (0) target = $region33
  $region32: #{edge_feature_rgcn_forward.4} parent=0 // pred_region
    _
  $region33: #{edge_feature_rgcn_forward.4} parent=0 // pred_fallthru
    _
  // Predicated region
  $region34: #{edge_feature_rgcn_forward.4} parent=0 // pred_check
    _
  $region35: #{edge_feature_rgcn_forward.4} parent=0 // pred_check_branch
    %384 = sbr.rel (0) target = $region37
  $region36: #{edge_feature_rgcn_forward.4} parent=0 // pred_region
    _
  $region37: #{edge_feature_rgcn_forward.4} parent=0 // pred_fallthru
    _

</llo_original>
